<compile_context>
chip_gen: v7x
topology: tpu7x:2x2x1
jax: 0.10.0
libtpu: 0.0.40
codegen_flags: <defaults>
</compile_context>

<pallas_src>
import functools

import jax
import jax.numpy as jnp
from jax.experimental import pallas as pl
from jax.experimental.pallas import tpu as pltpu


def _round_up(n, m):
    return ((n + m - 1) // m) * m


def _pick_time_chunk(T, Bp, Dp, Hp, budget_bytes=4 << 20):
    """Largest divisor of T whose VMEM chunk (x block + gate scratch) fits budget."""
    per_step = Bp * (Dp * 2 + 4 * Hp * 4)        # bf16 x rows + f32 gate rows
    cap = max(1, min(T, budget_bytes // max(per_step, 1)))
    for tc in range(cap, 0, -1):
        if T % tc == 0:
            return tc
    return 1


# ------------------------------ Fused LSTM kernel ------------------------------
def _lstm_fused_kernel(x_ref, wih_ref, whh_ref, b_ref, h0_ref, c0_ref,
                       wfc_ref, bfc_ref, o_ref, h_sc, c_sc, gx_sc):
    """One grid step == one chunk of `tc` timesteps, fully resident in VMEM."""
    chunk = pl.program_id(0)
    Bp, Hp = h_sc.shape
    tc = x_ref.shape[0] // Bp

    @pl.when(chunk == 0)
    def _():
        h_sc[...] = h0_ref[...]
        c_sc[...] = c0_ref[...]

    # Hoisted input projection for the whole chunk: one big MXU matmul
    # (tc*Bp rows) instead of tc tiny per-step matmuls.  bf16 in, f32 acc.
    gx_sc[...] = (jnp.dot(x_ref[...], wih_ref[...],
                          preferred_element_type=jnp.float32)
                  + b_ref[...])                                    # (tc*Bp, 4Hp)

    def _sigmoid(z):
        # Single EUP op (tanh) instead of exp + reciprocal.
        return 0.5 * jnp.tanh(0.5 * z) + 0.5

    def _step(t, carry):
        row0 = pl.multiple_of(t * Bp, Bp)                          # sublane aligned
        gates = gx_sc[pl.ds(row0, Bp), :] + jnp.dot(
            h_sc[...].astype(jnp.bfloat16), whh_ref[...],
            preferred_element_type=jnp.float32)                    # (Bp, 4Hp)
        # PyTorch gate order (i, f, g, o); each slice is whole 128-lane vregs.
        i = _sigmoid(gates[:, 0 * Hp:1 * Hp])
        f = _sigmoid(gates[:, 1 * Hp:2 * Hp])
        g = jnp.tanh(gates[:, 2 * Hp:3 * Hp])
        o = _sigmoid(gates[:, 3 * Hp:4 * Hp])
        c_new = f * c_sc[...] + i * g
        c_sc[...] = c_new
        h_sc[...] = o * jnp.tanh(c_new)
        return carry

    jax.lax.fori_loop(0, tc, _step, 0, unroll=True)

    # Fused FC on the final hidden state — only the (Bp, Op) tile hits HBM.
    @pl.when(chunk == pl.num_programs(0) - 1)
    def _():
        o_ref[...] = (jnp.dot(h_sc[...].astype(jnp.bfloat16), wfc_ref[...],
                              preferred_element_type=jnp.float32)
                      + bfc_ref[...])


# ------------------------------ Parameter setup --------------------------------
def init_params(key, input_dim, hidden_units, num_layers, output_dim):
    """PyTorch-style uniform(-1/sqrt(H), 1/sqrt(H)) init, raw torch layouts."""
    k = 1.0 / jnp.sqrt(jnp.float32(hidden_units))
    params = {"layers": []}
    for _ in range(num_layers):
        d_in = input_dim if not params["layers"] else hidden_units
        key, k1, k2, k3, k4 = jax.random.split(key, 5)
        params["layers"].append({
            "w_ih": jax.random.uniform(k1, (4 * hidden_units, d_in), jnp.float32, -k, k),
            "w_hh": jax.random.uniform(k2, (4 * hidden_units, hidden_units), jnp.float32, -k, k),
            "b_ih": jax.random.uniform(k3, (4 * hidden_units,), jnp.float32, -k, k),
            "b_hh": jax.random.uniform(k4, (4 * hidden_units,), jnp.float32, -k, k),
        })
    key, k1, k2 = jax.random.split(key, 3)
    params["w_fc"] = jax.random.uniform(k1, (output_dim, hidden_units), jnp.float32, -k, k)
    params["b_fc"] = jax.random.uniform(k2, (output_dim,), jnp.float32, -k, k)
    return params


def prepare_padded_params(params, input_dim, hidden_units, output_dim):
    """Pad/transpose layer-0 + FC weights to (8,128)-friendly layouts, bf16 MXU operands.

    Only layer 0 is prepared: the module's forward consumes hn[0] only, so
    higher layers never affect the output.
    """
    H = hidden_units
    Hp = _round_up(H, 128)
    Dp = _round_up(input_dim, 128)
    Op = _round_up(output_dim, 128)

    l0 = params["layers"][0]
    w_ih_t = jnp.zeros((Dp, 4 * Hp), jnp.float32)
    w_hh_t = jnp.zeros((Hp, 4 * Hp), jnp.float32)
    bias = jnp.zeros((1, 4 * Hp), jnp.float32)
    b_sum = l0["b_ih"] + l0["b_hh"]
    for g in range(4):                     # gate blocks each padded to Hp lanes
        w_ih_t = w_ih_t.at[:input_dim, g * Hp:g * Hp + H].set(
            l0["w_ih"][g * H:(g + 1) * H, :].T)
        w_hh_t = w_hh_t.at[:H, g * Hp:g * Hp + H].set(
            l0["w_hh"][g * H:(g + 1) * H, :].T)
        bias = bias.at[0, g * Hp:g * Hp + H].set(b_sum[g * H:(g + 1) * H])

    w_fc_t = jnp.zeros((Hp, Op), jnp.float32).at[:H, :output_dim].set(params["w_fc"].T)
    b_fc = jnp.zeros((1, Op), jnp.float32).at[0, :output_dim].set(params["b_fc"])

    return {
        "w_ih_t": w_ih_t.astype(jnp.bfloat16),
        "w_hh_t": w_hh_t.astype(jnp.bfloat16),
        "bias": bias,                        # f32 (added post-accumulation)
        "w_fc_t": w_fc_t.astype(jnp.bfloat16),
        "b_fc": b_fc,                        # f32
    }


# -------------------------------- Forward pass ----------------------------------
@functools.partial(jax.jit, static_argnames=("output_dim",))
def lstm_forward(padded, x, hidden, *, output_dim):
    """x: (B, T, D) batch-first.  hidden: (h0, c0) each (num_layers, B, H).

    Returns fc(hn[0]).flatten(), exactly like the PyTorch module.
    """
    h0_all, c0_all = hidden
    B, T, D = x.shape
    H = h0_all.shape[-1]
    Dp = padded["w_ih_t"].shape[0]
    Hp = padded["w_hh_t"].shape[0]
    Op = padded["w_fc_t"].shape[1]
    Bp = _round_up(B, 8)

    # Time-major, pad batch -> 8 sublanes and features -> 128 lanes, flatten
    # (T, Bp) into MXU-friendly rows; cast to bf16 once on the host side.
    x_tm = jnp.transpose(x, (1, 0, 2)).astype(jnp.float32)         # (T, B, D)
    x_p = jnp.zeros((T, Bp, Dp), jnp.float32).at[:, :B, :D].set(x_tm)
    x2d = x_p.reshape(T * Bp, Dp).astype(jnp.bfloat16)             # (T*Bp, Dp)

    h0 = jnp.zeros((Bp, Hp), jnp.float32).at[:B, :H].set(h0_all[0].astype(jnp.float32))
    c0 = jnp.zeros((Bp, Hp), jnp.float32).at[:B, :H].set(c0_all[0].astype(jnp.float32))

    tc = _pick_time_chunk(T, Bp, Dp, Hp)
    num_chunks = T // tc

    grid_spec = pltpu.PrefetchScalarGridSpec(
        num_scalar_prefetch=0,
        grid=(num_chunks,),
        in_specs=[
            pl.BlockSpec((tc * Bp, Dp), lambda c: (c, 0)),          # x chunk
            pl.BlockSpec((Dp, 4 * Hp), lambda c: (0, 0)),           # W_ih^T
            pl.BlockSpec((Hp, 4 * Hp), lambda c: (0, 0)),           # W_hh^T
            pl.BlockSpec((1, 4 * Hp), lambda c: (0, 0)),            # bias
            pl.BlockSpec((Bp, Hp), lambda c: (0, 0)),               # h0
            pl.BlockSpec((Bp, Hp), lambda c: (0, 0)),               # c0
            pl.BlockSpec((Hp, Op), lambda c: (0, 0)),               # W_fc^T
            pl.BlockSpec((1, Op), lambda c: (0, 0)),                # b_fc
        ],
        out_specs=pl.BlockSpec((Bp, Op), lambda c: (0, 0)),
        scratch_shapes=[
            pltpu.VMEM((Bp, Hp), jnp.float32),                      # h carry
            pltpu.VMEM((Bp, Hp), jnp.float32),                      # c carry
            pltpu.VMEM((tc * Bp, 4 * Hp), jnp.float32),             # hoisted x-gates
        ],
    )
    out_p = pl.pallas_call(
        _lstm_fused_kernel,
        out_shape=jax.ShapeDtypeStruct((Bp, Op), jnp.float32),
        grid_spec=grid_spec,
        compiler_params=pltpu.CompilerParams(
            dimension_semantics=("arbitrary",)),                    # sequential recurrence
    )(x2d, padded["w_ih_t"], padded["w_hh_t"], padded["bias"],
      h0, c0, padded["w_fc_t"], padded["b_fc"])

    return out_p[:B, :output_dim].reshape(-1)                       # fc(hn[0]).flatten()


# ------------------------------ Pure-JAX reference --------------------------------
def lstm_reference(params, x, hidden):
    """f32 reference with the same semantics as the PyTorch module's forward."""
    h0_all, c0_all = hidden
    p = params["layers"][0]
    w_ih, w_hh = p["w_ih"], p["w_hh"]
    b = p["b_ih"] + p["b_hh"]
    H = w_hh.shape[1]
    h, c = h0_all[0], c0_all[0]
    for t in range(x.shape[1]):
        g = x[:, t] @ w_ih.T + h @ w_hh.T + b
        i = jax.nn.sigmoid(g[:, :H])
        f = jax.nn.sigmoid(g[:, H:2 * H])
        gg = jnp.tanh(g[:, 2 * H:3 * H])
        o = jax.nn.sigmoid(g[:, 3 * H:])
        c = f * c + i * gg
        h = o * jnp.tanh(c)
    return (h @ params["w_fc"].T + params["b_fc"]).reshape(-1)


# ------------------------------------ Main -----------------------------------------
if __name__ == "__main__":
    INPUT_DIM = 16
    HIDDEN_UNITS = 32
    NUM_LAYERS = 2
    OUTPUT_DIM = 4
    BATCH = 2
    SEQ = 8

    key = jax.random.PRNGKey(0)
    key, pkey, xkey = jax.random.split(key, 3)

    params = init_params(pkey, INPUT_DIM, HIDDEN_UNITS, NUM_LAYERS, OUTPUT_DIM)
    padded = prepare_padded_params(params, INPUT_DIM, HIDDEN_UNITS, OUTPUT_DIM)
    x = jax.random.normal(xkey, (BATCH, SEQ, INPUT_DIM), jnp.float32)

    # init_hidden(batch_size): zeros of shape (num_layers, B, H)
    h0 = jnp.zeros((NUM_LAYERS, BATCH, HIDDEN_UNITS), jnp.float32)
    c0 = jnp.zeros((NUM_LAYERS, BATCH, HIDDEN_UNITS), jnp.float32)

    out = lstm_forward(padded, x, (h0, c0), output_dim=OUTPUT_DIM)
    jax.block_until_ready(out)
    assert out.shape == (BATCH * OUTPUT_DIM,), out.shape

    ref = lstm_reference(params, x, (h0, c0))
    max_err = float(jnp.max(jnp.abs(out - ref)))
    assert max_err < 5e-2, f"max abs err vs f32 reference: {max_err}"

    print("KERNEL_OK")
</pallas_src>

<mosaic_0001>
module attributes {stable_mosaic.version = 11 : i64} {
  func.func @_lstm_fused_kernel(%arg0: i32, %arg1: memref<64x128xbf16, #tpu.memory_space<vmem>>, %arg2: memref<128x512xbf16, #tpu.memory_space<vmem>>, %arg3: memref<128x512xbf16, #tpu.memory_space<vmem>>, %arg4: memref<1x512xf32, #tpu.memory_space<vmem>>, %arg5: memref<8x128xf32, #tpu.memory_space<vmem>>, %arg6: memref<8x128xf32, #tpu.memory_space<vmem>>, %arg7: memref<128x128xbf16, #tpu.memory_space<vmem>>, %arg8: memref<1x128xf32, #tpu.memory_space<vmem>>, %arg9: memref<8x128xf32, #tpu.memory_space<vmem>>, %arg10: memref<8x128xf32, #tpu.memory_space<vmem>>, %arg11: memref<8x128xf32, #tpu.memory_space<vmem>>, %arg12: memref<64x512xf32, #tpu.memory_space<vmem>>) attributes {dimension_semantics = [#tpu.dimension_semantics<arbitrary>], iteration_bounds = array<i64: 1>, scalar_prefetch = 0 : i64, scratch_operands = 3 : i64, tpu.core_type = #tpu.core_type<tc>, window_params = [{transform_indices = @transform_0, window_bounds = array<i64: 64, 128>}, {pipeline_mode = #tpu.pipeline_mode<synchronous>, transform_indices = @transform_1, window_bounds = array<i64: 128, 512>}, {pipeline_mode = #tpu.pipeline_mode<synchronous>, transform_indices = @transform_2, window_bounds = array<i64: 128, 512>}, {pipeline_mode = #tpu.pipeline_mode<synchronous>, transform_indices = @transform_3, window_bounds = array<i64: 1, 512>}, {pipeline_mode = #tpu.pipeline_mode<synchronous>, transform_indices = @transform_4, window_bounds = array<i64: 8, 128>}, {pipeline_mode = #tpu.pipeline_mode<synchronous>, transform_indices = @transform_5, window_bounds = array<i64: 8, 128>}, {pipeline_mode = #tpu.pipeline_mode<synchronous>, transform_indices = @transform_6, window_bounds = array<i64: 128, 128>}, {pipeline_mode = #tpu.pipeline_mode<synchronous>, transform_indices = @transform_7, window_bounds = array<i64: 1, 128>}, {pipeline_mode = #tpu.pipeline_mode<synchronous>, transform_indices = @transform_8, window_bounds = array<i64: 8, 128>}]} {
    %c0_i32 = arith.constant 0 : i32
    %0 = arith.cmpi eq, %arg0, %c0_i32 : i32
    %1 = arith.extui %0 : i1 to i32
    %c0_i32_0 = arith.constant 0 : i32
    %2 = arith.cmpi ne, %1, %c0_i32_0 : i32
    scf.if %2 {
      %c0_187 = arith.constant 0 : index
      %c0_188 = arith.constant 0 : index
      %357 = vector.load %arg5[%c0_187, %c0_188] : memref<8x128xf32, #tpu.memory_space<vmem>>, vector<8x128xf32>
      %c0_189 = arith.constant 0 : index
      %c0_190 = arith.constant 0 : index
      %358 = vector.load %arg10[%c0_189, %c0_190] : memref<8x128xf32, #tpu.memory_space<vmem>>, vector<8x128xf32>
      tpu.vector_store %arg10[%c0_189, %c0_190], %357 {strides = array<i32>} : memref<8x128xf32, #tpu.memory_space<vmem>>, vector<8x128xf32>,
      %c0_191 = arith.constant 0 : index
      %c0_192 = arith.constant 0 : index
      %359 = vector.load %arg6[%c0_191, %c0_192] : memref<8x128xf32, #tpu.memory_space<vmem>>, vector<8x128xf32>
      %c0_193 = arith.constant 0 : index
      %c0_194 = arith.constant 0 : index
      %360 = vector.load %arg11[%c0_193, %c0_194] : memref<8x128xf32, #tpu.memory_space<vmem>>, vector<8x128xf32>
      tpu.vector_store %arg11[%c0_193, %c0_194], %359 {strides = array<i32>} : memref<8x128xf32, #tpu.memory_space<vmem>>, vector<8x128xf32>,
    } else {
    }
    %c0 = arith.constant 0 : index
    %c0_1 = arith.constant 0 : index
    %3 = vector.load %arg1[%c0, %c0_1] : memref<64x128xbf16, #tpu.memory_space<vmem>>, vector<64x128xbf16>
    %c0_2 = arith.constant 0 : index
    %c0_3 = arith.constant 0 : index
    %4 = vector.load %arg2[%c0_2, %c0_3] : memref<128x512xbf16, #tpu.memory_space<vmem>>, vector<128x512xbf16>
    %cst = arith.constant dense<0.000000e+00> : vector<64x512xf32>
    %5 = tpu.matmul %3, %4, %cst {dimension_numbers = #tpu.dot_dimension_numbers<[1], [0], [0], [1], [0, 0, 1, 1], [], []>} : vector<64x128xbf16>, vector<128x512xbf16>, vector<64x512xf32> -> vector<64x512xf32>
    %c0_4 = arith.constant 0 : index
    %c0_5 = arith.constant 0 : index
    %6 = vector.load %arg4[%c0_4, %c0_5] : memref<1x512xf32, #tpu.memory_space<vmem>>, vector<1x512xf32>
    %7 = vector.broadcast %6 : vector<1x512xf32> to vector<64x512xf32>
    %8 = arith.addf %5, %7 : vector<64x512xf32>
    %c0_6 = arith.constant 0 : index
    %c0_7 = arith.constant 0 : index
    %9 = vector.load %arg12[%c0_6, %c0_7] : memref<64x512xf32, #tpu.memory_space<vmem>>, vector<64x512xf32>
    tpu.vector_store %arg12[%c0_6, %c0_7], %8 {strides = array<i32>} : memref<64x512xf32, #tpu.memory_space<vmem>>, vector<64x512xf32>,
    %c0_i32_8 = arith.constant 0 : i32
    %c8_i32 = arith.constant 8 : i32
    %10 = arith.muli %c0_i32_8, %c8_i32 : i32
    %11 = tpu.assume_multiple %10, 8 : i32
    %12 = arith.index_cast %11 : i32 to index
    %c0_9 = arith.constant 0 : index
    %13 = vector.load %arg12[%12, %c0_9] : memref<64x512xf32, #tpu.memory_space<vmem>>, vector<8x512xf32>
    %c0_10 = arith.constant 0 : index
    %c0_11 = arith.constant 0 : index
    %14 = vector.load %arg10[%c0_10, %c0_11] : memref<8x128xf32, #tpu.memory_space<vmem>>, vector<8x128xf32>
    %15 = arith.truncf %14 : vector<8x128xf32> to vector<8x128xbf16>
    %c0_12 = arith.constant 0 : index
    %c0_13 = arith.constant 0 : index
    %16 = vector.load %arg3[%c0_12, %c0_13] : memref<128x512xbf16, #tpu.memory_space<vmem>>, vector<128x512xbf16>
    %cst_14 = arith.constant dense<0.000000e+00> : vector<8x512xf32>
    %17 = tpu.matmul %15, %16, %cst_14 {dimension_numbers = #tpu.dot_dimension_numbers<[1], [0], [0], [1], [0, 0, 1, 1], [], []>} : vector<8x128xbf16>, vector<128x512xbf16>, vector<8x512xf32> -> vector<8x512xf32>
    %18 = arith.addf %13, %17 : vector<8x512xf32>
    %19 = vector.extract_strided_slice %18 {offsets = [0, 0], sizes = [8, 128], strides = [1, 1]} : vector<8x512xf32> to vector<8x128xf32>
    %cst_15 = arith.constant 5.000000e-01 : f32
    %20 = vector.broadcast %cst_15 : f32 to vector<8x128xf32>
    %21 = arith.mulf %20, %19 : vector<8x128xf32>
    %22 = math.tanh %21 : vector<8x128xf32>
    %cst_16 = arith.constant 5.000000e-01 : f32
    %23 = vector.broadcast %cst_16 : f32 to vector<8x128xf32>
    %24 = arith.mulf %23, %22 : vector<8x128xf32>
    %cst_17 = arith.constant 5.000000e-01 : f32
    %25 = vector.broadcast %cst_17 : f32 to vector<8x128xf32>
    %26 = arith.addf %24, %25 : vector<8x128xf32>
    %27 = vector.extract_strided_slice %18 {offsets = [0, 128], sizes = [8, 128], strides = [1, 1]} : vector<8x512xf32> to vector<8x128xf32>
    %cst_18 = arith.constant 5.000000e-01 : f32
    %28 = vector.broadcast %cst_18 : f32 to vector<8x128xf32>
    %29 = arith.mulf %28, %27 : vector<8x128xf32>
    %30 = math.tanh %29 : vector<8x128xf32>
    %cst_19 = arith.constant 5.000000e-01 : f32
    %31 = vector.broadcast %cst_19 : f32 to vector<8x128xf32>
    %32 = arith.mulf %31, %30 : vector<8x128xf32>
    %cst_20 = arith.constant 5.000000e-01 : f32
    %33 = vector.broadcast %cst_20 : f32 to vector<8x128xf32>
    %34 = arith.addf %32, %33 : vector<8x128xf32>
    %35 = vector.extract_strided_slice %18 {offsets = [0, 256], sizes = [8, 128], strides = [1, 1]} : vector<8x512xf32> to vector<8x128xf32>
    %36 = math.tanh %35 : vector<8x128xf32>
    %37 = vector.extract_strided_slice %18 {offsets = [0, 384], sizes = [8, 128], strides = [1, 1]} : vector<8x512xf32> to vector<8x128xf32>
    %cst_21 = arith.constant 5.000000e-01 : f32
    %38 = vector.broadcast %cst_21 : f32 to vector<8x128xf32>
    %39 = arith.mulf %38, %37 : vector<8x128xf32>
    %40 = math.tanh %39 : vector<8x128xf32>
    %cst_22 = arith.constant 5.000000e-01 : f32
    %41 = vector.broadcast %cst_22 : f32 to vector<8x128xf32>
    %42 = arith.mulf %41, %40 : vector<8x128xf32>
    %cst_23 = arith.constant 5.000000e-01 : f32
    %43 = vector.broadcast %cst_23 : f32 to vector<8x128xf32>
    %44 = arith.addf %42, %43 : vector<8x128xf32>
    %c0_24 = arith.constant 0 : index
    %c0_25 = arith.constant 0 : index
    %45 = vector.load %arg11[%c0_24, %c0_25] : memref<8x128xf32, #tpu.memory_space<vmem>>, vector<8x128xf32>
    %46 = arith.mulf %34, %45 : vector<8x128xf32>
    %47 = arith.mulf %26, %36 : vector<8x128xf32>
    %48 = arith.addf %46, %47 : vector<8x128xf32>
    %c0_26 = arith.constant 0 : index
    %c0_27 = arith.constant 0 : index
    %49 = vector.load %arg11[%c0_26, %c0_27] : memref<8x128xf32, #tpu.memory_space<vmem>>, vector<8x128xf32>
    tpu.vector_store %arg11[%c0_26, %c0_27], %48 {strides = array<i32>} : memref<8x128xf32, #tpu.memory_space<vmem>>, vector<8x128xf32>,
    %50 = math.tanh %48 : vector<8x128xf32>
    %51 = arith.mulf %44, %50 : vector<8x128xf32>
    %c0_28 = arith.constant 0 : index
    %c0_29 = arith.constant 0 : index
    %52 = vector.load %arg10[%c0_28, %c0_29] : memref<8x128xf32, #tpu.memory_space<vmem>>, vector<8x128xf32>
    tpu.vector_store %arg10[%c0_28, %c0_29], %51 {strides = array<i32>} : memref<8x128xf32, #tpu.memory_space<vmem>>, vector<8x128xf32>,
    %c1_i32 = arith.constant 1 : i32
    %c8_i32_30 = arith.constant 8 : i32
    %53 = arith.muli %c1_i32, %c8_i32_30 : i32
    %54 = tpu.assume_multiple %53, 8 : i32
    %55 = arith.index_cast %54 : i32 to index
    %c0_31 = arith.constant 0 : index
    %56 = vector.load %arg12[%55, %c0_31] : memref<64x512xf32, #tpu.memory_space<vmem>>, vector<8x512xf32>
    %c0_32 = arith.constant 0 : index
    %c0_33 = arith.constant 0 : index
    %57 = vector.load %arg10[%c0_32, %c0_33] : memref<8x128xf32, #tpu.memory_space<vmem>>, vector<8x128xf32>
    %58 = arith.truncf %57 : vector<8x128xf32> to vector<8x128xbf16>
    %c0_34 = arith.constant 0 : index
    %c0_35 = arith.constant 0 : index
    %59 = vector.load %arg3[%c0_34, %c0_35] : memref<128x512xbf16, #tpu.memory_space<vmem>>, vector<128x512xbf16>
    %cst_36 = arith.constant dense<0.000000e+00> : vector<8x512xf32>
    %60 = tpu.matmul %58, %59, %cst_36 {dimension_numbers = #tpu.dot_dimension_numbers<[1], [0], [0], [1], [0, 0, 1, 1], [], []>} : vector<8x128xbf16>, vector<128x512xbf16>, vector<8x512xf32> -> vector<8x512xf32>
    %61 = arith.addf %56, %60 : vector<8x512xf32>
    %62 = vector.extract_strided_slice %61 {offsets = [0, 0], sizes = [8, 128], strides = [1, 1]} : vector<8x512xf32> to vector<8x128xf32>
    %cst_37 = arith.constant 5.000000e-01 : f32
    %63 = vector.broadcast %cst_37 : f32 to vector<8x128xf32>
    %64 = arith.mulf %63, %62 : vector<8x128xf32>
    %65 = math.tanh %64 : vector<8x128xf32>
    %cst_38 = arith.constant 5.000000e-01 : f32
    %66 = vector.broadcast %cst_38 : f32 to vector<8x128xf32>
    %67 = arith.mulf %66, %65 : vector<8x128xf32>
    %cst_39 = arith.constant 5.000000e-01 : f32
    %68 = vector.broadcast %cst_39 : f32 to vector<8x128xf32>
    %69 = arith.addf %67, %68 : vector<8x128xf32>
    %70 = vector.extract_strided_slice %61 {offsets = [0, 128], sizes = [8, 128], strides = [1, 1]} : vector<8x512xf32> to vector<8x128xf32>
    %cst_40 = arith.constant 5.000000e-01 : f32
    %71 = vector.broadcast %cst_40 : f32 to vector<8x128xf32>
    %72 = arith.mulf %71, %70 : vector<8x128xf32>
    %73 = math.tanh %72 : vector<8x128xf32>
    %cst_41 = arith.constant 5.000000e-01 : f32
    %74 = vector.broadcast %cst_41 : f32 to vector<8x128xf32>
    %75 = arith.mulf %74, %73 : vector<8x128xf32>
    %cst_42 = arith.constant 5.000000e-01 : f32
    %76 = vector.broadcast %cst_42 : f32 to vector<8x128xf32>
    %77 = arith.addf %75, %76 : vector<8x128xf32>
    %78 = vector.extract_strided_slice %61 {offsets = [0, 256], sizes = [8, 128], strides = [1, 1]} : vector<8x512xf32> to vector<8x128xf32>
    %79 = math.tanh %78 : vector<8x128xf32>
    %80 = vector.extract_strided_slice %61 {offsets = [0, 384], sizes = [8, 128], strides = [1, 1]} : vector<8x512xf32> to vector<8x128xf32>
    %cst_43 = arith.constant 5.000000e-01 : f32
    %81 = vector.broadcast %cst_43 : f32 to vector<8x128xf32>
    %82 = arith.mulf %81, %80 : vector<8x128xf32>
    %83 = math.tanh %82 : vector<8x128xf32>
    %cst_44 = arith.constant 5.000000e-01 : f32
    %84 = vector.broadcast %cst_44 : f32 to vector<8x128xf32>
    %85 = arith.mulf %84, %83 : vector<8x128xf32>
    %cst_45 = arith.constant 5.000000e-01 : f32
    %86 = vector.broadcast %cst_45 : f32 to vector<8x128xf32>
    %87 = arith.addf %85, %86 : vector<8x128xf32>
    %c0_46 = arith.constant 0 : index
    %c0_47 = arith.constant 0 : index
    %88 = vector.load %arg11[%c0_46, %c0_47] : memref<8x128xf32, #tpu.memory_space<vmem>>, vector<8x128xf32>
    %89 = arith.mulf %77, %88 : vector<8x128xf32>
    %90 = arith.mulf %69, %79 : vector<8x128xf32>
    %91 = arith.addf %89, %90 : vector<8x128xf32>
    %c0_48 = arith.constant 0 : index
    %c0_49 = arith.constant 0 : index
    %92 = vector.load %arg11[%c0_48, %c0_49] : memref<8x128xf32, #tpu.memory_space<vmem>>, vector<8x128xf32>
    tpu.vector_store %arg11[%c0_48, %c0_49], %91 {strides = array<i32>} : memref<8x128xf32, #tpu.memory_space<vmem>>, vector<8x128xf32>,
    %93 = math.tanh %91 : vector<8x128xf32>
    %94 = arith.mulf %87, %93 : vector<8x128xf32>
    %c0_50 = arith.constant 0 : index
    %c0_51 = arith.constant 0 : index
    %95 = vector.load %arg10[%c0_50, %c0_51] : memref<8x128xf32, #tpu.memory_space<vmem>>, vector<8x128xf32>
    tpu.vector_store %arg10[%c0_50, %c0_51], %94 {strides = array<i32>} : memref<8x128xf32, #tpu.memory_space<vmem>>, vector<8x128xf32>,
    %c2_i32 = arith.constant 2 : i32
    %c8_i32_52 = arith.constant 8 : i32
    %96 = arith.muli %c2_i32, %c8_i32_52 : i32
    %97 = tpu.assume_multiple %96, 8 : i32
    %98 = arith.index_cast %97 : i32 to index
    %c0_53 = arith.constant 0 : index
    %99 = vector.load %arg12[%98, %c0_53] : memref<64x512xf32, #tpu.memory_space<vmem>>, vector<8x512xf32>
    %c0_54 = arith.constant 0 : index
    %c0_55 = arith.constant 0 : index
    %100 = vector.load %arg10[%c0_54, %c0_55] : memref<8x128xf32, #tpu.memory_space<vmem>>, vector<8x128xf32>
    %101 = arith.truncf %100 : vector<8x128xf32> to vector<8x128xbf16>
    %c0_56 = arith.constant 0 : index
    %c0_57 = arith.constant 0 : index
    %102 = vector.load %arg3[%c0_56, %c0_57] : memref<128x512xbf16, #tpu.memory_space<vmem>>, vector<128x512xbf16>
    %cst_58 = arith.constant dense<0.000000e+00> : vector<8x512xf32>
    %103 = tpu.matmul %101, %102, %cst_58 {dimension_numbers = #tpu.dot_dimension_numbers<[1], [0], [0], [1], [0, 0, 1, 1], [], []>} : vector<8x128xbf16>, vector<128x512xbf16>, vector<8x512xf32> -> vector<8x512xf32>
    %104 = arith.addf %99, %103 : vector<8x512xf32>
    %105 = vector.extract_strided_slice %104 {offsets = [0, 0], sizes = [8, 128], strides = [1, 1]} : vector<8x512xf32> to vector<8x128xf32>
    %cst_59 = arith.constant 5.000000e-01 : f32
    %106 = vector.broadcast %cst_59 : f32 to vector<8x128xf32>
    %107 = arith.mulf %106, %105 : vector<8x128xf32>
    %108 = math.tanh %107 : vector<8x128xf32>
    %cst_60 = arith.constant 5.000000e-01 : f32
    %109 = vector.broadcast %cst_60 : f32 to vector<8x128xf32>
    %110 = arith.mulf %109, %108 : vector<8x128xf32>
    %cst_61 = arith.constant 5.000000e-01 : f32
    %111 = vector.broadcast %cst_61 : f32 to vector<8x128xf32>
    %112 = arith.addf %110, %111 : vector<8x128xf32>
    %113 = vector.extract_strided_slice %104 {offsets = [0, 128], sizes = [8, 128], strides = [1, 1]} : vector<8x512xf32> to vector<8x128xf32>
    %cst_62 = arith.constant 5.000000e-01 : f32
    %114 = vector.broadcast %cst_62 : f32 to vector<8x128xf32>
    %115 = arith.mulf %114, %113 : vector<8x128xf32>
    %116 = math.tanh %115 : vector<8x128xf32>
    %cst_63 = arith.constant 5.000000e-01 : f32
    %117 = vector.broadcast %cst_63 : f32 to vector<8x128xf32>
    %118 = arith.mulf %117, %116 : vector<8x128xf32>
    %cst_64 = arith.constant 5.000000e-01 : f32
    %119 = vector.broadcast %cst_64 : f32 to vector<8x128xf32>
    %120 = arith.addf %118, %119 : vector<8x128xf32>
    %121 = vector.extract_strided_slice %104 {offsets = [0, 256], sizes = [8, 128], strides = [1, 1]} : vector<8x512xf32> to vector<8x128xf32>
    %122 = math.tanh %121 : vector<8x128xf32>
    %123 = vector.extract_strided_slice %104 {offsets = [0, 384], sizes = [8, 128], strides = [1, 1]} : vector<8x512xf32> to vector<8x128xf32>
    %cst_65 = arith.constant 5.000000e-01 : f32
    %124 = vector.broadcast %cst_65 : f32 to vector<8x128xf32>
    %125 = arith.mulf %124, %123 : vector<8x128xf32>
    %126 = math.tanh %125 : vector<8x128xf32>
    %cst_66 = arith.constant 5.000000e-01 : f32
    %127 = vector.broadcast %cst_66 : f32 to vector<8x128xf32>
    %128 = arith.mulf %127, %126 : vector<8x128xf32>
    %cst_67 = arith.constant 5.000000e-01 : f32
    %129 = vector.broadcast %cst_67 : f32 to vector<8x128xf32>
    %130 = arith.addf %128, %129 : vector<8x128xf32>
    %c0_68 = arith.constant 0 : index
    %c0_69 = arith.constant 0 : index
    %131 = vector.load %arg11[%c0_68, %c0_69] : memref<8x128xf32, #tpu.memory_space<vmem>>, vector<8x128xf32>
    %132 = arith.mulf %120, %131 : vector<8x128xf32>
    %133 = arith.mulf %112, %122 : vector<8x128xf32>
    %134 = arith.addf %132, %133 : vector<8x128xf32>
    %c0_70 = arith.constant 0 : index
    %c0_71 = arith.constant 0 : index
    %135 = vector.load %arg11[%c0_70, %c0_71] : memref<8x128xf32, #tpu.memory_space<vmem>>, vector<8x128xf32>
    tpu.vector_store %arg11[%c0_70, %c0_71], %134 {strides = array<i32>} : memref<8x128xf32, #tpu.memory_space<vmem>>, vector<8x128xf32>,
    %136 = math.tanh %134 : vector<8x128xf32>
    %137 = arith.mulf %130, %136 : vector<8x128xf32>
    %c0_72 = arith.constant 0 : index
    %c0_73 = arith.constant 0 : index
    %138 = vector.load %arg10[%c0_72, %c0_73] : memref<8x128xf32, #tpu.memory_space<vmem>>, vector<8x128xf32>
    tpu.vector_store %arg10[%c0_72, %c0_73], %137 {strides = array<i32>} : memref<8x128xf32, #tpu.memory_space<vmem>>, vector<8x128xf32>,
    %c3_i32 = arith.constant 3 : i32
    %c8_i32_74 = arith.constant 8 : i32
    %139 = arith.muli %c3_i32, %c8_i32_74 : i32
    %140 = tpu.assume_multiple %139, 8 : i32
    %141 = arith.index_cast %140 : i32 to index
    %c0_75 = arith.constant 0 : index
    %142 = vector.load %arg12[%141, %c0_75] : memref<64x512xf32, #tpu.memory_space<vmem>>, vector<8x512xf32>
    %c0_76 = arith.constant 0 : index
    %c0_77 = arith.constant 0 : index
    %143 = vector.load %arg10[%c0_76, %c0_77] : memref<8x128xf32, #tpu.memory_space<vmem>>, vector<8x128xf32>
    %144 = arith.truncf %143 : vector<8x128xf32> to vector<8x128xbf16>
    %c0_78 = arith.constant 0 : index
    %c0_79 = arith.constant 0 : index
    %145 = vector.load %arg3[%c0_78, %c0_79] : memref<128x512xbf16, #tpu.memory_space<vmem>>, vector<128x512xbf16>
    %cst_80 = arith.constant dense<0.000000e+00> : vector<8x512xf32>
    %146 = tpu.matmul %144, %145, %cst_80 {dimension_numbers = #tpu.dot_dimension_numbers<[1], [0], [0], [1], [0, 0, 1, 1], [], []>} : vector<8x128xbf16>, vector<128x512xbf16>, vector<8x512xf32> -> vector<8x512xf32>
    %147 = arith.addf %142, %146 : vector<8x512xf32>
    %148 = vector.extract_strided_slice %147 {offsets = [0, 0], sizes = [8, 128], strides = [1, 1]} : vector<8x512xf32> to vector<8x128xf32>
    %cst_81 = arith.constant 5.000000e-01 : f32
    %149 = vector.broadcast %cst_81 : f32 to vector<8x128xf32>
    %150 = arith.mulf %149, %148 : vector<8x128xf32>
    %151 = math.tanh %150 : vector<8x128xf32>
    %cst_82 = arith.constant 5.000000e-01 : f32
    %152 = vector.broadcast %cst_82 : f32 to vector<8x128xf32>
    %153 = arith.mulf %152, %151 : vector<8x128xf32>
    %cst_83 = arith.constant 5.000000e-01 : f32
    %154 = vector.broadcast %cst_83 : f32 to vector<8x128xf32>
    %155 = arith.addf %153, %154 : vector<8x128xf32>
    %156 = vector.extract_strided_slice %147 {offsets = [0, 128], sizes = [8, 128], strides = [1, 1]} : vector<8x512xf32> to vector<8x128xf32>
    %cst_84 = arith.constant 5.000000e-01 : f32
    %157 = vector.broadcast %cst_84 : f32 to vector<8x128xf32>
    %158 = arith.mulf %157, %156 : vector<8x128xf32>
    %159 = math.tanh %158 : vector<8x128xf32>
    %cst_85 = arith.constant 5.000000e-01 : f32
    %160 = vector.broadcast %cst_85 : f32 to vector<8x128xf32>
    %161 = arith.mulf %160, %159 : vector<8x128xf32>
    %cst_86 = arith.constant 5.000000e-01 : f32
    %162 = vector.broadcast %cst_86 : f32 to vector<8x128xf32>
    %163 = arith.addf %161, %162 : vector<8x128xf32>
    %164 = vector.extract_strided_slice %147 {offsets = [0, 256], sizes = [8, 128], strides = [1, 1]} : vector<8x512xf32> to vector<8x128xf32>
    %165 = math.tanh %164 : vector<8x128xf32>
    %166 = vector.extract_strided_slice %147 {offsets = [0, 384], sizes = [8, 128], strides = [1, 1]} : vector<8x512xf32> to vector<8x128xf32>
    %cst_87 = arith.constant 5.000000e-01 : f32
    %167 = vector.broadcast %cst_87 : f32 to vector<8x128xf32>
    %168 = arith.mulf %167, %166 : vector<8x128xf32>
    %169 = math.tanh %168 : vector<8x128xf32>
    %cst_88 = arith.constant 5.000000e-01 : f32
    %170 = vector.broadcast %cst_88 : f32 to vector<8x128xf32>
    %171 = arith.mulf %170, %169 : vector<8x128xf32>
    %cst_89 = arith.constant 5.000000e-01 : f32
    %172 = vector.broadcast %cst_89 : f32 to vector<8x128xf32>
    %173 = arith.addf %171, %172 : vector<8x128xf32>
    %c0_90 = arith.constant 0 : index
    %c0_91 = arith.constant 0 : index
    %174 = vector.load %arg11[%c0_90, %c0_91] : memref<8x128xf32, #tpu.memory_space<vmem>>, vector<8x128xf32>
    %175 = arith.mulf %163, %174 : vector<8x128xf32>
    %176 = arith.mulf %155, %165 : vector<8x128xf32>
    %177 = arith.addf %175, %176 : vector<8x128xf32>
    %c0_92 = arith.constant 0 : index
    %c0_93 = arith.constant 0 : index
    %178 = vector.load %arg11[%c0_92, %c0_93] : memref<8x128xf32, #tpu.memory_space<vmem>>, vector<8x128xf32>
    tpu.vector_store %arg11[%c0_92, %c0_93], %177 {strides = array<i32>} : memref<8x128xf32, #tpu.memory_space<vmem>>, vector<8x128xf32>,
    %179 = math.tanh %177 : vector<8x128xf32>
    %180 = arith.mulf %173, %179 : vector<8x128xf32>
    %c0_94 = arith.constant 0 : index
    %c0_95 = arith.constant 0 : index
    %181 = vector.load %arg10[%c0_94, %c0_95] : memref<8x128xf32, #tpu.memory_space<vmem>>, vector<8x128xf32>
    tpu.vector_store %arg10[%c0_94, %c0_95], %180 {strides = array<i32>} : memref<8x128xf32, #tpu.memory_space<vmem>>, vector<8x128xf32>,
    %c4_i32 = arith.constant 4 : i32
    %c8_i32_96 = arith.constant 8 : i32
    %182 = arith.muli %c4_i32, %c8_i32_96 : i32
    %183 = tpu.assume_multiple %182, 8 : i32
    %184 = arith.index_cast %183 : i32 to index
    %c0_97 = arith.constant 0 : index
    %185 = vector.load %arg12[%184, %c0_97] : memref<64x512xf32, #tpu.memory_space<vmem>>, vector<8x512xf32>
    %c0_98 = arith.constant 0 : index
    %c0_99 = arith.constant 0 : index
    %186 = vector.load %arg10[%c0_98, %c0_99] : memref<8x128xf32, #tpu.memory_space<vmem>>, vector<8x128xf32>
    %187 = arith.truncf %186 : vector<8x128xf32> to vector<8x128xbf16>
    %c0_100 = arith.constant 0 : index
    %c0_101 = arith.constant 0 : index
    %188 = vector.load %arg3[%c0_100, %c0_101] : memref<128x512xbf16, #tpu.memory_space<vmem>>, vector<128x512xbf16>
    %cst_102 = arith.constant dense<0.000000e+00> : vector<8x512xf32>
    %189 = tpu.matmul %187, %188, %cst_102 {dimension_numbers = #tpu.dot_dimension_numbers<[1], [0], [0], [1], [0, 0, 1, 1], [], []>} : vector<8x128xbf16>, vector<128x512xbf16>, vector<8x512xf32> -> vector<8x512xf32>
    %190 = arith.addf %185, %189 : vector<8x512xf32>
    %191 = vector.extract_strided_slice %190 {offsets = [0, 0], sizes = [8, 128], strides = [1, 1]} : vector<8x512xf32> to vector<8x128xf32>
    %cst_103 = arith.constant 5.000000e-01 : f32
    %192 = vector.broadcast %cst_103 : f32 to vector<8x128xf32>
    %193 = arith.mulf %192, %191 : vector<8x128xf32>
    %194 = math.tanh %193 : vector<8x128xf32>
    %cst_104 = arith.constant 5.000000e-01 : f32
    %195 = vector.broadcast %cst_104 : f32 to vector<8x128xf32>
    %196 = arith.mulf %195, %194 : vector<8x128xf32>
    %cst_105 = arith.constant 5.000000e-01 : f32
    %197 = vector.broadcast %cst_105 : f32 to vector<8x128xf32>
    %198 = arith.addf %196, %197 : vector<8x128xf32>
    %199 = vector.extract_strided_slice %190 {offsets = [0, 128], sizes = [8, 128], strides = [1, 1]} : vector<8x512xf32> to vector<8x128xf32>
    %cst_106 = arith.constant 5.000000e-01 : f32
    %200 = vector.broadcast %cst_106 : f32 to vector<8x128xf32>
    %201 = arith.mulf %200, %199 : vector<8x128xf32>
    %202 = math.tanh %201 : vector<8x128xf32>
    %cst_107 = arith.constant 5.000000e-01 : f32
    %203 = vector.broadcast %cst_107 : f32 to vector<8x128xf32>
    %204 = arith.mulf %203, %202 : vector<8x128xf32>
    %cst_108 = arith.constant 5.000000e-01 : f32
    %205 = vector.broadcast %cst_108 : f32 to vector<8x128xf32>
    %206 = arith.addf %204, %205 : vector<8x128xf32>
    %207 = vector.extract_strided_slice %190 {offsets = [0, 256], sizes = [8, 128], strides = [1, 1]} : vector<8x512xf32> to vector<8x128xf32>
    %208 = math.tanh %207 : vector<8x128xf32>
    %209 = vector.extract_strided_slice %190 {offsets = [0, 384], sizes = [8, 128], strides = [1, 1]} : vector<8x512xf32> to vector<8x128xf32>
    %cst_109 = arith.constant 5.000000e-01 : f32
    %210 = vector.broadcast %cst_109 : f32 to vector<8x128xf32>
    %211 = arith.mulf %210, %209 : vector<8x128xf32>
    %212 = math.tanh %211 : vector<8x128xf32>
    %cst_110 = arith.constant 5.000000e-01 : f32
    %213 = vector.broadcast %cst_110 : f32 to vector<8x128xf32>
    %214 = arith.mulf %213, %212 : vector<8x128xf32>
    %cst_111 = arith.constant 5.000000e-01 : f32
    %215 = vector.broadcast %cst_111 : f32 to vector<8x128xf32>
    %216 = arith.addf %214, %215 : vector<8x128xf32>
    %c0_112 = arith.constant 0 : index
    %c0_113 = arith.constant 0 : index
    %217 = vector.load %arg11[%c0_112, %c0_113] : memref<8x128xf32, #tpu.memory_space<vmem>>, vector<8x128xf32>
    %218 = arith.mulf %206, %217 : vector<8x128xf32>
    %219 = arith.mulf %198, %208 : vector<8x128xf32>
    %220 = arith.addf %218, %219 : vector<8x128xf32>
    %c0_114 = arith.constant 0 : index
    %c0_115 = arith.constant 0 : index
    %221 = vector.load %arg11[%c0_114, %c0_115] : memref<8x128xf32, #tpu.memory_space<vmem>>, vector<8x128xf32>
    tpu.vector_store %arg11[%c0_114, %c0_115], %220 {strides = array<i32>} : memref<8x128xf32, #tpu.memory_space<vmem>>, vector<8x128xf32>,
    %222 = math.tanh %220 : vector<8x128xf32>
    %223 = arith.mulf %216, %222 : vector<8x128xf32>
    %c0_116 = arith.constant 0 : index
    %c0_117 = arith.constant 0 : index
    %224 = vector.load %arg10[%c0_116, %c0_117] : memref<8x128xf32, #tpu.memory_space<vmem>>, vector<8x128xf32>
    tpu.vector_store %arg10[%c0_116, %c0_117], %223 {strides = array<i32>} : memref<8x128xf32, #tpu.memory_space<vmem>>, vector<8x128xf32>,
    %c5_i32 = arith.constant 5 : i32
    %c8_i32_118 = arith.constant 8 : i32
    %225 = arith.muli %c5_i32, %c8_i32_118 : i32
    %226 = tpu.assume_multiple %225, 8 : i32
    %227 = arith.index_cast %226 : i32 to index
    %c0_119 = arith.constant 0 : index
    %228 = vector.load %arg12[%227, %c0_119] : memref<64x512xf32, #tpu.memory_space<vmem>>, vector<8x512xf32>
    %c0_120 = arith.constant 0 : index
    %c0_121 = arith.constant 0 : index
    %229 = vector.load %arg10[%c0_120, %c0_121] : memref<8x128xf32, #tpu.memory_space<vmem>>, vector<8x128xf32>
    %230 = arith.truncf %229 : vector<8x128xf32> to vector<8x128xbf16>
    %c0_122 = arith.constant 0 : index
    %c0_123 = arith.constant 0 : index
    %231 = vector.load %arg3[%c0_122, %c0_123] : memref<128x512xbf16, #tpu.memory_space<vmem>>, vector<128x512xbf16>
    %cst_124 = arith.constant dense<0.000000e+00> : vector<8x512xf32>
    %232 = tpu.matmul %230, %231, %cst_124 {dimension_numbers = #tpu.dot_dimension_numbers<[1], [0], [0], [1], [0, 0, 1, 1], [], []>} : vector<8x128xbf16>, vector<128x512xbf16>, vector<8x512xf32> -> vector<8x512xf32>
    %233 = arith.addf %228, %232 : vector<8x512xf32>
    %234 = vector.extract_strided_slice %233 {offsets = [0, 0], sizes = [8, 128], strides = [1, 1]} : vector<8x512xf32> to vector<8x128xf32>
    %cst_125 = arith.constant 5.000000e-01 : f32
    %235 = vector.broadcast %cst_125 : f32 to vector<8x128xf32>
    %236 = arith.mulf %235, %234 : vector<8x128xf32>
    %237 = math.tanh %236 : vector<8x128xf32>
    %cst_126 = arith.constant 5.000000e-01 : f32
    %238 = vector.broadcast %cst_126 : f32 to vector<8x128xf32>
    %239 = arith.mulf %238, %237 : vector<8x128xf32>
    %cst_127 = arith.constant 5.000000e-01 : f32
    %240 = vector.broadcast %cst_127 : f32 to vector<8x128xf32>
    %241 = arith.addf %239, %240 : vector<8x128xf32>
    %242 = vector.extract_strided_slice %233 {offsets = [0, 128], sizes = [8, 128], strides = [1, 1]} : vector<8x512xf32> to vector<8x128xf32>
    %cst_128 = arith.constant 5.000000e-01 : f32
    %243 = vector.broadcast %cst_128 : f32 to vector<8x128xf32>
    %244 = arith.mulf %243, %242 : vector<8x128xf32>
    %245 = math.tanh %244 : vector<8x128xf32>
    %cst_129 = arith.constant 5.000000e-01 : f32
    %246 = vector.broadcast %cst_129 : f32 to vector<8x128xf32>
    %247 = arith.mulf %246, %245 : vector<8x128xf32>
    %cst_130 = arith.constant 5.000000e-01 : f32
    %248 = vector.broadcast %cst_130 : f32 to vector<8x128xf32>
    %249 = arith.addf %247, %248 : vector<8x128xf32>
    %250 = vector.extract_strided_slice %233 {offsets = [0, 256], sizes = [8, 128], strides = [1, 1]} : vector<8x512xf32> to vector<8x128xf32>
    %251 = math.tanh %250 : vector<8x128xf32>
    %252 = vector.extract_strided_slice %233 {offsets = [0, 384], sizes = [8, 128], strides = [1, 1]} : vector<8x512xf32> to vector<8x128xf32>
    %cst_131 = arith.constant 5.000000e-01 : f32
    %253 = vector.broadcast %cst_131 : f32 to vector<8x128xf32>
    %254 = arith.mulf %253, %252 : vector<8x128xf32>
    %255 = math.tanh %254 : vector<8x128xf32>
    %cst_132 = arith.constant 5.000000e-01 : f32
    %256 = vector.broadcast %cst_132 : f32 to vector<8x128xf32>
    %257 = arith.mulf %256, %255 : vector<8x128xf32>
    %cst_133 = arith.constant 5.000000e-01 : f32
    %258 = vector.broadcast %cst_133 : f32 to vector<8x128xf32>
    %259 = arith.addf %257, %258 : vector<8x128xf32>
    %c0_134 = arith.constant 0 : index
    %c0_135 = arith.constant 0 : index
    %260 = vector.load %arg11[%c0_134, %c0_135] : memref<8x128xf32, #tpu.memory_space<vmem>>, vector<8x128xf32>
    %261 = arith.mulf %249, %260 : vector<8x128xf32>
    %262 = arith.mulf %241, %251 : vector<8x128xf32>
    %263 = arith.addf %261, %262 : vector<8x128xf32>
    %c0_136 = arith.constant 0 : index
    %c0_137 = arith.constant 0 : index
    %264 = vector.load %arg11[%c0_136, %c0_137] : memref<8x128xf32, #tpu.memory_space<vmem>>, vector<8x128xf32>
    tpu.vector_store %arg11[%c0_136, %c0_137], %263 {strides = array<i32>} : memref<8x128xf32, #tpu.memory_space<vmem>>, vector<8x128xf32>,
    %265 = math.tanh %263 : vector<8x128xf32>
    %266 = arith.mulf %259, %265 : vector<8x128xf32>
    %c0_138 = arith.constant 0 : index
    %c0_139 = arith.constant 0 : index
    %267 = vector.load %arg10[%c0_138, %c0_139] : memref<8x128xf32, #tpu.memory_space<vmem>>, vector<8x128xf32>
    tpu.vector_store %arg10[%c0_138, %c0_139], %266 {strides = array<i32>} : memref<8x128xf32, #tpu.memory_space<vmem>>, vector<8x128xf32>,
    %c6_i32 = arith.constant 6 : i32
    %c8_i32_140 = arith.constant 8 : i32
    %268 = arith.muli %c6_i32, %c8_i32_140 : i32
    %269 = tpu.assume_multiple %268, 8 : i32
    %270 = arith.index_cast %269 : i32 to index
    %c0_141 = arith.constant 0 : index
    %271 = vector.load %arg12[%270, %c0_141] : memref<64x512xf32, #tpu.memory_space<vmem>>, vector<8x512xf32>
    %c0_142 = arith.constant 0 : index
    %c0_143 = arith.constant 0 : index
    %272 = vector.load %arg10[%c0_142, %c0_143] : memref<8x128xf32, #tpu.memory_space<vmem>>, vector<8x128xf32>
    %273 = arith.truncf %272 : vector<8x128xf32> to vector<8x128xbf16>
    %c0_144 = arith.constant 0 : index
    %c0_145 = arith.constant 0 : index
    %274 = vector.load %arg3[%c0_144, %c0_145] : memref<128x512xbf16, #tpu.memory_space<vmem>>, vector<128x512xbf16>
    %cst_146 = arith.constant dense<0.000000e+00> : vector<8x512xf32>
    %275 = tpu.matmul %273, %274, %cst_146 {dimension_numbers = #tpu.dot_dimension_numbers<[1], [0], [0], [1], [0, 0, 1, 1], [], []>} : vector<8x128xbf16>, vector<128x512xbf16>, vector<8x512xf32> -> vector<8x512xf32>
    %276 = arith.addf %271, %275 : vector<8x512xf32>
    %277 = vector.extract_strided_slice %276 {offsets = [0, 0], sizes = [8, 128], strides = [1, 1]} : vector<8x512xf32> to vector<8x128xf32>
    %cst_147 = arith.constant 5.000000e-01 : f32
    %278 = vector.broadcast %cst_147 : f32 to vector<8x128xf32>
    %279 = arith.mulf %278, %277 : vector<8x128xf32>
    %280 = math.tanh %279 : vector<8x128xf32>
    %cst_148 = arith.constant 5.000000e-01 : f32
    %281 = vector.broadcast %cst_148 : f32 to vector<8x128xf32>
    %282 = arith.mulf %281, %280 : vector<8x128xf32>
    %cst_149 = arith.constant 5.000000e-01 : f32
    %283 = vector.broadcast %cst_149 : f32 to vector<8x128xf32>
    %284 = arith.addf %282, %283 : vector<8x128xf32>
    %285 = vector.extract_strided_slice %276 {offsets = [0, 128], sizes = [8, 128], strides = [1, 1]} : vector<8x512xf32> to vector<8x128xf32>
    %cst_150 = arith.constant 5.000000e-01 : f32
    %286 = vector.broadcast %cst_150 : f32 to vector<8x128xf32>
    %287 = arith.mulf %286, %285 : vector<8x128xf32>
    %288 = math.tanh %287 : vector<8x128xf32>
    %cst_151 = arith.constant 5.000000e-01 : f32
    %289 = vector.broadcast %cst_151 : f32 to vector<8x128xf32>
    %290 = arith.mulf %289, %288 : vector<8x128xf32>
    %cst_152 = arith.constant 5.000000e-01 : f32
    %291 = vector.broadcast %cst_152 : f32 to vector<8x128xf32>
    %292 = arith.addf %290, %291 : vector<8x128xf32>
    %293 = vector.extract_strided_slice %276 {offsets = [0, 256], sizes = [8, 128], strides = [1, 1]} : vector<8x512xf32> to vector<8x128xf32>
    %294 = math.tanh %293 : vector<8x128xf32>
    %295 = vector.extract_strided_slice %276 {offsets = [0, 384], sizes = [8, 128], strides = [1, 1]} : vector<8x512xf32> to vector<8x128xf32>
    %cst_153 = arith.constant 5.000000e-01 : f32
    %296 = vector.broadcast %cst_153 : f32 to vector<8x128xf32>
    %297 = arith.mulf %296, %295 : vector<8x128xf32>
    %298 = math.tanh %297 : vector<8x128xf32>
    %cst_154 = arith.constant 5.000000e-01 : f32
    %299 = vector.broadcast %cst_154 : f32 to vector<8x128xf32>
    %300 = arith.mulf %299, %298 : vector<8x128xf32>
    %cst_155 = arith.constant 5.000000e-01 : f32
    %301 = vector.broadcast %cst_155 : f32 to vector<8x128xf32>
    %302 = arith.addf %300, %301 : vector<8x128xf32>
    %c0_156 = arith.constant 0 : index
    %c0_157 = arith.constant 0 : index
    %303 = vector.load %arg11[%c0_156, %c0_157] : memref<8x128xf32, #tpu.memory_space<vmem>>, vector<8x128xf32>
    %304 = arith.mulf %292, %303 : vector<8x128xf32>
    %305 = arith.mulf %284, %294 : vector<8x128xf32>
    %306 = arith.addf %304, %305 : vector<8x128xf32>
    %c0_158 = arith.constant 0 : index
    %c0_159 = arith.constant 0 : index
    %307 = vector.load %arg11[%c0_158, %c0_159] : memref<8x128xf32, #tpu.memory_space<vmem>>, vector<8x128xf32>
    tpu.vector_store %arg11[%c0_158, %c0_159], %306 {strides = array<i32>} : memref<8x128xf32, #tpu.memory_space<vmem>>, vector<8x128xf32>,
    %308 = math.tanh %306 : vector<8x128xf32>
    %309 = arith.mulf %302, %308 : vector<8x128xf32>
    %c0_160 = arith.constant 0 : index
    %c0_161 = arith.constant 0 : index
    %310 = vector.load %arg10[%c0_160, %c0_161] : memref<8x128xf32, #tpu.memory_space<vmem>>, vector<8x128xf32>
    tpu.vector_store %arg10[%c0_160, %c0_161], %309 {strides = array<i32>} : memref<8x128xf32, #tpu.memory_space<vmem>>, vector<8x128xf32>,
    %c7_i32 = arith.constant 7 : i32
    %c8_i32_162 = arith.constant 8 : i32
    %311 = arith.muli %c7_i32, %c8_i32_162 : i32
    %312 = tpu.assume_multiple %311, 8 : i32
    %313 = arith.index_cast %312 : i32 to index
    %c0_163 = arith.constant 0 : index
    %314 = vector.load %arg12[%313, %c0_163] : memref<64x512xf32, #tpu.memory_space<vmem>>, vector<8x512xf32>
    %c0_164 = arith.constant 0 : index
    %c0_165 = arith.constant 0 : index
    %315 = vector.load %arg10[%c0_164, %c0_165] : memref<8x128xf32, #tpu.memory_space<vmem>>, vector<8x128xf32>
    %316 = arith.truncf %315 : vector<8x128xf32> to vector<8x128xbf16>
    %c0_166 = arith.constant 0 : index
    %c0_167 = arith.constant 0 : index
    %317 = vector.load %arg3[%c0_166, %c0_167] : memref<128x512xbf16, #tpu.memory_space<vmem>>, vector<128x512xbf16>
    %cst_168 = arith.constant dense<0.000000e+00> : vector<8x512xf32>
    %318 = tpu.matmul %316, %317, %cst_168 {dimension_numbers = #tpu.dot_dimension_numbers<[1], [0], [0], [1], [0, 0, 1, 1], [], []>} : vector<8x128xbf16>, vector<128x512xbf16>, vector<8x512xf32> -> vector<8x512xf32>
    %319 = arith.addf %314, %318 : vector<8x512xf32>
    %320 = vector.extract_strided_slice %319 {offsets = [0, 0], sizes = [8, 128], strides = [1, 1]} : vector<8x512xf32> to vector<8x128xf32>
    %cst_169 = arith.constant 5.000000e-01 : f32
    %321 = vector.broadcast %cst_169 : f32 to vector<8x128xf32>
    %322 = arith.mulf %321, %320 : vector<8x128xf32>
    %323 = math.tanh %322 : vector<8x128xf32>
    %cst_170 = arith.constant 5.000000e-01 : f32
    %324 = vector.broadcast %cst_170 : f32 to vector<8x128xf32>
    %325 = arith.mulf %324, %323 : vector<8x128xf32>
    %cst_171 = arith.constant 5.000000e-01 : f32
    %326 = vector.broadcast %cst_171 : f32 to vector<8x128xf32>
    %327 = arith.addf %325, %326 : vector<8x128xf32>
    %328 = vector.extract_strided_slice %319 {offsets = [0, 128], sizes = [8, 128], strides = [1, 1]} : vector<8x512xf32> to vector<8x128xf32>
    %cst_172 = arith.constant 5.000000e-01 : f32
    %329 = vector.broadcast %cst_172 : f32 to vector<8x128xf32>
    %330 = arith.mulf %329, %328 : vector<8x128xf32>
    %331 = math.tanh %330 : vector<8x128xf32>
    %cst_173 = arith.constant 5.000000e-01 : f32
    %332 = vector.broadcast %cst_173 : f32 to vector<8x128xf32>
    %333 = arith.mulf %332, %331 : vector<8x128xf32>
    %cst_174 = arith.constant 5.000000e-01 : f32
    %334 = vector.broadcast %cst_174 : f32 to vector<8x128xf32>
    %335 = arith.addf %333, %334 : vector<8x128xf32>
    %336 = vector.extract_strided_slice %319 {offsets = [0, 256], sizes = [8, 128], strides = [1, 1]} : vector<8x512xf32> to vector<8x128xf32>
    %337 = math.tanh %336 : vector<8x128xf32>
    %338 = vector.extract_strided_slice %319 {offsets = [0, 384], sizes = [8, 128], strides = [1, 1]} : vector<8x512xf32> to vector<8x128xf32>
    %cst_175 = arith.constant 5.000000e-01 : f32
    %339 = vector.broadcast %cst_175 : f32 to vector<8x128xf32>
    %340 = arith.mulf %339, %338 : vector<8x128xf32>
    %341 = math.tanh %340 : vector<8x128xf32>
    %cst_176 = arith.constant 5.000000e-01 : f32
    %342 = vector.broadcast %cst_176 : f32 to vector<8x128xf32>
    %343 = arith.mulf %342, %341 : vector<8x128xf32>
    %cst_177 = arith.constant 5.000000e-01 : f32
    %344 = vector.broadcast %cst_177 : f32 to vector<8x128xf32>
    %345 = arith.addf %343, %344 : vector<8x128xf32>
    %c0_178 = arith.constant 0 : index
    %c0_179 = arith.constant 0 : index
    %346 = vector.load %arg11[%c0_178, %c0_179] : memref<8x128xf32, #tpu.memory_space<vmem>>, vector<8x128xf32>
    %347 = arith.mulf %335, %346 : vector<8x128xf32>
    %348 = arith.mulf %327, %337 : vector<8x128xf32>
    %349 = arith.addf %347, %348 : vector<8x128xf32>
    %c0_180 = arith.constant 0 : index
    %c0_181 = arith.constant 0 : index
    %350 = vector.load %arg11[%c0_180, %c0_181] : memref<8x128xf32, #tpu.memory_space<vmem>>, vector<8x128xf32>
    tpu.vector_store %arg11[%c0_180, %c0_181], %349 {strides = array<i32>} : memref<8x128xf32, #tpu.memory_space<vmem>>, vector<8x128xf32>,
    %351 = math.tanh %349 : vector<8x128xf32>
    %352 = arith.mulf %345, %351 : vector<8x128xf32>
    %c0_182 = arith.constant 0 : index
    %c0_183 = arith.constant 0 : index
    %353 = vector.load %arg10[%c0_182, %c0_183] : memref<8x128xf32, #tpu.memory_space<vmem>>, vector<8x128xf32>
    tpu.vector_store %arg10[%c0_182, %c0_183], %352 {strides = array<i32>} : memref<8x128xf32, #tpu.memory_space<vmem>>, vector<8x128xf32>,
    %c8_i32_184 = arith.constant 8 : i32
    %c0_i32_185 = arith.constant 0 : i32
    %354 = arith.cmpi eq, %arg0, %c0_i32_185 : i32
    %355 = arith.extui %354 : i1 to i32
    %c0_i32_186 = arith.constant 0 : i32
    %356 = arith.cmpi ne, %355, %c0_i32_186 : i32
    scf.if %356 {
      %c0_187 = arith.constant 0 : index
      %c0_188 = arith.constant 0 : index
      %357 = vector.load %arg10[%c0_187, %c0_188] : memref<8x128xf32, #tpu.memory_space<vmem>>, vector<8x128xf32>
      %358 = arith.truncf %357 : vector<8x128xf32> to vector<8x128xbf16>
      %c0_189 = arith.constant 0 : index
      %c0_190 = arith.constant 0 : index
      %359 = vector.load %arg7[%c0_189, %c0_190] : memref<128x128xbf16, #tpu.memory_space<vmem>>, vector<128x128xbf16>
      %cst_191 = arith.constant dense<0.000000e+00> : vector<8x128xf32>
      %360 = tpu.matmul %358, %359, %cst_191 {dimension_numbers = #tpu.dot_dimension_numbers<[1], [0], [0], [1], [0, 0, 1, 1], [], []>} : vector<8x128xbf16>, vector<128x128xbf16>, vector<8x128xf32> -> vector<8x128xf32>
      %c0_192 = arith.constant 0 : index
      %c0_193 = arith.constant 0 : index
      %361 = vector.load %arg8[%c0_192, %c0_193] : memref<1x128xf32, #tpu.memory_space<vmem>>, vector<1x128xf32>
      %362 = vector.broadcast %361 : vector<1x128xf32> to vector<8x128xf32>
      %363 = arith.addf %360, %362 : vector<8x128xf32>
      %c0_194 = arith.constant 0 : index
      %c0_195 = arith.constant 0 : index
      %364 = vector.load %arg9[%c0_194, %c0_195] : memref<8x128xf32, #tpu.memory_space<vmem>>, vector<8x128xf32>
      tpu.vector_store %arg9[%c0_194, %c0_195], %363 {strides = array<i32>} : memref<8x128xf32, #tpu.memory_space<vmem>>, vector<8x128xf32>,
    } else {
    }
    return
  }
  func.func @transform_0(%arg0: i32) -> (i32, i32) {
    %c0_i32 = arith.constant 0 : i32
    %c0_i32_0 = arith.constant 0 : i32
    return %arg0, %c0_i32 : i32, i32
  }
  func.func @transform_1(%arg0: i32) -> (i32, i32) {
    %c0_i32 = arith.constant 0 : i32
    %c0_i32_0 = arith.constant 0 : i32
    %c0_i32_1 = arith.constant 0 : i32
    return %c0_i32, %c0_i32_0 : i32, i32
  }
  func.func @transform_2(%arg0: i32) -> (i32, i32) {
    %c0_i32 = arith.constant 0 : i32
    %c0_i32_0 = arith.constant 0 : i32
    %c0_i32_1 = arith.constant 0 : i32
    return %c0_i32, %c0_i32_0 : i32, i32
  }
  func.func @transform_3(%arg0: i32) -> (i32, i32) {
    %c0_i32 = arith.constant 0 : i32
    %c0_i32_0 = arith.constant 0 : i32
    %c0_i32_1 = arith.constant 0 : i32
    return %c0_i32, %c0_i32_0 : i32, i32
  }
  func.func @transform_4(%arg0: i32) -> (i32, i32) {
    %c0_i32 = arith.constant 0 : i32
    %c0_i32_0 = arith.constant 0 : i32
    %c0_i32_1 = arith.constant 0 : i32
    return %c0_i32, %c0_i32_0 : i32, i32
  }
  func.func @transform_5(%arg0: i32) -> (i32, i32) {
    %c0_i32 = arith.constant 0 : i32
    %c0_i32_0 = arith.constant 0 : i32
    %c0_i32_1 = arith.constant 0 : i32
    return %c0_i32, %c0_i32_0 : i32, i32
  }
  func.func @transform_6(%arg0: i32) -> (i32, i32) {
    %c0_i32 = arith.constant 0 : i32
    %c0_i32_0 = arith.constant 0 : i32
    %c0_i32_1 = arith.constant 0 : i32
    return %c0_i32, %c0_i32_0 : i32, i32
  }
  func.func @transform_7(%arg0: i32) -> (i32, i32) {
    %c0_i32 = arith.constant 0 : i32
    %c0_i32_0 = arith.constant 0 : i32
    %c0_i32_1 = arith.constant 0 : i32
    return %c0_i32, %c0_i32_0 : i32, i32
  }
  func.func @transform_8(%arg0: i32) -> (i32, i32) {
    %c0_i32 = arith.constant 0 : i32
    %c0_i32_0 = arith.constant 0 : i32
    %c0_i32_1 = arith.constant 0 : i32
    return %c0_i32, %c0_i32_0 : i32, i32
  }
}

</mosaic_0001>

<llo_original>
// kernel: lstm_forward.1
$region0: #{lstm_forward.1}
  #allocation0 [shape = 'u32[]', space=smem, size = 0x4, offset = 0x4, fixed_abs, tag = 'smem constant byte address 0x4 - core index']
  #allocation1 [shape = 'u32[144,128]{1,0:T(1,128)}', space=vmem, size = 0x12000, scoped, tag = 'internal scratch']
  #allocation2 [shape = 'f32[8,128]{1,0:T(8,128)}', space=vmem, size = 0x1000, scoped, tag = 'scratch operand']
  #allocation3 [shape = 'f32[8,128]{1,0:T(8,128)}', space=vmem, size = 0x1000, scoped, tag = 'scratch operand']
  #allocation4 [shape = 'f32[64,512]{1,0:T(8,128)}', space=vmem, size = 0x20000, scoped, tag = 'scratch operand']
  %s0 = inlined_call_operand.vmem [shape: bf16[64,128], index: 0, kind: input, shape index: {}]
  %s1 = inlined_call_operand.hbm [shape: bf16[128,512], index: 1, kind: input, shape index: {}]
  %s2 = inlined_call_operand.hbm [shape: bf16[128,512], index: 2, kind: input, shape index: {}]
  %s3 = inlined_call_operand.vmem [shape: f32[1,512], index: 3, kind: input, shape index: {}]
  %s4 = inlined_call_operand.vmem [shape: f32[8,128], index: 4, kind: input, shape index: {}]
  %s5 = inlined_call_operand.vmem [shape: f32[8,128], index: 5, kind: input, shape index: {}]
  %s6 = inlined_call_operand.vmem [shape: bf16[128,128], index: 6, kind: input, shape index: {}]
  %s7 = inlined_call_operand.vmem [shape: f32[1,128], index: 7, kind: input, shape index: {}]
  %s8 = inlined_call_operand.vmem [shape: f32[8,128], index: 8, kind: output, shape index: {}]
  %s9 = sld [smem:[#allocation0]]
  $region58: #{lstm_forward.1} parent=0
    _
  %s11 = ssub.s32 1, %s9
  %s12 = scalar_select 0, %s11, %s9
  $region1: #{lstm_forward.1} parent=0
    #allocation5 [shape = 'u8[131072]{0}', space=vmem, size = 0x20000, scoped, tag = 'input window, operand 1, single buffered']
    #allocation6 [shape = 's32[1]{0}', space=sflag, size = 0x4, scoped, tag = 'scoped memory for lstm_forward.1']
    #allocation7 [shape = 'u8[131072]{0}', space=vmem, size = 0x20000, scoped, tag = 'input window, operand 2, single buffered']
    #allocation8 [shape = 's32[1]{0}', space=sflag, size = 0x4, scoped, tag = 'scoped memory for lstm_forward.1']
    %13 = vsyncpa [#allocation6], 0
    %14 = vsyncpa [#allocation8], 0
    // Predicated region
    $region2: #{lstm_forward.1} parent=1 // pred_check
      _
    $region3: #{lstm_forward.1} parent=1 // pred_check_branch
      %16 = sbr.rel (0) target = $region5
    $region4: #{lstm_forward.1} parent=1 // pred_region
      _
    $region5: #{lstm_forward.1} parent=1 // pred_fallthru
      _
    // Predicated region
    $region6: #{lstm_forward.1} parent=1 // pred_check
      _
    $region7: #{lstm_forward.1} parent=1 // pred_check_branch
      %18 = sbr.rel (0) target = $region9
    $region8: #{lstm_forward.1} parent=1 // pred_region
      %s20 = ssub.s32 4096, 4096
      %21 = vsyncadd [#allocation6], %s20
      %s22 = sshll.u32 [#allocation5], 4
      %s23 = int_to_ptr.vmem [resolvable:$true] %s22
      %28 = dma.hbm_to_vmem [thread:$0]  %s1, 4096, %s23, [#allocation6], 256, 256, 16
    $region9: #{lstm_forward.1} parent=1 // pred_fallthru
      _
    // Predicated region
    $region10: #{lstm_forward.1} parent=1 // pred_check
      _
    $region11: #{lstm_forward.1} parent=1 // pred_check_branch
      %30 = sbr.rel (0) target = $region13
    $region12: #{lstm_forward.1} parent=1 // pred_region
      %s32 = ssub.s32 4096, 4096
      %33 = vsyncadd [#allocation8], %s32
      %s34 = sshll.u32 [#allocation7], 4
      %s35 = int_to_ptr.vmem [resolvable:$true] %s34
      %40 = dma.hbm_to_vmem [thread:$0]  %s2, 4096, %s35, [#allocation8], 256, 256, 16
    $region13: #{lstm_forward.1} parent=1 // pred_fallthru
      _
    // Predicated region
    $region14: #{lstm_forward.1} parent=1 // pred_check
      _
    $region15: #{lstm_forward.1} parent=1 // pred_check_branch
      %42 = sbr.rel (0) target = $region17
    $region16: #{lstm_forward.1} parent=1 // pred_region
      _
    $region17: #{lstm_forward.1} parent=1 // pred_fallthru
      _
    // Predicated region
    $region18: #{lstm_forward.1} parent=1 // pred_check
      _
    $region19: #{lstm_forward.1} parent=1 // pred_check_branch
      %44 = sbr.rel (0) target = $region21
    $region20: #{lstm_forward.1} parent=1 // pred_region
      _
    $region21: #{lstm_forward.1} parent=1 // pred_fallthru
      _
    // Predicated region
    $region22: #{lstm_forward.1} parent=1 // pred_check
      _
    $region23: #{lstm_forward.1} parent=1 // pred_check_branch
      %46 = sbr.rel (0) target = $region25
    $region24: #{lstm_forward.1} parent=1 // pred_region
      _
    $region25: #{lstm_forward.1} parent=1 // pred_fallthru
      _
    // Predicated region
    $region26: #{lstm_forward.1} parent=1 // pred_check
      _
    $region27: #{lstm_forward.1} parent=1 // pred_check_branch
      %48 = sbr.rel (0) target = $region29
    $region28: #{lstm_forward.1} parent=1 // pred_region
      _
    $region29: #{lstm_forward.1} parent=1 // pred_fallthru
      _
    // Predicated region
    $region30: #{lstm_forward.1} parent=1 // pred_check
      _
    $region31: #{lstm_forward.1} parent=1 // pred_check_branch
      %50 = sbr.rel (0) target = $region33
    $region32: #{lstm_forward.1} parent=1 // pred_region
      _
    $region33: #{lstm_forward.1} parent=1 // pred_fallthru
      _
    // Predicated region
    $region34: #{lstm_forward.1} parent=1 // pred_check
      _
    $region35: #{lstm_forward.1} parent=1 // pred_check_branch
      %52 = sbr.rel (0) target = $region37
    $region36: #{lstm_forward.1} parent=1 // pred_region
      %53 = dma.done [#allocation6], 4096
    $region37: #{lstm_forward.1} parent=1 // pred_fallthru
      _
    // Predicated region
    $region38: #{lstm_forward.1} parent=1 // pred_check
      _
    $region39: #{lstm_forward.1} parent=1 // pred_check_branch
      %55 = sbr.rel (0) target = $region41
    $region40: #{lstm_forward.1} parent=1 // pred_region
      %56 = dma.done [#allocation8], 4096
    $region41: #{lstm_forward.1} parent=1 // pred_fallthru
      _
    %p58 = scmp.eq.s32.totalorder 0, 0
    // Predicated region
    $region42: #{lstm_forward.1} parent=1 // pred_check
      %p59 = pneg %p58
    $region43: #{lstm_forward.1} parent=1 // pred_check_branch
      %61 = sbr.rel (%p59) target = $region45
    $region44: #{lstm_forward.1} parent=1 // pred_region
      %v62 = vld [vmem:[%s4] sm:$0xff]
      %63 = vst [vmem:[#allocation2] sm:$0xff] %v62
      %v64 = vld [vmem:[%s5] sm:$0xff]
      %65 = vst [vmem:[#allocation3] sm:$0xff] %v64
    $region45: #{lstm_forward.1} parent=1 // pred_fallthru
      _
    %v66 = vld [vmem:[%s0] sm:$0xf]
    %v67 = vld [vmem:[%s0 + $0x4] sm:$0xf]
    %v68 = vld [vmem:[%s0 + $0x8] sm:$0xf]
    %v69 = vld [vmem:[%s0 + $0xc] sm:$0xf]
    %v70 = vld [vmem:[%s0 + $0x10] sm:$0xf]
    %v71 = vld [vmem:[%s0 + $0x14] sm:$0xf]
    %v72 = vld [vmem:[%s0 + $0x18] sm:$0xf]
    %v73 = vld [vmem:[%s0 + $0x1c] sm:$0xf]
    %v74 = vld [vmem:[#allocation5] sm:$0xff]
    %v75 = vld [vmem:[#allocation5 + $0x8] sm:$0xff]
    %v76 = vld [vmem:[#allocation5 + $0x10] sm:$0xff]
    %v77 = vld [vmem:[#allocation5 + $0x18] sm:$0xff]
    %v78 = vld [vmem:[#allocation5 + $0x20] sm:$0xff]
    %v79 = vld [vmem:[#allocation5 + $0x28] sm:$0xff]
    %v80 = vld [vmem:[#allocation5 + $0x30] sm:$0xff]
    %v81 = vld [vmem:[#allocation5 + $0x38] sm:$0xff]
    %v82 = vld [vmem:[#allocation5 + $0x40] sm:$0xff]
    %v83 = vld [vmem:[#allocation5 + $0x48] sm:$0xff]
    %v84 = vld [vmem:[#allocation5 + $0x50] sm:$0xff]
    %v85 = vld [vmem:[#allocation5 + $0x58] sm:$0xff]
    %v86 = vld [vmem:[#allocation5 + $0x60] sm:$0xff]
    %v87 = vld [vmem:[#allocation5 + $0x68] sm:$0xff]
    %v88 = vld [vmem:[#allocation5 + $0x70] sm:$0xff]
    %v89 = vld [vmem:[#allocation5 + $0x78] sm:$0xff]
    %v90 = vld [vmem:[#allocation5 + $0x80] sm:$0xff]
    %v91 = vld [vmem:[#allocation5 + $0x88] sm:$0xff]
    %v92 = vld [vmem:[#allocation5 + $0x90] sm:$0xff]
    %v93 = vld [vmem:[#allocation5 + $0x98] sm:$0xff]
    %v94 = vld [vmem:[#allocation5 + $0xa0] sm:$0xff]
    %v95 = vld [vmem:[#allocation5 + $0xa8] sm:$0xff]
    %v96 = vld [vmem:[#allocation5 + $0xb0] sm:$0xff]
    %v97 = vld [vmem:[#allocation5 + $0xb8] sm:$0xff]
    %v98 = vld [vmem:[#allocation5 + $0xc0] sm:$0xff]
    %v99 = vld [vmem:[#allocation5 + $0xc8] sm:$0xff]
    %v100 = vld [vmem:[#allocation5 + $0xd0] sm:$0xff]
    %v101 = vld [vmem:[#allocation5 + $0xd8] sm:$0xff]
    %v102 = vld [vmem:[#allocation5 + $0xe0] sm:$0xff]
    %v103 = vld [vmem:[#allocation5 + $0xe8] sm:$0xff]
    %v104 = vld [vmem:[#allocation5 + $0xf0] sm:$0xff]
    %v105 = vld [vmem:[#allocation5 + $0xf8] sm:$0xff]
    %v106 = vld [vmem:[%s3] sm:$0xf]
    %v108 = vlaneseq
    %v109 = vshrl.u32 %v108, 7
    %v110 = vsub.s32 0, %v109
    %v111 = vrot.slane %v106, %v110
    %v112 = vlaneseq
    %v113 = vshrl.u32 %v112, 7
    %v114 = vsub.s32 1, %v113
    %v115 = vrot.slane %v106, %v114
    %v116 = vlaneseq
    %v117 = vshrl.u32 %v116, 7
    %v118 = vsub.s32 2, %v117
    %v119 = vrot.slane %v106, %v118
    %v120 = vlaneseq
    %v121 = vshrl.u32 %v120, 7
    %v122 = vsub.s32 3, %v121
    %v123 = vrot.slane %v106, %v122
    %v136 = vunpack.c.l.b16 %v66
    %v137 = vunpack.c.l.b16 %v67
    %v138 = vunpack.c.l.b16 %v68
    %v139 = vunpack.c.l.b16 %v69
    %v140 = vunpack.c.l.b16 %v70
    %v141 = vunpack.c.l.b16 %v71
    %v142 = vunpack.c.l.b16 %v72
    %v143 = vunpack.c.l.b16 %v73
    %v144 = vpack.c.b16 %v137, %v136
    %v145 = vpack.c.b16 %v139, %v138
    %v146 = vpack.c.b16 %v141, %v140
    %v147 = vpack.c.b16 %v143, %v142
    %v184 = vunpack.c.l.b16 %v74
    %v185 = vunpack.c.h.b16 %v74
    %v186 = vunpack.c.l.b16 %v75
    %v187 = vunpack.c.h.b16 %v75
    %v188 = vunpack.c.l.b16 %v76
    %v189 = vunpack.c.h.b16 %v76
    %v190 = vunpack.c.l.b16 %v77
    %v191 = vunpack.c.h.b16 %v77
    %v192 = vunpack.c.l.b16 %v78
    %v193 = vunpack.c.h.b16 %v78
    %v194 = vunpack.c.l.b16 %v79
    %v195 = vunpack.c.h.b16 %v79
    %v196 = vunpack.c.l.b16 %v80
    %v197 = vunpack.c.h.b16 %v80
    %v198 = vunpack.c.l.b16 %v81
    %v199 = vunpack.c.h.b16 %v81
    %v200 = vunpack.c.l.b16 %v82
    %v201 = vunpack.c.h.b16 %v82
    %v202 = vunpack.c.l.b16 %v83
    %v203 = vunpack.c.h.b16 %v83
    %v204 = vunpack.c.l.b16 %v84
    %v205 = vunpack.c.h.b16 %v84
    %v206 = vunpack.c.l.b16 %v85
    %v207 = vunpack.c.h.b16 %v85
    %v208 = vunpack.c.l.b16 %v86
    %v209 = vunpack.c.h.b16 %v86
    %v210 = vunpack.c.l.b16 %v87
    %v211 = vunpack.c.h.b16 %v87
    %v212 = vunpack.c.l.b16 %v88
    %v213 = vunpack.c.h.b16 %v88
    %v214 = vunpack.c.l.b16 %v89
    %v215 = vunpack.c.h.b16 %v89
    %v216 = vunpack.c.l.b16 %v90
    %v217 = vunpack.c.h.b16 %v90
    %v218 = vunpack.c.l.b16 %v91
    %v219 = vunpack.c.h.b16 %v91
    %v220 = vunpack.c.l.b16 %v92
    %v221 = vunpack.c.h.b16 %v92
    %v222 = vunpack.c.l.b16 %v93
    %v223 = vunpack.c.h.b16 %v93
    %v224 = vunpack.c.l.b16 %v94
    %v225 = vunpack.c.h.b16 %v94
    %v226 = vunpack.c.l.b16 %v95
    %v227 = vunpack.c.h.b16 %v95
    %v228 = vunpack.c.l.b16 %v96
    %v229 = vunpack.c.h.b16 %v96
    %v230 = vunpack.c.l.b16 %v97
    %v231 = vunpack.c.h.b16 %v97
    %v232 = vunpack.c.l.b16 %v98
    %v233 = vunpack.c.h.b16 %v98
    %v234 = vunpack.c.l.b16 %v99
    %v235 = vunpack.c.h.b16 %v99
    %v236 = vunpack.c.l.b16 %v100
    %v237 = vunpack.c.h.b16 %v100
    %v238 = vunpack.c.l.b16 %v101
    %v239 = vunpack.c.h.b16 %v101
    %v240 = vunpack.c.l.b16 %v102
    %v241 = vunpack.c.h.b16 %v102
    %v242 = vunpack.c.l.b16 %v103
    %v243 = vunpack.c.h.b16 %v103
    %v244 = vunpack.c.l.b16 %v104
    %v245 = vunpack.c.h.b16 %v104
    %v246 = vunpack.c.l.b16 %v105
    %v247 = vunpack.c.h.b16 %v105
    %v248 = vpack.c.b16 %v188, %v184
    %v249 = vpack.c.b16 %v189, %v185
    %v250 = vpack.c.b16 %v190, %v186
    %v251 = vpack.c.b16 %v191, %v187
    %v252 = vpack.c.b16 %v196, %v192
    %v253 = vpack.c.b16 %v197, %v193
    %v254 = vpack.c.b16 %v198, %v194
    %v255 = vpack.c.b16 %v199, %v195
    %v256 = vpack.c.b16 %v204, %v200
    %v257 = vpack.c.b16 %v205, %v201
    %v258 = vpack.c.b16 %v206, %v202
    %v259 = vpack.c.b16 %v207, %v203
    %v260 = vpack.c.b16 %v212, %v208
    %v261 = vpack.c.b16 %v213, %v209
    %v262 = vpack.c.b16 %v214, %v210
    %v263 = vpack.c.b16 %v215, %v211
    %v264 = vpack.c.b16 %v220, %v216
    %v265 = vpack.c.b16 %v221, %v217
    %v266 = vpack.c.b16 %v222, %v218
    %v267 = vpack.c.b16 %v223, %v219
    %v268 = vpack.c.b16 %v228, %v224
    %v269 = vpack.c.b16 %v229, %v225
    %v270 = vpack.c.b16 %v230, %v226
    %v271 = vpack.c.b16 %v231, %v227
    %v272 = vpack.c.b16 %v236, %v232
    %v273 = vpack.c.b16 %v237, %v233
    %v274 = vpack.c.b16 %v238, %v234
    %v275 = vpack.c.b16 %v239, %v235
    %v276 = vpack.c.b16 %v244, %v240
    %v277 = vpack.c.b16 %v245, %v241
    %v278 = vpack.c.b16 %v246, %v242
    %v279 = vpack.c.b16 %v247, %v243
    %312 = vmatprep.subr.bf16.mxu0 %v249
    %313 = vmatpush1.bf16.msra.mxu0 %v248
    %314 = vmatprep.subr.bf16.mxu0 %v253
    %315 = vmatpush1.bf16.msra.mxu0 %v252
    %316 = vmatprep.subr.bf16.mxu0 %v257
    %317 = vmatpush1.bf16.msra.mxu0 %v256
    %318 = vmatprep.subr.bf16.mxu0 %v261
    %319 = vmatpush1.bf16.msra.mxu0 %v260
    %320 = vmatprep.subr.bf16.mxu0 %v265
    %321 = vmatpush1.bf16.msra.mxu0 %v264
    %322 = vmatprep.subr.bf16.mxu0 %v269
    %323 = vmatpush1.bf16.msra.mxu0 %v268
    %324 = vmatprep.subr.bf16.mxu0 %v273
    %325 = vmatpush1.bf16.msra.mxu0 %v272
    %326 = vmatprep.subr.bf16.mxu0 %v277
    %327 = vmatpush1.bf16.msra.mxu0 %v276
    %328 = vmatprep.subr.bf16.mxu0 0
    %329 = vmatpush1.bf16.msra.mxu0 0
    %330 = vmatprep.subr.bf16.mxu0 0
    %331 = vmatpush1.bf16.msra.mxu0 0
    %332 = vmatprep.subr.bf16.mxu0 0
    %333 = vmatpush1.bf16.msra.mxu0 0
    %334 = vmatprep.subr.bf16.mxu0 0
    %335 = vmatpush1.bf16.msra.mxu0 0
    %336 = vmatprep.subr.bf16.mxu0 0
    %337 = vmatpush1.bf16.msra.mxu0 0
    %338 = vmatprep.subr.bf16.mxu0 0
    %339 = vmatpush1.bf16.msra.mxu0 0
    %340 = vmatprep.subr.bf16.mxu0 0
    %341 = vmatpush1.bf16.msra.mxu0 0
    %342 = vmatprep.subr.bf16.mxu0 0
    %343 = vmatpush1.bf16.msra.mxu0 0
    %344 = vmatprep.mubr.bf16.mxu0 0
    %345 = vmatmul.mubr.bf16.gmra.mrb[0].mxu0 %v144
    %v346 = vpop.f32.mrb[0].mxu0
    %v347 = vadd.f32 %v111, %v346
    %v348 = vpop.f32.mrb[0].mxu0
    %v349 = vadd.f32 %v115, %v348
    %v350 = vpop.f32.mrb[0].mxu0
    %v351 = vadd.f32 %v111, %v350
    %v352 = vpop.f32.mrb[0].mxu0
    %v353 = vadd.f32 %v115, %v352
    %354 = vmatprep.mubr.bf16.mxu0 0
    %355 = vmatmul.mubr.bf16.gmra.mrb[0].mxu0 %v145
    %v356 = vpop.f32.mrb[0].mxu0
    %v357 = vadd.f32 %v111, %v356
    %v358 = vpop.f32.mrb[0].mxu0
    %v359 = vadd.f32 %v115, %v358
    %v360 = vpop.f32.mrb[0].mxu0
    %v361 = vadd.f32 %v111, %v360
    %v362 = vpop.f32.mrb[0].mxu0
    %v363 = vadd.f32 %v115, %v362
    %364 = vmatprep.mubr.bf16.mxu0 0
    %365 = vmatmul.mubr.bf16.gmra.mrb[0].mxu0 %v146
    %v366 = vpop.f32.mrb[0].mxu0
    %v367 = vadd.f32 %v111, %v366
    %v368 = vpop.f32.mrb[0].mxu0
    %v369 = vadd.f32 %v115, %v368
    %v370 = vpop.f32.mrb[0].mxu0
    %v371 = vadd.f32 %v111, %v370
    %v372 = vpop.f32.mrb[0].mxu0
    %v373 = vadd.f32 %v115, %v372
    %374 = vmatprep.mubr.bf16.mxu0 0
    %375 = vmatmul.mubr.bf16.gmra.mrb[0].mxu0 %v147
    %v376 = vpop.f32.mrb[0].mxu0
    %v377 = vadd.f32 %v111, %v376
    %v378 = vpop.f32.mrb[0].mxu0
    %v379 = vadd.f32 %v115, %v378
    %v380 = vpop.f32.mrb[0].mxu0
    %v381 = vadd.f32 %v111, %v380
    %v382 = vpop.f32.mrb[0].mxu0
    %v383 = vadd.f32 %v115, %v382
    %384 = vdwg.mxu0
    %385 = vmatprep.subr.bf16.mxu0 %v251
    %386 = vmatpush1.bf16.msra.mxu0 %v250
    %387 = vmatprep.subr.bf16.mxu0 %v255
    %388 = vmatpush1.bf16.msra.mxu0 %v254
    %389 = vmatprep.subr.bf16.mxu0 %v259
    %390 = vmatpush1.bf16.msra.mxu0 %v258
    %391 = vmatprep.subr.bf16.mxu0 %v263
    %392 = vmatpush1.bf16.msra.mxu0 %v262
    %393 = vmatprep.subr.bf16.mxu0 %v267
    %394 = vmatpush1.bf16.msra.mxu0 %v266
    %395 = vmatprep.subr.bf16.mxu0 %v271
    %396 = vmatpush1.bf16.msra.mxu0 %v270
    %397 = vmatprep.subr.bf16.mxu0 %v275
    %398 = vmatpush1.bf16.msra.mxu0 %v274
    %399 = vmatprep.subr.bf16.mxu0 %v279
    %400 = vmatpush1.bf16.msra.mxu0 %v278
    %401 = vmatprep.subr.bf16.mxu0 0
    %402 = vmatpush1.bf16.msra.mxu0 0
    %403 = vmatprep.subr.bf16.mxu0 0
    %404 = vmatpush1.bf16.msra.mxu0 0
    %405 = vmatprep.subr.bf16.mxu0 0
    %406 = vmatpush1.bf16.msra.mxu0 0
    %407 = vmatprep.subr.bf16.mxu0 0
    %408 = vmatpush1.bf16.msra.mxu0 0
    %409 = vmatprep.subr.bf16.mxu0 0
    %410 = vmatpush1.bf16.msra.mxu0 0
    %411 = vmatprep.subr.bf16.mxu0 0
    %412 = vmatpush1.bf16.msra.mxu0 0
    %413 = vmatprep.subr.bf16.mxu0 0
    %414 = vmatpush1.bf16.msra.mxu0 0
    %415 = vmatprep.subr.bf16.mxu0 0
    %416 = vmatpush1.bf16.msra.mxu0 0
    %417 = vmatprep.mubr.bf16.mxu0 0
    %418 = vmatmul.mubr.bf16.gmra.mrb[0].mxu0 %v144
    %v419 = vpop.f32.mrb[0].mxu0
    %v420 = vadd.f32 %v119, %v419
    %v421 = vpop.f32.mrb[0].mxu0
    %v422 = vadd.f32 %v123, %v421
    %v423 = vpop.f32.mrb[0].mxu0
    %v424 = vadd.f32 %v119, %v423
    %v425 = vpop.f32.mrb[0].mxu0
    %v426 = vadd.f32 %v123, %v425
    %427 = vmatprep.mubr.bf16.mxu0 0
    %428 = vmatmul.mubr.bf16.gmra.mrb[0].mxu0 %v145
    %v429 = vpop.f32.mrb[0].mxu0
    %v430 = vadd.f32 %v119, %v429
    %v431 = vpop.f32.mrb[0].mxu0
    %v432 = vadd.f32 %v123, %v431
    %v433 = vpop.f32.mrb[0].mxu0
    %v434 = vadd.f32 %v119, %v433
    %v435 = vpop.f32.mrb[0].mxu0
    %v436 = vadd.f32 %v123, %v435
    %437 = vmatprep.mubr.bf16.mxu0 0
    %438 = vmatmul.mubr.bf16.gmra.mrb[0].mxu0 %v146
    %v439 = vpop.f32.mrb[0].mxu0
    %v440 = vadd.f32 %v119, %v439
    %v441 = vpop.f32.mrb[0].mxu0
    %v442 = vadd.f32 %v123, %v441
    %v443 = vpop.f32.mrb[0].mxu0
    %v444 = vadd.f32 %v119, %v443
    %v445 = vpop.f32.mrb[0].mxu0
    %v446 = vadd.f32 %v123, %v445
    %447 = vmatprep.mubr.bf16.mxu0 0
    %448 = vmatmul.mubr.bf16.gmra.mrb[0].mxu0 %v147
    %v449 = vpop.f32.mrb[0].mxu0
    %v450 = vadd.f32 %v119, %v449
    %v451 = vpop.f32.mrb[0].mxu0
    %v452 = vadd.f32 %v123, %v451
    %v453 = vpop.f32.mrb[0].mxu0
    %v454 = vadd.f32 %v119, %v453
    %v455 = vpop.f32.mrb[0].mxu0
    %v456 = vadd.f32 %v123, %v455
    %457 = vdwg.mxu0
    %458 = vst [vmem:[#allocation4] sm:$0xff] %v347
    %459 = vst [vmem:[#allocation4 + $0x8] sm:$0xff] %v349
    %460 = vst [vmem:[#allocation4 + $0x10] sm:$0xff] %v420
    %461 = vst [vmem:[#allocation4 + $0x18] sm:$0xff] %v422
    %462 = vst [vmem:[#allocation4 + $0x20] sm:$0xff] %v351
    %463 = vst [vmem:[#allocation4 + $0x28] sm:$0xff] %v353
    %464 = vst [vmem:[#allocation4 + $0x30] sm:$0xff] %v424
    %465 = vst [vmem:[#allocation4 + $0x38] sm:$0xff] %v426
    %466 = vst [vmem:[#allocation4 + $0x40] sm:$0xff] %v357
    %467 = vst [vmem:[#allocation4 + $0x48] sm:$0xff] %v359
    %468 = vst [vmem:[#allocation4 + $0x50] sm:$0xff] %v430
    %469 = vst [vmem:[#allocation4 + $0x58] sm:$0xff] %v432
    %470 = vst [vmem:[#allocation4 + $0x60] sm:$0xff] %v361
    %471 = vst [vmem:[#allocation4 + $0x68] sm:$0xff] %v363
    %472 = vst [vmem:[#allocation4 + $0x70] sm:$0xff] %v434
    %473 = vst [vmem:[#allocation4 + $0x78] sm:$0xff] %v436
    %474 = vst [vmem:[#allocation4 + $0x80] sm:$0xff] %v367
    %475 = vst [vmem:[#allocation4 + $0x88] sm:$0xff] %v369
    %476 = vst [vmem:[#allocation4 + $0x90] sm:$0xff] %v440
    %477 = vst [vmem:[#allocation4 + $0x98] sm:$0xff] %v442
    %478 = vst [vmem:[#allocation4 + $0xa0] sm:$0xff] %v371
    %479 = vst [vmem:[#allocation4 + $0xa8] sm:$0xff] %v373
    %480 = vst [vmem:[#allocation4 + $0xb0] sm:$0xff] %v444
    %481 = vst [vmem:[#allocation4 + $0xb8] sm:$0xff] %v446
    %482 = vst [vmem:[#allocation4 + $0xc0] sm:$0xff] %v377
    %483 = vst [vmem:[#allocation4 + $0xc8] sm:$0xff] %v379
    %484 = vst [vmem:[#allocation4 + $0xd0] sm:$0xff] %v450
    %485 = vst [vmem:[#allocation4 + $0xd8] sm:$0xff] %v452
    %486 = vst [vmem:[#allocation4 + $0xe0] sm:$0xff] %v381
    %487 = vst [vmem:[#allocation4 + $0xe8] sm:$0xff] %v383
    %488 = vst [vmem:[#allocation4 + $0xf0] sm:$0xff] %v454
    %489 = vst [vmem:[#allocation4 + $0xf8] sm:$0xff] %v456
    %s490 = smul.u32 0, 4
    %s491 = smul.addr %s490, 8
    %s492 = scalar_lea.vmem [#allocation4], %s491
    %v493 = vld [vmem:[%s492] sm:$0xff]
    %v494 = vld [vmem:[%s492 + $0x8] sm:$0xff]
    %v495 = vld [vmem:[%s492 + $0x10] sm:$0xff]
    %v496 = vld [vmem:[%s492 + $0x18] sm:$0xff]
    %v497 = vld [vmem:[#allocation2] sm:$0xff]
    %v498 = vpack.c.bf16 %v497, %v497
    %v499 = vld [vmem:[#allocation7] sm:$0xff]
    %v500 = vld [vmem:[#allocation7 + $0x8] sm:$0xff]
    %v501 = vld [vmem:[#allocation7 + $0x10] sm:$0xff]
    %v502 = vld [vmem:[#allocation7 + $0x18] sm:$0xff]
    %v503 = vld [vmem:[#allocation7 + $0x20] sm:$0xff]
    %v504 = vld [vmem:[#allocation7 + $0x28] sm:$0xff]
    %v505 = vld [vmem:[#allocation7 + $0x30] sm:$0xff]
    %v506 = vld [vmem:[#allocation7 + $0x38] sm:$0xff]
    %v507 = vld [vmem:[#allocation7 + $0x40] sm:$0xff]
    %v508 = vld [vmem:[#allocation7 + $0x48] sm:$0xff]
    %v509 = vld [vmem:[#allocation7 + $0x50] sm:$0xff]
    %v510 = vld [vmem:[#allocation7 + $0x58] sm:$0xff]
    %v511 = vld [vmem:[#allocation7 + $0x60] sm:$0xff]
    %v512 = vld [vmem:[#allocation7 + $0x68] sm:$0xff]
    %v513 = vld [vmem:[#allocation7 + $0x70] sm:$0xff]
    %v514 = vld [vmem:[#allocation7 + $0x78] sm:$0xff]
    %v515 = vld [vmem:[#allocation7 + $0x80] sm:$0xff]
    %v516 = vld [vmem:[#allocation7 + $0x88] sm:$0xff]
    %v517 = vld [vmem:[#allocation7 + $0x90] sm:$0xff]
    %v518 = vld [vmem:[#allocation7 + $0x98] sm:$0xff]
    %v519 = vld [vmem:[#allocation7 + $0xa0] sm:$0xff]
    %v520 = vld [vmem:[#allocation7 + $0xa8] sm:$0xff]
    %v521 = vld [vmem:[#allocation7 + $0xb0] sm:$0xff]
    %v522 = vld [vmem:[#allocation7 + $0xb8] sm:$0xff]
    %v523 = vld [vmem:[#allocation7 + $0xc0] sm:$0xff]
    %v524 = vld [vmem:[#allocation7 + $0xc8] sm:$0xff]
    %v525 = vld [vmem:[#allocation7 + $0xd0] sm:$0xff]
    %v526 = vld [vmem:[#allocation7 + $0xd8] sm:$0xff]
    %v527 = vld [vmem:[#allocation7 + $0xe0] sm:$0xff]
    %v528 = vld [vmem:[#allocation7 + $0xe8] sm:$0xff]
    %v529 = vld [vmem:[#allocation7 + $0xf0] sm:$0xff]
    %v530 = vld [vmem:[#allocation7 + $0xf8] sm:$0xff]
    %v563 = vunpack.c.l.b16 %v499
    %v564 = vunpack.c.h.b16 %v499
    %v565 = vunpack.c.l.b16 %v500
    %v566 = vunpack.c.h.b16 %v500
    %v567 = vunpack.c.l.b16 %v501
    %v568 = vunpack.c.h.b16 %v501
    %v569 = vunpack.c.l.b16 %v502
    %v570 = vunpack.c.h.b16 %v502
    %v571 = vunpack.c.l.b16 %v503
    %v572 = vunpack.c.h.b16 %v503
    %v573 = vunpack.c.l.b16 %v504
    %v574 = vunpack.c.h.b16 %v504
    %v575 = vunpack.c.l.b16 %v505
    %v576 = vunpack.c.h.b16 %v505
    %v577 = vunpack.c.l.b16 %v506
    %v578 = vunpack.c.h.b16 %v506
    %v579 = vunpack.c.l.b16 %v507
    %v580 = vunpack.c.h.b16 %v507
    %v581 = vunpack.c.l.b16 %v508
    %v582 = vunpack.c.h.b16 %v508
    %v583 = vunpack.c.l.b16 %v509
    %v584 = vunpack.c.h.b16 %v509
    %v585 = vunpack.c.l.b16 %v510
    %v586 = vunpack.c.h.b16 %v510
    %v587 = vunpack.c.l.b16 %v511
    %v588 = vunpack.c.h.b16 %v511
    %v589 = vunpack.c.l.b16 %v512
    %v590 = vunpack.c.h.b16 %v512
    %v591 = vunpack.c.l.b16 %v513
    %v592 = vunpack.c.h.b16 %v513
    %v593 = vunpack.c.l.b16 %v514
    %v594 = vunpack.c.h.b16 %v514
    %v595 = vunpack.c.l.b16 %v515
    %v596 = vunpack.c.h.b16 %v515
    %v597 = vunpack.c.l.b16 %v516
    %v598 = vunpack.c.h.b16 %v516
    %v599 = vunpack.c.l.b16 %v517
    %v600 = vunpack.c.h.b16 %v517
    %v601 = vunpack.c.l.b16 %v518
    %v602 = vunpack.c.h.b16 %v518
    %v603 = vunpack.c.l.b16 %v519
    %v604 = vunpack.c.h.b16 %v519
    %v605 = vunpack.c.l.b16 %v520
    %v606 = vunpack.c.h.b16 %v520
    %v607 = vunpack.c.l.b16 %v521
    %v608 = vunpack.c.h.b16 %v521
    %v609 = vunpack.c.l.b16 %v522
    %v610 = vunpack.c.h.b16 %v522
    %v611 = vunpack.c.l.b16 %v523
    %v612 = vunpack.c.h.b16 %v523
    %v613 = vunpack.c.l.b16 %v524
    %v614 = vunpack.c.h.b16 %v524
    %v615 = vunpack.c.l.b16 %v525
    %v616 = vunpack.c.h.b16 %v525
    %v617 = vunpack.c.l.b16 %v526
    %v618 = vunpack.c.h.b16 %v526
    %v619 = vunpack.c.l.b16 %v527
    %v620 = vunpack.c.h.b16 %v527
    %v621 = vunpack.c.l.b16 %v528
    %v622 = vunpack.c.h.b16 %v528
    %v623 = vunpack.c.l.b16 %v529
    %v624 = vunpack.c.h.b16 %v529
    %v625 = vunpack.c.l.b16 %v530
    %v626 = vunpack.c.h.b16 %v530
    %v627 = vpack.c.b16 %v567, %v563
    %v628 = vpack.c.b16 %v568, %v564
    %v629 = vpack.c.b16 %v569, %v565
    %v630 = vpack.c.b16 %v570, %v566
    %v631 = vpack.c.b16 %v575, %v571
    %v632 = vpack.c.b16 %v576, %v572
    %v633 = vpack.c.b16 %v577, %v573
    %v634 = vpack.c.b16 %v578, %v574
    %v635 = vpack.c.b16 %v583, %v579
    %v636 = vpack.c.b16 %v584, %v580
    %v637 = vpack.c.b16 %v585, %v581
    %v638 = vpack.c.b16 %v586, %v582
    %v639 = vpack.c.b16 %v591, %v587
    %v640 = vpack.c.b16 %v592, %v588
    %v641 = vpack.c.b16 %v593, %v589
    %v642 = vpack.c.b16 %v594, %v590
    %v643 = vpack.c.b16 %v599, %v595
    %v644 = vpack.c.b16 %v600, %v596
    %v645 = vpack.c.b16 %v601, %v597
    %v646 = vpack.c.b16 %v602, %v598
    %v647 = vpack.c.b16 %v607, %v603
    %v648 = vpack.c.b16 %v608, %v604
    %v649 = vpack.c.b16 %v609, %v605
    %v650 = vpack.c.b16 %v610, %v606
    %v651 = vpack.c.b16 %v615, %v611
    %v652 = vpack.c.b16 %v616, %v612
    %v653 = vpack.c.b16 %v617, %v613
    %v654 = vpack.c.b16 %v618, %v614
    %v655 = vpack.c.b16 %v623, %v619
    %v656 = vpack.c.b16 %v624, %v620
    %v657 = vpack.c.b16 %v625, %v621
    %v658 = vpack.c.b16 %v626, %v622
    %691 = vmatprep.subr.bf16.mxu0 %v628
    %692 = vmatpush1.bf16.msra.mxu0 %v627
    %693 = vmatprep.subr.bf16.mxu0 %v632
    %694 = vmatpush1.bf16.msra.mxu0 %v631
    %695 = vmatprep.subr.bf16.mxu0 %v636
    %696 = vmatpush1.bf16.msra.mxu0 %v635
    %697 = vmatprep.subr.bf16.mxu0 %v640
    %698 = vmatpush1.bf16.msra.mxu0 %v639
    %699 = vmatprep.subr.bf16.mxu0 %v644
    %700 = vmatpush1.bf16.msra.mxu0 %v643
    %701 = vmatprep.subr.bf16.mxu0 %v648
    %702 = vmatpush1.bf16.msra.mxu0 %v647
    %703 = vmatprep.subr.bf16.mxu0 %v652
    %704 = vmatpush1.bf16.msra.mxu0 %v651
    %705 = vmatprep.subr.bf16.mxu0 %v656
    %706 = vmatpush1.bf16.msra.mxu0 %v655
    %707 = vmatprep.subr.bf16.mxu0 0
    %708 = vmatpush1.bf16.msra.mxu0 0
    %709 = vmatprep.subr.bf16.mxu0 0
    %710 = vmatpush1.bf16.msra.mxu0 0
    %711 = vmatprep.subr.bf16.mxu0 0
    %712 = vmatpush1.bf16.msra.mxu0 0
    %713 = vmatprep.subr.bf16.mxu0 0
    %714 = vmatpush1.bf16.msra.mxu0 0
    %715 = vmatprep.subr.bf16.mxu0 0
    %716 = vmatpush1.bf16.msra.mxu0 0
    %717 = vmatprep.subr.bf16.mxu0 0
    %718 = vmatpush1.bf16.msra.mxu0 0
    %719 = vmatprep.subr.bf16.mxu0 0
    %720 = vmatpush1.bf16.msra.mxu0 0
    %721 = vmatprep.subr.bf16.mxu0 0
    %722 = vmatpush1.bf16.msra.mxu0 0
    %723 = vmatprep.mubr.bf16.mxu0 0
    %724 = vmatmul.mubr.bf16.gmra.mrb[0].mxu0 %v498
    %v725 = vpop.f32.mrb[0].mxu0
    %v726 = vadd.f32 0.0, %v725
    %v727 = vpop.f32.mrb[0].mxu0
    %v728 = vadd.f32 0.0, %v727
    %v729 = vpop.f32.mrb[0].mxu0
    %v730 = vpop.f32.mrb[0].mxu0
    %731 = vdwg.mxu0
    %732 = vmatprep.subr.bf16.mxu0 %v630
    %733 = vmatpush1.bf16.msra.mxu0 %v629
    %734 = vmatprep.subr.bf16.mxu0 %v634
    %735 = vmatpush1.bf16.msra.mxu0 %v633
    %736 = vmatprep.subr.bf16.mxu0 %v638
    %737 = vmatpush1.bf16.msra.mxu0 %v637
    %738 = vmatprep.subr.bf16.mxu0 %v642
    %739 = vmatpush1.bf16.msra.mxu0 %v641
    %740 = vmatprep.subr.bf16.mxu0 %v646
    %741 = vmatpush1.bf16.msra.mxu0 %v645
    %742 = vmatprep.subr.bf16.mxu0 %v650
    %743 = vmatpush1.bf16.msra.mxu0 %v649
    %744 = vmatprep.subr.bf16.mxu0 %v654
    %745 = vmatpush1.bf16.msra.mxu0 %v653
    %746 = vmatprep.subr.bf16.mxu0 %v658
    %747 = vmatpush1.bf16.msra.mxu0 %v657
    %748 = vmatprep.subr.bf16.mxu0 0
    %749 = vmatpush1.bf16.msra.mxu0 0
    %750 = vmatprep.subr.bf16.mxu0 0
    %751 = vmatpush1.bf16.msra.mxu0 0
    %752 = vmatprep.subr.bf16.mxu0 0
    %753 = vmatpush1.bf16.msra.mxu0 0
    %754 = vmatprep.subr.bf16.mxu0 0
    %755 = vmatpush1.bf16.msra.mxu0 0
    %756 = vmatprep.subr.bf16.mxu0 0
    %757 = vmatpush1.bf16.msra.mxu0 0
    %758 = vmatprep.subr.bf16.mxu0 0
    %759 = vmatpush1.bf16.msra.mxu0 0
    %760 = vmatprep.subr.bf16.mxu0 0
    %761 = vmatpush1.bf16.msra.mxu0 0
    %762 = vmatprep.subr.bf16.mxu0 0
    %763 = vmatpush1.bf16.msra.mxu0 0
    %764 = vmatprep.mubr.bf16.mxu0 0
    %765 = vmatmul.mubr.bf16.gmra.mrb[0].mxu0 %v498
    %v766 = vpop.f32.mrb[0].mxu0
    %v767 = vadd.f32 0.0, %v766
    %v768 = vpop.f32.mrb[0].mxu0
    %v769 = vadd.f32 0.0, %v768
    %v770 = vpop.f32.mrb[0].mxu0
    %v771 = vpop.f32.mrb[0].mxu0
    %772 = vdwg.mxu0
    %v773 = vadd.f32 %v493, %v726
    %v774 = vadd.f32 %v494, %v728
    %v775 = vadd.f32 %v495, %v767
    %v776 = vadd.f32 %v496, %v769
    %v777 = vmul.f32 %v773, 0.5
    %v778 = vtanh.pop %v777
    %v779 = vmul.f32 %v778, 0.5
    %v780 = vadd.f32 %v779, 0.5
    %v781 = vmul.f32 %v774, 0.5
    %v782 = vtanh.pop %v781
    %v783 = vmul.f32 %v782, 0.5
    %v784 = vadd.f32 %v783, 0.5
    %v785 = vtanh.pop %v775
    %v786 = vmul.f32 %v776, 0.5
    %v787 = vtanh.pop %v786
    %v788 = vmul.f32 %v787, 0.5
    %v789 = vadd.f32 %v788, 0.5
    %v790 = vld [vmem:[#allocation3] sm:$0xff]
    %v791 = vmul.f32 %v784, %v790
    %v792 = vmul.f32 %v780, %v785
    %v793 = vadd.f32 %v791, %v792
    %794 = vst [vmem:[#allocation3] sm:$0xff] %v793
    %v795 = vtanh.pop %v793
    %v796 = vmul.f32 %v789, %v795
    %797 = vst [vmem:[#allocation2] sm:$0xff] %v796
    %s798 = smul.u32 1, 4
    %s799 = smul.addr %s798, 8
    %s800 = scalar_lea.vmem [#allocation4], %s799
    %v801 = vld [vmem:[%s800] sm:$0xff]
    %v802 = vld [vmem:[%s800 + $0x8] sm:$0xff]
    %v803 = vld [vmem:[%s800 + $0x10] sm:$0xff]
    %v804 = vld [vmem:[%s800 + $0x18] sm:$0xff]
    %v805 = vld [vmem:[#allocation2] sm:$0xff]
    %v806 = vpack.c.bf16 %v805, %v805
    %v807 = vld [vmem:[#allocation7] sm:$0xff]
    %v808 = vld [vmem:[#allocation7 + $0x8] sm:$0xff]
    %v809 = vld [vmem:[#allocation7 + $0x10] sm:$0xff]
    %v810 = vld [vmem:[#allocation7 + $0x18] sm:$0xff]
    %v811 = vld [vmem:[#allocation7 + $0x20] sm:$0xff]
    %v812 = vld [vmem:[#allocation7 + $0x28] sm:$0xff]
    %v813 = vld [vmem:[#allocation7 + $0x30] sm:$0xff]
    %v814 = vld [vmem:[#allocation7 + $0x38] sm:$0xff]
    %v815 = vld [vmem:[#allocation7 + $0x40] sm:$0xff]
    %v816 = vld [vmem:[#allocation7 + $0x48] sm:$0xff]
    %v817 = vld [vmem:[#allocation7 + $0x50] sm:$0xff]
    %v818 = vld [vmem:[#allocation7 + $0x58] sm:$0xff]
    %v819 = vld [vmem:[#allocation7 + $0x60] sm:$0xff]
    %v820 = vld [vmem:[#allocation7 + $0x68] sm:$0xff]
    %v821 = vld [vmem:[#allocation7 + $0x70] sm:$0xff]
    %v822 = vld [vmem:[#allocation7 + $0x78] sm:$0xff]
    %v823 = vld [vmem:[#allocation7 + $0x80] sm:$0xff]
    %v824 = vld [vmem:[#allocation7 + $0x88] sm:$0xff]
    %v825 = vld [vmem:[#allocation7 + $0x90] sm:$0xff]
    %v826 = vld [vmem:[#allocation7 + $0x98] sm:$0xff]
    %v827 = vld [vmem:[#allocation7 + $0xa0] sm:$0xff]
    %v828 = vld [vmem:[#allocation7 + $0xa8] sm:$0xff]
    %v829 = vld [vmem:[#allocation7 + $0xb0] sm:$0xff]
    %v830 = vld [vmem:[#allocation7 + $0xb8] sm:$0xff]
    %v831 = vld [vmem:[#allocation7 + $0xc0] sm:$0xff]
    %v832 = vld [vmem:[#allocation7 + $0xc8] sm:$0xff]
    %v833 = vld [vmem:[#allocation7 + $0xd0] sm:$0xff]
    %v834 = vld [vmem:[#allocation7 + $0xd8] sm:$0xff]
    %v835 = vld [vmem:[#allocation7 + $0xe0] sm:$0xff]
    %v836 = vld [vmem:[#allocation7 + $0xe8] sm:$0xff]
    %v837 = vld [vmem:[#allocation7 + $0xf0] sm:$0xff]
    %v838 = vld [vmem:[#allocation7 + $0xf8] sm:$0xff]
    %v871 = vunpack.c.l.b16 %v807
    %v872 = vunpack.c.h.b16 %v807
    %v873 = vunpack.c.l.b16 %v808
    %v874 = vunpack.c.h.b16 %v808
    %v875 = vunpack.c.l.b16 %v809
    %v876 = vunpack.c.h.b16 %v809
    %v877 = vunpack.c.l.b16 %v810
    %v878 = vunpack.c.h.b16 %v810
    %v879 = vunpack.c.l.b16 %v811
    %v880 = vunpack.c.h.b16 %v811
    %v881 = vunpack.c.l.b16 %v812
    %v882 = vunpack.c.h.b16 %v812
    %v883 = vunpack.c.l.b16 %v813
    %v884 = vunpack.c.h.b16 %v813
    %v885 = vunpack.c.l.b16 %v814
    %v886 = vunpack.c.h.b16 %v814
    %v887 = vunpack.c.l.b16 %v815
    %v888 = vunpack.c.h.b16 %v815
    %v889 = vunpack.c.l.b16 %v816
    %v890 = vunpack.c.h.b16 %v816
    %v891 = vunpack.c.l.b16 %v817
    %v892 = vunpack.c.h.b16 %v817
    %v893 = vunpack.c.l.b16 %v818
    %v894 = vunpack.c.h.b16 %v818
    %v895 = vunpack.c.l.b16 %v819
    %v896 = vunpack.c.h.b16 %v819
    %v897 = vunpack.c.l.b16 %v820
    %v898 = vunpack.c.h.b16 %v820
    %v899 = vunpack.c.l.b16 %v821
    %v900 = vunpack.c.h.b16 %v821
    %v901 = vunpack.c.l.b16 %v822
    %v902 = vunpack.c.h.b16 %v822
    %v903 = vunpack.c.l.b16 %v823
    %v904 = vunpack.c.h.b16 %v823
    %v905 = vunpack.c.l.b16 %v824
    %v906 = vunpack.c.h.b16 %v824
    %v907 = vunpack.c.l.b16 %v825
    %v908 = vunpack.c.h.b16 %v825
    %v909 = vunpack.c.l.b16 %v826
    %v910 = vunpack.c.h.b16 %v826
    %v911 = vunpack.c.l.b16 %v827
    %v912 = vunpack.c.h.b16 %v827
    %v913 = vunpack.c.l.b16 %v828
    %v914 = vunpack.c.h.b16 %v828
    %v915 = vunpack.c.l.b16 %v829
    %v916 = vunpack.c.h.b16 %v829
    %v917 = vunpack.c.l.b16 %v830
    %v918 = vunpack.c.h.b16 %v830
    %v919 = vunpack.c.l.b16 %v831
    %v920 = vunpack.c.h.b16 %v831
    %v921 = vunpack.c.l.b16 %v832
    %v922 = vunpack.c.h.b16 %v832
    %v923 = vunpack.c.l.b16 %v833
    %v924 = vunpack.c.h.b16 %v833
    %v925 = vunpack.c.l.b16 %v834
    %v926 = vunpack.c.h.b16 %v834
    %v927 = vunpack.c.l.b16 %v835
    %v928 = vunpack.c.h.b16 %v835
    %v929 = vunpack.c.l.b16 %v836
    %v930 = vunpack.c.h.b16 %v836
    %v931 = vunpack.c.l.b16 %v837
    %v932 = vunpack.c.h.b16 %v837
    %v933 = vunpack.c.l.b16 %v838
    %v934 = vunpack.c.h.b16 %v838
    %v935 = vpack.c.b16 %v875, %v871
    %v936 = vpack.c.b16 %v876, %v872
    %v937 = vpack.c.b16 %v877, %v873
    %v938 = vpack.c.b16 %v878, %v874
    %v939 = vpack.c.b16 %v883, %v879
    %v940 = vpack.c.b16 %v884, %v880
    %v941 = vpack.c.b16 %v885, %v881
    %v942 = vpack.c.b16 %v886, %v882
    %v943 = vpack.c.b16 %v891, %v887
    %v944 = vpack.c.b16 %v892, %v888
    %v945 = vpack.c.b16 %v893, %v889
    %v946 = vpack.c.b16 %v894, %v890
    %v947 = vpack.c.b16 %v899, %v895
    %v948 = vpack.c.b16 %v900, %v896
    %v949 = vpack.c.b16 %v901, %v897
    %v950 = vpack.c.b16 %v902, %v898
    %v951 = vpack.c.b16 %v907, %v903
    %v952 = vpack.c.b16 %v908, %v904
    %v953 = vpack.c.b16 %v909, %v905
    %v954 = vpack.c.b16 %v910, %v906
    %v955 = vpack.c.b16 %v915, %v911
    %v956 = vpack.c.b16 %v916, %v912
    %v957 = vpack.c.b16 %v917, %v913
    %v958 = vpack.c.b16 %v918, %v914
    %v959 = vpack.c.b16 %v923, %v919
    %v960 = vpack.c.b16 %v924, %v920
    %v961 = vpack.c.b16 %v925, %v921
    %v962 = vpack.c.b16 %v926, %v922
    %v963 = vpack.c.b16 %v931, %v927
    %v964 = vpack.c.b16 %v932, %v928
    %v965 = vpack.c.b16 %v933, %v929
    %v966 = vpack.c.b16 %v934, %v930
    %999 = vmatprep.subr.bf16.mxu0 %v936
    %1000 = vmatpush1.bf16.msra.mxu0 %v935
    %1001 = vmatprep.subr.bf16.mxu0 %v940
    %1002 = vmatpush1.bf16.msra.mxu0 %v939
    %1003 = vmatprep.subr.bf16.mxu0 %v944
    %1004 = vmatpush1.bf16.msra.mxu0 %v943
    %1005 = vmatprep.subr.bf16.mxu0 %v948
    %1006 = vmatpush1.bf16.msra.mxu0 %v947
    %1007 = vmatprep.subr.bf16.mxu0 %v952
    %1008 = vmatpush1.bf16.msra.mxu0 %v951
    %1009 = vmatprep.subr.bf16.mxu0 %v956
    %1010 = vmatpush1.bf16.msra.mxu0 %v955
    %1011 = vmatprep.subr.bf16.mxu0 %v960
    %1012 = vmatpush1.bf16.msra.mxu0 %v959
    %1013 = vmatprep.subr.bf16.mxu0 %v964
    %1014 = vmatpush1.bf16.msra.mxu0 %v963
    %1015 = vmatprep.subr.bf16.mxu0 0
    %1016 = vmatpush1.bf16.msra.mxu0 0
    %1017 = vmatprep.subr.bf16.mxu0 0
    %1018 = vmatpush1.bf16.msra.mxu0 0
    %1019 = vmatprep.subr.bf16.mxu0 0
    %1020 = vmatpush1.bf16.msra.mxu0 0
    %1021 = vmatprep.subr.bf16.mxu0 0
    %1022 = vmatpush1.bf16.msra.mxu0 0
    %1023 = vmatprep.subr.bf16.mxu0 0
    %1024 = vmatpush1.bf16.msra.mxu0 0
    %1025 = vmatprep.subr.bf16.mxu0 0
    %1026 = vmatpush1.bf16.msra.mxu0 0
    %1027 = vmatprep.subr.bf16.mxu0 0
    %1028 = vmatpush1.bf16.msra.mxu0 0
    %1029 = vmatprep.subr.bf16.mxu0 0
    %1030 = vmatpush1.bf16.msra.mxu0 0
    %1031 = vmatprep.mubr.bf16.mxu0 0
    %1032 = vmatmul.mubr.bf16.gmra.mrb[0].mxu0 %v806
    %v1033 = vpop.f32.mrb[0].mxu0
    %v1034 = vadd.f32 0.0, %v1033
    %v1035 = vpop.f32.mrb[0].mxu0
    %v1036 = vadd.f32 0.0, %v1035
    %v1037 = vpop.f32.mrb[0].mxu0
    %v1038 = vpop.f32.mrb[0].mxu0
    %1039 = vdwg.mxu0
    %1040 = vmatprep.subr.bf16.mxu0 %v938
    %1041 = vmatpush1.bf16.msra.mxu0 %v937
    %1042 = vmatprep.subr.bf16.mxu0 %v942
    %1043 = vmatpush1.bf16.msra.mxu0 %v941
    %1044 = vmatprep.subr.bf16.mxu0 %v946
    %1045 = vmatpush1.bf16.msra.mxu0 %v945
    %1046 = vmatprep.subr.bf16.mxu0 %v950
    %1047 = vmatpush1.bf16.msra.mxu0 %v949
    %1048 = vmatprep.subr.bf16.mxu0 %v954
    %1049 = vmatpush1.bf16.msra.mxu0 %v953
    %1050 = vmatprep.subr.bf16.mxu0 %v958
    %1051 = vmatpush1.bf16.msra.mxu0 %v957
    %1052 = vmatprep.subr.bf16.mxu0 %v962
    %1053 = vmatpush1.bf16.msra.mxu0 %v961
    %1054 = vmatprep.subr.bf16.mxu0 %v966
    %1055 = vmatpush1.bf16.msra.mxu0 %v965
    %1056 = vmatprep.subr.bf16.mxu0 0
    %1057 = vmatpush1.bf16.msra.mxu0 0
    %1058 = vmatprep.subr.bf16.mxu0 0
    %1059 = vmatpush1.bf16.msra.mxu0 0
    %1060 = vmatprep.subr.bf16.mxu0 0
    %1061 = vmatpush1.bf16.msra.mxu0 0
    %1062 = vmatprep.subr.bf16.mxu0 0
    %1063 = vmatpush1.bf16.msra.mxu0 0
    %1064 = vmatprep.subr.bf16.mxu0 0
    %1065 = vmatpush1.bf16.msra.mxu0 0
    %1066 = vmatprep.subr.bf16.mxu0 0
    %1067 = vmatpush1.bf16.msra.mxu0 0
    %1068 = vmatprep.subr.bf16.mxu0 0
    %1069 = vmatpush1.bf16.msra.mxu0 0
    %1070 = vmatprep.subr.bf16.mxu0 0
    %1071 = vmatpush1.bf16.msra.mxu0 0
    %1072 = vmatprep.mubr.bf16.mxu0 0
    %1073 = vmatmul.mubr.bf16.gmra.mrb[0].mxu0 %v806
    %v1074 = vpop.f32.mrb[0].mxu0
    %v1075 = vadd.f32 0.0, %v1074
    %v1076 = vpop.f32.mrb[0].mxu0
    %v1077 = vadd.f32 0.0, %v1076
    %v1078 = vpop.f32.mrb[0].mxu0
    %v1079 = vpop.f32.mrb[0].mxu0
    %1080 = vdwg.mxu0
    %v1081 = vadd.f32 %v801, %v1034
    %v1082 = vadd.f32 %v802, %v1036
    %v1083 = vadd.f32 %v803, %v1075
    %v1084 = vadd.f32 %v804, %v1077
    %v1085 = vmul.f32 %v1081, 0.5
    %v1086 = vtanh.pop %v1085
    %v1087 = vmul.f32 %v1086, 0.5
    %v1088 = vadd.f32 %v1087, 0.5
    %v1089 = vmul.f32 %v1082, 0.5
    %v1090 = vtanh.pop %v1089
    %v1091 = vmul.f32 %v1090, 0.5
    %v1092 = vadd.f32 %v1091, 0.5
    %v1093 = vtanh.pop %v1083
    %v1094 = vmul.f32 %v1084, 0.5
    %v1095 = vtanh.pop %v1094
    %v1096 = vmul.f32 %v1095, 0.5
    %v1097 = vadd.f32 %v1096, 0.5
    %v1098 = vld [vmem:[#allocation3] sm:$0xff]
    %v1099 = vmul.f32 %v1092, %v1098
    %v1100 = vmul.f32 %v1088, %v1093
    %v1101 = vadd.f32 %v1099, %v1100
    %1102 = vst [vmem:[#allocation3] sm:$0xff] %v1101
    %v1103 = vtanh.pop %v1101
    %v1104 = vmul.f32 %v1097, %v1103
    %1105 = vst [vmem:[#allocation2] sm:$0xff] %v1104
    %s1106 = smul.u32 2, 4
    %s1107 = smul.addr %s1106, 8
    %s1108 = scalar_lea.vmem [#allocation4], %s1107
    %v1109 = vld [vmem:[%s1108] sm:$0xff]
    %v1110 = vld [vmem:[%s1108 + $0x8] sm:$0xff]
    %v1111 = vld [vmem:[%s1108 + $0x10] sm:$0xff]
    %v1112 = vld [vmem:[%s1108 + $0x18] sm:$0xff]
    %v1113 = vld [vmem:[#allocation2] sm:$0xff]
    %v1114 = vpack.c.bf16 %v1113, %v1113
    %v1115 = vld [vmem:[#allocation7] sm:$0xff]
    %v1116 = vld [vmem:[#allocation7 + $0x8] sm:$0xff]
    %v1117 = vld [vmem:[#allocation7 + $0x10] sm:$0xff]
    %v1118 = vld [vmem:[#allocation7 + $0x18] sm:$0xff]
    %v1119 = vld [vmem:[#allocation7 + $0x20] sm:$0xff]
    %v1120 = vld [vmem:[#allocation7 + $0x28] sm:$0xff]
    %v1121 = vld [vmem:[#allocation7 + $0x30] sm:$0xff]
    %v1122 = vld [vmem:[#allocation7 + $0x38] sm:$0xff]
    %v1123 = vld [vmem:[#allocation7 + $0x40] sm:$0xff]
    %v1124 = vld [vmem:[#allocation7 + $0x48] sm:$0xff]
    %v1125 = vld [vmem:[#allocation7 + $0x50] sm:$0xff]
    %v1126 = vld [vmem:[#allocation7 + $0x58] sm:$0xff]
    %v1127 = vld [vmem:[#allocation7 + $0x60] sm:$0xff]
    %v1128 = vld [vmem:[#allocation7 + $0x68] sm:$0xff]
    %v1129 = vld [vmem:[#allocation7 + $0x70] sm:$0xff]
    %v1130 = vld [vmem:[#allocation7 + $0x78] sm:$0xff]
    %v1131 = vld [vmem:[#allocation7 + $0x80] sm:$0xff]
    %v1132 = vld [vmem:[#allocation7 + $0x88] sm:$0xff]
    %v1133 = vld [vmem:[#allocation7 + $0x90] sm:$0xff]
    %v1134 = vld [vmem:[#allocation7 + $0x98] sm:$0xff]
    %v1135 = vld [vmem:[#allocation7 + $0xa0] sm:$0xff]
    %v1136 = vld [vmem:[#allocation7 + $0xa8] sm:$0xff]
    %v1137 = vld [vmem:[#allocation7 + $0xb0] sm:$0xff]
    %v1138 = vld [vmem:[#allocation7 + $0xb8] sm:$0xff]
    %v1139 = vld [vmem:[#allocation7 + $0xc0] sm:$0xff]
    %v1140 = vld [vmem:[#allocation7 + $0xc8] sm:$0xff]
    %v1141 = vld [vmem:[#allocation7 + $0xd0] sm:$0xff]
    %v1142 = vld [vmem:[#allocation7 + $0xd8] sm:$0xff]
    %v1143 = vld [vmem:[#allocation7 + $0xe0] sm:$0xff]
    %v1144 = vld [vmem:[#allocation7 + $0xe8] sm:$0xff]
    %v1145 = vld [vmem:[#allocation7 + $0xf0] sm:$0xff]
    %v1146 = vld [vmem:[#allocation7 + $0xf8] sm:$0xff]
    %v1179 = vunpack.c.l.b16 %v1115
    %v1180 = vunpack.c.h.b16 %v1115
    %v1181 = vunpack.c.l.b16 %v1116
    %v1182 = vunpack.c.h.b16 %v1116
    %v1183 = vunpack.c.l.b16 %v1117
    %v1184 = vunpack.c.h.b16 %v1117
    %v1185 = vunpack.c.l.b16 %v1118
    %v1186 = vunpack.c.h.b16 %v1118
    %v1187 = vunpack.c.l.b16 %v1119
    %v1188 = vunpack.c.h.b16 %v1119
    %v1189 = vunpack.c.l.b16 %v1120
    %v1190 = vunpack.c.h.b16 %v1120
    %v1191 = vunpack.c.l.b16 %v1121
    %v1192 = vunpack.c.h.b16 %v1121
    %v1193 = vunpack.c.l.b16 %v1122
    %v1194 = vunpack.c.h.b16 %v1122
    %v1195 = vunpack.c.l.b16 %v1123
    %v1196 = vunpack.c.h.b16 %v1123
    %v1197 = vunpack.c.l.b16 %v1124
    %v1198 = vunpack.c.h.b16 %v1124
    %v1199 = vunpack.c.l.b16 %v1125
    %v1200 = vunpack.c.h.b16 %v1125
    %v1201 = vunpack.c.l.b16 %v1126
    %v1202 = vunpack.c.h.b16 %v1126
    %v1203 = vunpack.c.l.b16 %v1127
    %v1204 = vunpack.c.h.b16 %v1127
    %v1205 = vunpack.c.l.b16 %v1128
    %v1206 = vunpack.c.h.b16 %v1128
    %v1207 = vunpack.c.l.b16 %v1129
    %v1208 = vunpack.c.h.b16 %v1129
    %v1209 = vunpack.c.l.b16 %v1130
    %v1210 = vunpack.c.h.b16 %v1130
    %v1211 = vunpack.c.l.b16 %v1131
    %v1212 = vunpack.c.h.b16 %v1131
    %v1213 = vunpack.c.l.b16 %v1132
    %v1214 = vunpack.c.h.b16 %v1132
    %v1215 = vunpack.c.l.b16 %v1133
    %v1216 = vunpack.c.h.b16 %v1133
    %v1217 = vunpack.c.l.b16 %v1134
    %v1218 = vunpack.c.h.b16 %v1134
    %v1219 = vunpack.c.l.b16 %v1135
    %v1220 = vunpack.c.h.b16 %v1135
    %v1221 = vunpack.c.l.b16 %v1136
    %v1222 = vunpack.c.h.b16 %v1136
    %v1223 = vunpack.c.l.b16 %v1137
    %v1224 = vunpack.c.h.b16 %v1137
    %v1225 = vunpack.c.l.b16 %v1138
    %v1226 = vunpack.c.h.b16 %v1138
    %v1227 = vunpack.c.l.b16 %v1139
    %v1228 = vunpack.c.h.b16 %v1139
    %v1229 = vunpack.c.l.b16 %v1140
    %v1230 = vunpack.c.h.b16 %v1140
    %v1231 = vunpack.c.l.b16 %v1141
    %v1232 = vunpack.c.h.b16 %v1141
    %v1233 = vunpack.c.l.b16 %v1142
    %v1234 = vunpack.c.h.b16 %v1142
    %v1235 = vunpack.c.l.b16 %v1143
    %v1236 = vunpack.c.h.b16 %v1143
    %v1237 = vunpack.c.l.b16 %v1144
    %v1238 = vunpack.c.h.b16 %v1144
    %v1239 = vunpack.c.l.b16 %v1145
    %v1240 = vunpack.c.h.b16 %v1145
    %v1241 = vunpack.c.l.b16 %v1146
    %v1242 = vunpack.c.h.b16 %v1146
    %v1243 = vpack.c.b16 %v1183, %v1179
    %v1244 = vpack.c.b16 %v1184, %v1180
    %v1245 = vpack.c.b16 %v1185, %v1181
    %v1246 = vpack.c.b16 %v1186, %v1182
    %v1247 = vpack.c.b16 %v1191, %v1187
    %v1248 = vpack.c.b16 %v1192, %v1188
    %v1249 = vpack.c.b16 %v1193, %v1189
    %v1250 = vpack.c.b16 %v1194, %v1190
    %v1251 = vpack.c.b16 %v1199, %v1195
    %v1252 = vpack.c.b16 %v1200, %v1196
    %v1253 = vpack.c.b16 %v1201, %v1197
    %v1254 = vpack.c.b16 %v1202, %v1198
    %v1255 = vpack.c.b16 %v1207, %v1203
    %v1256 = vpack.c.b16 %v1208, %v1204
    %v1257 = vpack.c.b16 %v1209, %v1205
    %v1258 = vpack.c.b16 %v1210, %v1206
    %v1259 = vpack.c.b16 %v1215, %v1211
    %v1260 = vpack.c.b16 %v1216, %v1212
    %v1261 = vpack.c.b16 %v1217, %v1213
    %v1262 = vpack.c.b16 %v1218, %v1214
    %v1263 = vpack.c.b16 %v1223, %v1219
    %v1264 = vpack.c.b16 %v1224, %v1220
    %v1265 = vpack.c.b16 %v1225, %v1221
    %v1266 = vpack.c.b16 %v1226, %v1222
    %v1267 = vpack.c.b16 %v1231, %v1227
    %v1268 = vpack.c.b16 %v1232, %v1228
    %v1269 = vpack.c.b16 %v1233, %v1229
    %v1270 = vpack.c.b16 %v1234, %v1230
    %v1271 = vpack.c.b16 %v1239, %v1235
    %v1272 = vpack.c.b16 %v1240, %v1236
    %v1273 = vpack.c.b16 %v1241, %v1237
    %v1274 = vpack.c.b16 %v1242, %v1238
    %1307 = vmatprep.subr.bf16.mxu0 %v1244
    %1308 = vmatpush1.bf16.msra.mxu0 %v1243
    %1309 = vmatprep.subr.bf16.mxu0 %v1248
    %1310 = vmatpush1.bf16.msra.mxu0 %v1247
    %1311 = vmatprep.subr.bf16.mxu0 %v1252
    %1312 = vmatpush1.bf16.msra.mxu0 %v1251
    %1313 = vmatprep.subr.bf16.mxu0 %v1256
    %1314 = vmatpush1.bf16.msra.mxu0 %v1255
    %1315 = vmatprep.subr.bf16.mxu0 %v1260
    %1316 = vmatpush1.bf16.msra.mxu0 %v1259
    %1317 = vmatprep.subr.bf16.mxu0 %v1264
    %1318 = vmatpush1.bf16.msra.mxu0 %v1263
    %1319 = vmatprep.subr.bf16.mxu0 %v1268
    %1320 = vmatpush1.bf16.msra.mxu0 %v1267
    %1321 = vmatprep.subr.bf16.mxu0 %v1272
    %1322 = vmatpush1.bf16.msra.mxu0 %v1271
    %1323 = vmatprep.subr.bf16.mxu0 0
    %1324 = vmatpush1.bf16.msra.mxu0 0
    %1325 = vmatprep.subr.bf16.mxu0 0
    %1326 = vmatpush1.bf16.msra.mxu0 0
    %1327 = vmatprep.subr.bf16.mxu0 0
    %1328 = vmatpush1.bf16.msra.mxu0 0
    %1329 = vmatprep.subr.bf16.mxu0 0
    %1330 = vmatpush1.bf16.msra.mxu0 0
    %1331 = vmatprep.subr.bf16.mxu0 0
    %1332 = vmatpush1.bf16.msra.mxu0 0
    %1333 = vmatprep.subr.bf16.mxu0 0
    %1334 = vmatpush1.bf16.msra.mxu0 0
    %1335 = vmatprep.subr.bf16.mxu0 0
    %1336 = vmatpush1.bf16.msra.mxu0 0
    %1337 = vmatprep.subr.bf16.mxu0 0
    %1338 = vmatpush1.bf16.msra.mxu0 0
    %1339 = vmatprep.mubr.bf16.mxu0 0
    %1340 = vmatmul.mubr.bf16.gmra.mrb[0].mxu0 %v1114
    %v1341 = vpop.f32.mrb[0].mxu0
    %v1342 = vadd.f32 0.0, %v1341
    %v1343 = vpop.f32.mrb[0].mxu0
    %v1344 = vadd.f32 0.0, %v1343
    %v1345 = vpop.f32.mrb[0].mxu0
    %v1346 = vpop.f32.mrb[0].mxu0
    %1347 = vdwg.mxu0
    %1348 = vmatprep.subr.bf16.mxu0 %v1246
    %1349 = vmatpush1.bf16.msra.mxu0 %v1245
    %1350 = vmatprep.subr.bf16.mxu0 %v1250
    %1351 = vmatpush1.bf16.msra.mxu0 %v1249
    %1352 = vmatprep.subr.bf16.mxu0 %v1254
    %1353 = vmatpush1.bf16.msra.mxu0 %v1253
    %1354 = vmatprep.subr.bf16.mxu0 %v1258
    %1355 = vmatpush1.bf16.msra.mxu0 %v1257
    %1356 = vmatprep.subr.bf16.mxu0 %v1262
    %1357 = vmatpush1.bf16.msra.mxu0 %v1261
    %1358 = vmatprep.subr.bf16.mxu0 %v1266
    %1359 = vmatpush1.bf16.msra.mxu0 %v1265
    %1360 = vmatprep.subr.bf16.mxu0 %v1270
    %1361 = vmatpush1.bf16.msra.mxu0 %v1269
    %1362 = vmatprep.subr.bf16.mxu0 %v1274
    %1363 = vmatpush1.bf16.msra.mxu0 %v1273
    %1364 = vmatprep.subr.bf16.mxu0 0
    %1365 = vmatpush1.bf16.msra.mxu0 0
    %1366 = vmatprep.subr.bf16.mxu0 0
    %1367 = vmatpush1.bf16.msra.mxu0 0
    %1368 = vmatprep.subr.bf16.mxu0 0
    %1369 = vmatpush1.bf16.msra.mxu0 0
    %1370 = vmatprep.subr.bf16.mxu0 0
    %1371 = vmatpush1.bf16.msra.mxu0 0
    %1372 = vmatprep.subr.bf16.mxu0 0
    %1373 = vmatpush1.bf16.msra.mxu0 0
    %1374 = vmatprep.subr.bf16.mxu0 0
    %1375 = vmatpush1.bf16.msra.mxu0 0
    %1376 = vmatprep.subr.bf16.mxu0 0
    %1377 = vmatpush1.bf16.msra.mxu0 0
    %1378 = vmatprep.subr.bf16.mxu0 0
    %1379 = vmatpush1.bf16.msra.mxu0 0
    %1380 = vmatprep.mubr.bf16.mxu0 0
    %1381 = vmatmul.mubr.bf16.gmra.mrb[0].mxu0 %v1114
    %v1382 = vpop.f32.mrb[0].mxu0
    %v1383 = vadd.f32 0.0, %v1382
    %v1384 = vpop.f32.mrb[0].mxu0
    %v1385 = vadd.f32 0.0, %v1384
    %v1386 = vpop.f32.mrb[0].mxu0
    %v1387 = vpop.f32.mrb[0].mxu0
    %1388 = vdwg.mxu0
    %v1389 = vadd.f32 %v1109, %v1342
    %v1390 = vadd.f32 %v1110, %v1344
    %v1391 = vadd.f32 %v1111, %v1383
    %v1392 = vadd.f32 %v1112, %v1385
    %v1393 = vmul.f32 %v1389, 0.5
    %v1394 = vtanh.pop %v1393
    %v1395 = vmul.f32 %v1394, 0.5
    %v1396 = vadd.f32 %v1395, 0.5
    %v1397 = vmul.f32 %v1390, 0.5
    %v1398 = vtanh.pop %v1397
    %v1399 = vmul.f32 %v1398, 0.5
    %v1400 = vadd.f32 %v1399, 0.5
    %v1401 = vtanh.pop %v1391
    %v1402 = vmul.f32 %v1392, 0.5
    %v1403 = vtanh.pop %v1402
    %v1404 = vmul.f32 %v1403, 0.5
    %v1405 = vadd.f32 %v1404, 0.5
    %v1406 = vld [vmem:[#allocation3] sm:$0xff]
    %v1407 = vmul.f32 %v1400, %v1406
    %v1408 = vmul.f32 %v1396, %v1401
    %v1409 = vadd.f32 %v1407, %v1408
    %1410 = vst [vmem:[#allocation3] sm:$0xff] %v1409
    %v1411 = vtanh.pop %v1409
    %v1412 = vmul.f32 %v1405, %v1411
    %1413 = vst [vmem:[#allocation2] sm:$0xff] %v1412
    %s1414 = smul.u32 3, 4
    %s1415 = smul.addr %s1414, 8
    %s1416 = scalar_lea.vmem [#allocation4], %s1415
    %v1417 = vld [vmem:[%s1416] sm:$0xff]
    %v1418 = vld [vmem:[%s1416 + $0x8] sm:$0xff]
    %v1419 = vld [vmem:[%s1416 + $0x10] sm:$0xff]
    %v1420 = vld [vmem:[%s1416 + $0x18] sm:$0xff]
    %v1421 = vld [vmem:[#allocation2] sm:$0xff]
    %v1422 = vpack.c.bf16 %v1421, %v1421
    %v1423 = vld [vmem:[#allocation7] sm:$0xff]
    %v1424 = vld [vmem:[#allocation7 + $0x8] sm:$0xff]
    %v1425 = vld [vmem:[#allocation7 + $0x10] sm:$0xff]
    %v1426 = vld [vmem:[#allocation7 + $0x18] sm:$0xff]
    %v1427 = vld [vmem:[#allocation7 + $0x20] sm:$0xff]
    %v1428 = vld [vmem:[#allocation7 + $0x28] sm:$0xff]
    %v1429 = vld [vmem:[#allocation7 + $0x30] sm:$0xff]
    %v1430 = vld [vmem:[#allocation7 + $0x38] sm:$0xff]
    %v1431 = vld [vmem:[#allocation7 + $0x40] sm:$0xff]
    %v1432 = vld [vmem:[#allocation7 + $0x48] sm:$0xff]
    %v1433 = vld [vmem:[#allocation7 + $0x50] sm:$0xff]
    %v1434 = vld [vmem:[#allocation7 + $0x58] sm:$0xff]
    %v1435 = vld [vmem:[#allocation7 + $0x60] sm:$0xff]
    %v1436 = vld [vmem:[#allocation7 + $0x68] sm:$0xff]
    %v1437 = vld [vmem:[#allocation7 + $0x70] sm:$0xff]
    %v1438 = vld [vmem:[#allocation7 + $0x78] sm:$0xff]
    %v1439 = vld [vmem:[#allocation7 + $0x80] sm:$0xff]
    %v1440 = vld [vmem:[#allocation7 + $0x88] sm:$0xff]
    %v1441 = vld [vmem:[#allocation7 + $0x90] sm:$0xff]
    %v1442 = vld [vmem:[#allocation7 + $0x98] sm:$0xff]
    %v1443 = vld [vmem:[#allocation7 + $0xa0] sm:$0xff]
    %v1444 = vld [vmem:[#allocation7 + $0xa8] sm:$0xff]
    %v1445 = vld [vmem:[#allocation7 + $0xb0] sm:$0xff]
    %v1446 = vld [vmem:[#allocation7 + $0xb8] sm:$0xff]
    %v1447 = vld [vmem:[#allocation7 + $0xc0] sm:$0xff]
    %v1448 = vld [vmem:[#allocation7 + $0xc8] sm:$0xff]
    %v1449 = vld [vmem:[#allocation7 + $0xd0] sm:$0xff]
    %v1450 = vld [vmem:[#allocation7 + $0xd8] sm:$0xff]
    %v1451 = vld [vmem:[#allocation7 + $0xe0] sm:$0xff]
    %v1452 = vld [vmem:[#allocation7 + $0xe8] sm:$0xff]
    %v1453 = vld [vmem:[#allocation7 + $0xf0] sm:$0xff]
    %v1454 = vld [vmem:[#allocation7 + $0xf8] sm:$0xff]
    %v1487 = vunpack.c.l.b16 %v1423
    %v1488 = vunpack.c.h.b16 %v1423
    %v1489 = vunpack.c.l.b16 %v1424
    %v1490 = vunpack.c.h.b16 %v1424
    %v1491 = vunpack.c.l.b16 %v1425
    %v1492 = vunpack.c.h.b16 %v1425
    %v1493 = vunpack.c.l.b16 %v1426
    %v1494 = vunpack.c.h.b16 %v1426
    %v1495 = vunpack.c.l.b16 %v1427
    %v1496 = vunpack.c.h.b16 %v1427
    %v1497 = vunpack.c.l.b16 %v1428
    %v1498 = vunpack.c.h.b16 %v1428
    %v1499 = vunpack.c.l.b16 %v1429
    %v1500 = vunpack.c.h.b16 %v1429
    %v1501 = vunpack.c.l.b16 %v1430
    %v1502 = vunpack.c.h.b16 %v1430
    %v1503 = vunpack.c.l.b16 %v1431
    %v1504 = vunpack.c.h.b16 %v1431
    %v1505 = vunpack.c.l.b16 %v1432
    %v1506 = vunpack.c.h.b16 %v1432
    %v1507 = vunpack.c.l.b16 %v1433
    %v1508 = vunpack.c.h.b16 %v1433
    %v1509 = vunpack.c.l.b16 %v1434
    %v1510 = vunpack.c.h.b16 %v1434
    %v1511 = vunpack.c.l.b16 %v1435
    %v1512 = vunpack.c.h.b16 %v1435
    %v1513 = vunpack.c.l.b16 %v1436
    %v1514 = vunpack.c.h.b16 %v1436
    %v1515 = vunpack.c.l.b16 %v1437
    %v1516 = vunpack.c.h.b16 %v1437
    %v1517 = vunpack.c.l.b16 %v1438
    %v1518 = vunpack.c.h.b16 %v1438
    %v1519 = vunpack.c.l.b16 %v1439
    %v1520 = vunpack.c.h.b16 %v1439
    %v1521 = vunpack.c.l.b16 %v1440
    %v1522 = vunpack.c.h.b16 %v1440
    %v1523 = vunpack.c.l.b16 %v1441
    %v1524 = vunpack.c.h.b16 %v1441
    %v1525 = vunpack.c.l.b16 %v1442
    %v1526 = vunpack.c.h.b16 %v1442
    %v1527 = vunpack.c.l.b16 %v1443
    %v1528 = vunpack.c.h.b16 %v1443
    %v1529 = vunpack.c.l.b16 %v1444
    %v1530 = vunpack.c.h.b16 %v1444
    %v1531 = vunpack.c.l.b16 %v1445
    %v1532 = vunpack.c.h.b16 %v1445
    %v1533 = vunpack.c.l.b16 %v1446
    %v1534 = vunpack.c.h.b16 %v1446
    %v1535 = vunpack.c.l.b16 %v1447
    %v1536 = vunpack.c.h.b16 %v1447
    %v1537 = vunpack.c.l.b16 %v1448
    %v1538 = vunpack.c.h.b16 %v1448
    %v1539 = vunpack.c.l.b16 %v1449
    %v1540 = vunpack.c.h.b16 %v1449
    %v1541 = vunpack.c.l.b16 %v1450
    %v1542 = vunpack.c.h.b16 %v1450
    %v1543 = vunpack.c.l.b16 %v1451
    %v1544 = vunpack.c.h.b16 %v1451
    %v1545 = vunpack.c.l.b16 %v1452
    %v1546 = vunpack.c.h.b16 %v1452
    %v1547 = vunpack.c.l.b16 %v1453
    %v1548 = vunpack.c.h.b16 %v1453
    %v1549 = vunpack.c.l.b16 %v1454
    %v1550 = vunpack.c.h.b16 %v1454
    %v1551 = vpack.c.b16 %v1491, %v1487
    %v1552 = vpack.c.b16 %v1492, %v1488
    %v1553 = vpack.c.b16 %v1493, %v1489
    %v1554 = vpack.c.b16 %v1494, %v1490
    %v1555 = vpack.c.b16 %v1499, %v1495
    %v1556 = vpack.c.b16 %v1500, %v1496
    %v1557 = vpack.c.b16 %v1501, %v1497
    %v1558 = vpack.c.b16 %v1502, %v1498
    %v1559 = vpack.c.b16 %v1507, %v1503
    %v1560 = vpack.c.b16 %v1508, %v1504
    %v1561 = vpack.c.b16 %v1509, %v1505
    %v1562 = vpack.c.b16 %v1510, %v1506
    %v1563 = vpack.c.b16 %v1515, %v1511
    %v1564 = vpack.c.b16 %v1516, %v1512
    %v1565 = vpack.c.b16 %v1517, %v1513
    %v1566 = vpack.c.b16 %v1518, %v1514
    %v1567 = vpack.c.b16 %v1523, %v1519
    %v1568 = vpack.c.b16 %v1524, %v1520
    %v1569 = vpack.c.b16 %v1525, %v1521
    %v1570 = vpack.c.b16 %v1526, %v1522
    %v1571 = vpack.c.b16 %v1531, %v1527
    %v1572 = vpack.c.b16 %v1532, %v1528
    %v1573 = vpack.c.b16 %v1533, %v1529
    %v1574 = vpack.c.b16 %v1534, %v1530
    %v1575 = vpack.c.b16 %v1539, %v1535
    %v1576 = vpack.c.b16 %v1540, %v1536
    %v1577 = vpack.c.b16 %v1541, %v1537
    %v1578 = vpack.c.b16 %v1542, %v1538
    %v1579 = vpack.c.b16 %v1547, %v1543
    %v1580 = vpack.c.b16 %v1548, %v1544
    %v1581 = vpack.c.b16 %v1549, %v1545
    %v1582 = vpack.c.b16 %v1550, %v1546
    %1615 = vmatprep.subr.bf16.mxu0 %v1552
    %1616 = vmatpush1.bf16.msra.mxu0 %v1551
    %1617 = vmatprep.subr.bf16.mxu0 %v1556
    %1618 = vmatpush1.bf16.msra.mxu0 %v1555
    %1619 = vmatprep.subr.bf16.mxu0 %v1560
    %1620 = vmatpush1.bf16.msra.mxu0 %v1559
    %1621 = vmatprep.subr.bf16.mxu0 %v1564
    %1622 = vmatpush1.bf16.msra.mxu0 %v1563
    %1623 = vmatprep.subr.bf16.mxu0 %v1568
    %1624 = vmatpush1.bf16.msra.mxu0 %v1567
    %1625 = vmatprep.subr.bf16.mxu0 %v1572
    %1626 = vmatpush1.bf16.msra.mxu0 %v1571
    %1627 = vmatprep.subr.bf16.mxu0 %v1576
    %1628 = vmatpush1.bf16.msra.mxu0 %v1575
    %1629 = vmatprep.subr.bf16.mxu0 %v1580
    %1630 = vmatpush1.bf16.msra.mxu0 %v1579
    %1631 = vmatprep.subr.bf16.mxu0 0
    %1632 = vmatpush1.bf16.msra.mxu0 0
    %1633 = vmatprep.subr.bf16.mxu0 0
    %1634 = vmatpush1.bf16.msra.mxu0 0
    %1635 = vmatprep.subr.bf16.mxu0 0
    %1636 = vmatpush1.bf16.msra.mxu0 0
    %1637 = vmatprep.subr.bf16.mxu0 0
    %1638 = vmatpush1.bf16.msra.mxu0 0
    %1639 = vmatprep.subr.bf16.mxu0 0
    %1640 = vmatpush1.bf16.msra.mxu0 0
    %1641 = vmatprep.subr.bf16.mxu0 0
    %1642 = vmatpush1.bf16.msra.mxu0 0
    %1643 = vmatprep.subr.bf16.mxu0 0
    %1644 = vmatpush1.bf16.msra.mxu0 0
    %1645 = vmatprep.subr.bf16.mxu0 0
    %1646 = vmatpush1.bf16.msra.mxu0 0
    %1647 = vmatprep.mubr.bf16.mxu0 0
    %1648 = vmatmul.mubr.bf16.gmra.mrb[0].mxu0 %v1422
    %v1649 = vpop.f32.mrb[0].mxu0
    %v1650 = vadd.f32 0.0, %v1649
    %v1651 = vpop.f32.mrb[0].mxu0
    %v1652 = vadd.f32 0.0, %v1651
    %v1653 = vpop.f32.mrb[0].mxu0
    %v1654 = vpop.f32.mrb[0].mxu0
    %1655 = vdwg.mxu0
    %1656 = vmatprep.subr.bf16.mxu0 %v1554
    %1657 = vmatpush1.bf16.msra.mxu0 %v1553
    %1658 = vmatprep.subr.bf16.mxu0 %v1558
    %1659 = vmatpush1.bf16.msra.mxu0 %v1557
    %1660 = vmatprep.subr.bf16.mxu0 %v1562
    %1661 = vmatpush1.bf16.msra.mxu0 %v1561
    %1662 = vmatprep.subr.bf16.mxu0 %v1566
    %1663 = vmatpush1.bf16.msra.mxu0 %v1565
    %1664 = vmatprep.subr.bf16.mxu0 %v1570
    %1665 = vmatpush1.bf16.msra.mxu0 %v1569
    %1666 = vmatprep.subr.bf16.mxu0 %v1574
    %1667 = vmatpush1.bf16.msra.mxu0 %v1573
    %1668 = vmatprep.subr.bf16.mxu0 %v1578
    %1669 = vmatpush1.bf16.msra.mxu0 %v1577
    %1670 = vmatprep.subr.bf16.mxu0 %v1582
    %1671 = vmatpush1.bf16.msra.mxu0 %v1581
    %1672 = vmatprep.subr.bf16.mxu0 0
    %1673 = vmatpush1.bf16.msra.mxu0 0
    %1674 = vmatprep.subr.bf16.mxu0 0
    %1675 = vmatpush1.bf16.msra.mxu0 0
    %1676 = vmatprep.subr.bf16.mxu0 0
    %1677 = vmatpush1.bf16.msra.mxu0 0
    %1678 = vmatprep.subr.bf16.mxu0 0
    %1679 = vmatpush1.bf16.msra.mxu0 0
    %1680 = vmatprep.subr.bf16.mxu0 0
    %1681 = vmatpush1.bf16.msra.mxu0 0
    %1682 = vmatprep.subr.bf16.mxu0 0
    %1683 = vmatpush1.bf16.msra.mxu0 0
    %1684 = vmatprep.subr.bf16.mxu0 0
    %1685 = vmatpush1.bf16.msra.mxu0 0
    %1686 = vmatprep.subr.bf16.mxu0 0
    %1687 = vmatpush1.bf16.msra.mxu0 0
    %1688 = vmatprep.mubr.bf16.mxu0 0
    %1689 = vmatmul.mubr.bf16.gmra.mrb[0].mxu0 %v1422
    %v1690 = vpop.f32.mrb[0].mxu0
    %v1691 = vadd.f32 0.0, %v1690
    %v1692 = vpop.f32.mrb[0].mxu0
    %v1693 = vadd.f32 0.0, %v1692
    %v1694 = vpop.f32.mrb[0].mxu0
    %v1695 = vpop.f32.mrb[0].mxu0
    %1696 = vdwg.mxu0
    %v1697 = vadd.f32 %v1417, %v1650
    %v1698 = vadd.f32 %v1418, %v1652
    %v1699 = vadd.f32 %v1419, %v1691
    %v1700 = vadd.f32 %v1420, %v1693
    %v1701 = vmul.f32 %v1697, 0.5
    %v1702 = vtanh.pop %v1701
    %v1703 = vmul.f32 %v1702, 0.5
    %v1704 = vadd.f32 %v1703, 0.5
    %v1705 = vmul.f32 %v1698, 0.5
    %v1706 = vtanh.pop %v1705
    %v1707 = vmul.f32 %v1706, 0.5
    %v1708 = vadd.f32 %v1707, 0.5
    %v1709 = vtanh.pop %v1699
    %v1710 = vmul.f32 %v1700, 0.5
    %v1711 = vtanh.pop %v1710
    %v1712 = vmul.f32 %v1711, 0.5
    %v1713 = vadd.f32 %v1712, 0.5
    %v1714 = vld [vmem:[#allocation3] sm:$0xff]
    %v1715 = vmul.f32 %v1708, %v1714
    %v1716 = vmul.f32 %v1704, %v1709
    %v1717 = vadd.f32 %v1715, %v1716
    %1718 = vst [vmem:[#allocation3] sm:$0xff] %v1717
    %v1719 = vtanh.pop %v1717
    %v1720 = vmul.f32 %v1713, %v1719
    %1721 = vst [vmem:[#allocation2] sm:$0xff] %v1720
    %s1722 = smul.u32 4, 4
    %s1723 = smul.addr %s1722, 8
    %s1724 = scalar_lea.vmem [#allocation4], %s1723
    %v1725 = vld [vmem:[%s1724] sm:$0xff]
    %v1726 = vld [vmem:[%s1724 + $0x8] sm:$0xff]
    %v1727 = vld [vmem:[%s1724 + $0x10] sm:$0xff]
    %v1728 = vld [vmem:[%s1724 + $0x18] sm:$0xff]
    %v1729 = vld [vmem:[#allocation2] sm:$0xff]
    %v1730 = vpack.c.bf16 %v1729, %v1729
    %v1731 = vld [vmem:[#allocation7] sm:$0xff]
    %v1732 = vld [vmem:[#allocation7 + $0x8] sm:$0xff]
    %v1733 = vld [vmem:[#allocation7 + $0x10] sm:$0xff]
    %v1734 = vld [vmem:[#allocation7 + $0x18] sm:$0xff]
    %v1735 = vld [vmem:[#allocation7 + $0x20] sm:$0xff]
    %v1736 = vld [vmem:[#allocation7 + $0x28] sm:$0xff]
    %v1737 = vld [vmem:[#allocation7 + $0x30] sm:$0xff]
    %v1738 = vld [vmem:[#allocation7 + $0x38] sm:$0xff]
    %v1739 = vld [vmem:[#allocation7 + $0x40] sm:$0xff]
    %v1740 = vld [vmem:[#allocation7 + $0x48] sm:$0xff]
    %v1741 = vld [vmem:[#allocation7 + $0x50] sm:$0xff]
    %v1742 = vld [vmem:[#allocation7 + $0x58] sm:$0xff]
    %v1743 = vld [vmem:[#allocation7 + $0x60] sm:$0xff]
    %v1744 = vld [vmem:[#allocation7 + $0x68] sm:$0xff]
    %v1745 = vld [vmem:[#allocation7 + $0x70] sm:$0xff]
    %v1746 = vld [vmem:[#allocation7 + $0x78] sm:$0xff]
    %v1747 = vld [vmem:[#allocation7 + $0x80] sm:$0xff]
    %v1748 = vld [vmem:[#allocation7 + $0x88] sm:$0xff]
    %v1749 = vld [vmem:[#allocation7 + $0x90] sm:$0xff]
    %v1750 = vld [vmem:[#allocation7 + $0x98] sm:$0xff]
    %v1751 = vld [vmem:[#allocation7 + $0xa0] sm:$0xff]
    %v1752 = vld [vmem:[#allocation7 + $0xa8] sm:$0xff]
    %v1753 = vld [vmem:[#allocation7 + $0xb0] sm:$0xff]
    %v1754 = vld [vmem:[#allocation7 + $0xb8] sm:$0xff]
    %v1755 = vld [vmem:[#allocation7 + $0xc0] sm:$0xff]
    %v1756 = vld [vmem:[#allocation7 + $0xc8] sm:$0xff]
    %v1757 = vld [vmem:[#allocation7 + $0xd0] sm:$0xff]
    %v1758 = vld [vmem:[#allocation7 + $0xd8] sm:$0xff]
    %v1759 = vld [vmem:[#allocation7 + $0xe0] sm:$0xff]
    %v1760 = vld [vmem:[#allocation7 + $0xe8] sm:$0xff]
    %v1761 = vld [vmem:[#allocation7 + $0xf0] sm:$0xff]
    %v1762 = vld [vmem:[#allocation7 + $0xf8] sm:$0xff]
    %v1795 = vunpack.c.l.b16 %v1731
    %v1796 = vunpack.c.h.b16 %v1731
    %v1797 = vunpack.c.l.b16 %v1732
    %v1798 = vunpack.c.h.b16 %v1732
    %v1799 = vunpack.c.l.b16 %v1733
    %v1800 = vunpack.c.h.b16 %v1733
    %v1801 = vunpack.c.l.b16 %v1734
    %v1802 = vunpack.c.h.b16 %v1734
    %v1803 = vunpack.c.l.b16 %v1735
    %v1804 = vunpack.c.h.b16 %v1735
    %v1805 = vunpack.c.l.b16 %v1736
    %v1806 = vunpack.c.h.b16 %v1736
    %v1807 = vunpack.c.l.b16 %v1737
    %v1808 = vunpack.c.h.b16 %v1737
    %v1809 = vunpack.c.l.b16 %v1738
    %v1810 = vunpack.c.h.b16 %v1738
    %v1811 = vunpack.c.l.b16 %v1739
    %v1812 = vunpack.c.h.b16 %v1739
    %v1813 = vunpack.c.l.b16 %v1740
    %v1814 = vunpack.c.h.b16 %v1740
    %v1815 = vunpack.c.l.b16 %v1741
    %v1816 = vunpack.c.h.b16 %v1741
    %v1817 = vunpack.c.l.b16 %v1742
    %v1818 = vunpack.c.h.b16 %v1742
    %v1819 = vunpack.c.l.b16 %v1743
    %v1820 = vunpack.c.h.b16 %v1743
    %v1821 = vunpack.c.l.b16 %v1744
    %v1822 = vunpack.c.h.b16 %v1744
    %v1823 = vunpack.c.l.b16 %v1745
    %v1824 = vunpack.c.h.b16 %v1745
    %v1825 = vunpack.c.l.b16 %v1746
    %v1826 = vunpack.c.h.b16 %v1746
    %v1827 = vunpack.c.l.b16 %v1747
    %v1828 = vunpack.c.h.b16 %v1747
    %v1829 = vunpack.c.l.b16 %v1748
    %v1830 = vunpack.c.h.b16 %v1748
    %v1831 = vunpack.c.l.b16 %v1749
    %v1832 = vunpack.c.h.b16 %v1749
    %v1833 = vunpack.c.l.b16 %v1750
    %v1834 = vunpack.c.h.b16 %v1750
    %v1835 = vunpack.c.l.b16 %v1751
    %v1836 = vunpack.c.h.b16 %v1751
    %v1837 = vunpack.c.l.b16 %v1752
    %v1838 = vunpack.c.h.b16 %v1752
    %v1839 = vunpack.c.l.b16 %v1753
    %v1840 = vunpack.c.h.b16 %v1753
    %v1841 = vunpack.c.l.b16 %v1754
    %v1842 = vunpack.c.h.b16 %v1754
    %v1843 = vunpack.c.l.b16 %v1755
    %v1844 = vunpack.c.h.b16 %v1755
    %v1845 = vunpack.c.l.b16 %v1756
    %v1846 = vunpack.c.h.b16 %v1756
    %v1847 = vunpack.c.l.b16 %v1757
    %v1848 = vunpack.c.h.b16 %v1757
    %v1849 = vunpack.c.l.b16 %v1758
    %v1850 = vunpack.c.h.b16 %v1758
    %v1851 = vunpack.c.l.b16 %v1759
    %v1852 = vunpack.c.h.b16 %v1759
    %v1853 = vunpack.c.l.b16 %v1760
    %v1854 = vunpack.c.h.b16 %v1760
    %v1855 = vunpack.c.l.b16 %v1761
    %v1856 = vunpack.c.h.b16 %v1761
    %v1857 = vunpack.c.l.b16 %v1762
    %v1858 = vunpack.c.h.b16 %v1762
    %v1859 = vpack.c.b16 %v1799, %v1795
    %v1860 = vpack.c.b16 %v1800, %v1796
    %v1861 = vpack.c.b16 %v1801, %v1797
    %v1862 = vpack.c.b16 %v1802, %v1798
    %v1863 = vpack.c.b16 %v1807, %v1803
    %v1864 = vpack.c.b16 %v1808, %v1804
    %v1865 = vpack.c.b16 %v1809, %v1805
    %v1866 = vpack.c.b16 %v1810, %v1806
    %v1867 = vpack.c.b16 %v1815, %v1811
    %v1868 = vpack.c.b16 %v1816, %v1812
    %v1869 = vpack.c.b16 %v1817, %v1813
    %v1870 = vpack.c.b16 %v1818, %v1814
    %v1871 = vpack.c.b16 %v1823, %v1819
    %v1872 = vpack.c.b16 %v1824, %v1820
    %v1873 = vpack.c.b16 %v1825, %v1821
    %v1874 = vpack.c.b16 %v1826, %v1822
    %v1875 = vpack.c.b16 %v1831, %v1827
    %v1876 = vpack.c.b16 %v1832, %v1828
    %v1877 = vpack.c.b16 %v1833, %v1829
    %v1878 = vpack.c.b16 %v1834, %v1830
    %v1879 = vpack.c.b16 %v1839, %v1835
    %v1880 = vpack.c.b16 %v1840, %v1836
    %v1881 = vpack.c.b16 %v1841, %v1837
    %v1882 = vpack.c.b16 %v1842, %v1838
    %v1883 = vpack.c.b16 %v1847, %v1843
    %v1884 = vpack.c.b16 %v1848, %v1844
    %v1885 = vpack.c.b16 %v1849, %v1845
    %v1886 = vpack.c.b16 %v1850, %v1846
    %v1887 = vpack.c.b16 %v1855, %v1851
    %v1888 = vpack.c.b16 %v1856, %v1852
    %v1889 = vpack.c.b16 %v1857, %v1853
    %v1890 = vpack.c.b16 %v1858, %v1854
    %1923 = vmatprep.subr.bf16.mxu0 %v1860
    %1924 = vmatpush1.bf16.msra.mxu0 %v1859
    %1925 = vmatprep.subr.bf16.mxu0 %v1864
    %1926 = vmatpush1.bf16.msra.mxu0 %v1863
    %1927 = vmatprep.subr.bf16.mxu0 %v1868
    %1928 = vmatpush1.bf16.msra.mxu0 %v1867
    %1929 = vmatprep.subr.bf16.mxu0 %v1872
    %1930 = vmatpush1.bf16.msra.mxu0 %v1871
    %1931 = vmatprep.subr.bf16.mxu0 %v1876
    %1932 = vmatpush1.bf16.msra.mxu0 %v1875
    %1933 = vmatprep.subr.bf16.mxu0 %v1880
    %1934 = vmatpush1.bf16.msra.mxu0 %v1879
    %1935 = vmatprep.subr.bf16.mxu0 %v1884
    %1936 = vmatpush1.bf16.msra.mxu0 %v1883
    %1937 = vmatprep.subr.bf16.mxu0 %v1888
    %1938 = vmatpush1.bf16.msra.mxu0 %v1887
    %1939 = vmatprep.subr.bf16.mxu0 0
    %1940 = vmatpush1.bf16.msra.mxu0 0
    %1941 = vmatprep.subr.bf16.mxu0 0
    %1942 = vmatpush1.bf16.msra.mxu0 0
    %1943 = vmatprep.subr.bf16.mxu0 0
    %1944 = vmatpush1.bf16.msra.mxu0 0
    %1945 = vmatprep.subr.bf16.mxu0 0
    %1946 = vmatpush1.bf16.msra.mxu0 0
    %1947 = vmatprep.subr.bf16.mxu0 0
    %1948 = vmatpush1.bf16.msra.mxu0 0
    %1949 = vmatprep.subr.bf16.mxu0 0
    %1950 = vmatpush1.bf16.msra.mxu0 0
    %1951 = vmatprep.subr.bf16.mxu0 0
    %1952 = vmatpush1.bf16.msra.mxu0 0
    %1953 = vmatprep.subr.bf16.mxu0 0
    %1954 = vmatpush1.bf16.msra.mxu0 0
    %1955 = vmatprep.mubr.bf16.mxu0 0
    %1956 = vmatmul.mubr.bf16.gmra.mrb[0].mxu0 %v1730
    %v1957 = vpop.f32.mrb[0].mxu0
    %v1958 = vadd.f32 0.0, %v1957
    %v1959 = vpop.f32.mrb[0].mxu0
    %v1960 = vadd.f32 0.0, %v1959
    %v1961 = vpop.f32.mrb[0].mxu0
    %v1962 = vpop.f32.mrb[0].mxu0
    %1963 = vdwg.mxu0
    %1964 = vmatprep.subr.bf16.mxu0 %v1862
    %1965 = vmatpush1.bf16.msra.mxu0 %v1861
    %1966 = vmatprep.subr.bf16.mxu0 %v1866
    %1967 = vmatpush1.bf16.msra.mxu0 %v1865
    %1968 = vmatprep.subr.bf16.mxu0 %v1870
    %1969 = vmatpush1.bf16.msra.mxu0 %v1869
    %1970 = vmatprep.subr.bf16.mxu0 %v1874
    %1971 = vmatpush1.bf16.msra.mxu0 %v1873
    %1972 = vmatprep.subr.bf16.mxu0 %v1878
    %1973 = vmatpush1.bf16.msra.mxu0 %v1877
    %1974 = vmatprep.subr.bf16.mxu0 %v1882
    %1975 = vmatpush1.bf16.msra.mxu0 %v1881
    %1976 = vmatprep.subr.bf16.mxu0 %v1886
    %1977 = vmatpush1.bf16.msra.mxu0 %v1885
    %1978 = vmatprep.subr.bf16.mxu0 %v1890
    %1979 = vmatpush1.bf16.msra.mxu0 %v1889
    %1980 = vmatprep.subr.bf16.mxu0 0
    %1981 = vmatpush1.bf16.msra.mxu0 0
    %1982 = vmatprep.subr.bf16.mxu0 0
    %1983 = vmatpush1.bf16.msra.mxu0 0
    %1984 = vmatprep.subr.bf16.mxu0 0
    %1985 = vmatpush1.bf16.msra.mxu0 0
    %1986 = vmatprep.subr.bf16.mxu0 0
    %1987 = vmatpush1.bf16.msra.mxu0 0
    %1988 = vmatprep.subr.bf16.mxu0 0
    %1989 = vmatpush1.bf16.msra.mxu0 0
    %1990 = vmatprep.subr.bf16.mxu0 0
    %1991 = vmatpush1.bf16.msra.mxu0 0
    %1992 = vmatprep.subr.bf16.mxu0 0
    %1993 = vmatpush1.bf16.msra.mxu0 0
    %1994 = vmatprep.subr.bf16.mxu0 0
    %1995 = vmatpush1.bf16.msra.mxu0 0
    %1996 = vmatprep.mubr.bf16.mxu0 0
    %1997 = vmatmul.mubr.bf16.gmra.mrb[0].mxu0 %v1730
    %v1998 = vpop.f32.mrb[0].mxu0
    %v1999 = vadd.f32 0.0, %v1998
    %v2000 = vpop.f32.mrb[0].mxu0
    %v2001 = vadd.f32 0.0, %v2000
    %v2002 = vpop.f32.mrb[0].mxu0
    %v2003 = vpop.f32.mrb[0].mxu0
    %2004 = vdwg.mxu0
    %v2005 = vadd.f32 %v1725, %v1958
    %v2006 = vadd.f32 %v1726, %v1960
    %v2007 = vadd.f32 %v1727, %v1999
    %v2008 = vadd.f32 %v1728, %v2001
    %v2009 = vmul.f32 %v2005, 0.5
    %v2010 = vtanh.pop %v2009
    %v2011 = vmul.f32 %v2010, 0.5
    %v2012 = vadd.f32 %v2011, 0.5
    %v2013 = vmul.f32 %v2006, 0.5
    %v2014 = vtanh.pop %v2013
    %v2015 = vmul.f32 %v2014, 0.5
    %v2016 = vadd.f32 %v2015, 0.5
    %v2017 = vtanh.pop %v2007
    %v2018 = vmul.f32 %v2008, 0.5
    %v2019 = vtanh.pop %v2018
    %v2020 = vmul.f32 %v2019, 0.5
    %v2021 = vadd.f32 %v2020, 0.5
    %v2022 = vld [vmem:[#allocation3] sm:$0xff]
    %v2023 = vmul.f32 %v2016, %v2022
    %v2024 = vmul.f32 %v2012, %v2017
    %v2025 = vadd.f32 %v2023, %v2024
    %2026 = vst [vmem:[#allocation3] sm:$0xff] %v2025
    %v2027 = vtanh.pop %v2025
    %v2028 = vmul.f32 %v2021, %v2027
    %2029 = vst [vmem:[#allocation2] sm:$0xff] %v2028
    %s2030 = smul.u32 5, 4
    %s2031 = smul.addr %s2030, 8
    %s2032 = scalar_lea.vmem [#allocation4], %s2031
    %v2033 = vld [vmem:[%s2032] sm:$0xff]
    %v2034 = vld [vmem:[%s2032 + $0x8] sm:$0xff]
    %v2035 = vld [vmem:[%s2032 + $0x10] sm:$0xff]
    %v2036 = vld [vmem:[%s2032 + $0x18] sm:$0xff]
    %v2037 = vld [vmem:[#allocation2] sm:$0xff]
    %v2038 = vpack.c.bf16 %v2037, %v2037
    %v2039 = vld [vmem:[#allocation7] sm:$0xff]
    %v2040 = vld [vmem:[#allocation7 + $0x8] sm:$0xff]
    %v2041 = vld [vmem:[#allocation7 + $0x10] sm:$0xff]
    %v2042 = vld [vmem:[#allocation7 + $0x18] sm:$0xff]
    %v2043 = vld [vmem:[#allocation7 + $0x20] sm:$0xff]
    %v2044 = vld [vmem:[#allocation7 + $0x28] sm:$0xff]
    %v2045 = vld [vmem:[#allocation7 + $0x30] sm:$0xff]
    %v2046 = vld [vmem:[#allocation7 + $0x38] sm:$0xff]
    %v2047 = vld [vmem:[#allocation7 + $0x40] sm:$0xff]
    %v2048 = vld [vmem:[#allocation7 + $0x48] sm:$0xff]
    %v2049 = vld [vmem:[#allocation7 + $0x50] sm:$0xff]
    %v2050 = vld [vmem:[#allocation7 + $0x58] sm:$0xff]
    %v2051 = vld [vmem:[#allocation7 + $0x60] sm:$0xff]
    %v2052 = vld [vmem:[#allocation7 + $0x68] sm:$0xff]
    %v2053 = vld [vmem:[#allocation7 + $0x70] sm:$0xff]
    %v2054 = vld [vmem:[#allocation7 + $0x78] sm:$0xff]
    %v2055 = vld [vmem:[#allocation7 + $0x80] sm:$0xff]
    %v2056 = vld [vmem:[#allocation7 + $0x88] sm:$0xff]
    %v2057 = vld [vmem:[#allocation7 + $0x90] sm:$0xff]
    %v2058 = vld [vmem:[#allocation7 + $0x98] sm:$0xff]
    %v2059 = vld [vmem:[#allocation7 + $0xa0] sm:$0xff]
    %v2060 = vld [vmem:[#allocation7 + $0xa8] sm:$0xff]
    %v2061 = vld [vmem:[#allocation7 + $0xb0] sm:$0xff]
    %v2062 = vld [vmem:[#allocation7 + $0xb8] sm:$0xff]
    %v2063 = vld [vmem:[#allocation7 + $0xc0] sm:$0xff]
    %v2064 = vld [vmem:[#allocation7 + $0xc8] sm:$0xff]
    %v2065 = vld [vmem:[#allocation7 + $0xd0] sm:$0xff]
    %v2066 = vld [vmem:[#allocation7 + $0xd8] sm:$0xff]
    %v2067 = vld [vmem:[#allocation7 + $0xe0] sm:$0xff]
    %v2068 = vld [vmem:[#allocation7 + $0xe8] sm:$0xff]
    %v2069 = vld [vmem:[#allocation7 + $0xf0] sm:$0xff]
    %v2070 = vld [vmem:[#allocation7 + $0xf8] sm:$0xff]
    %v2103 = vunpack.c.l.b16 %v2039
    %v2104 = vunpack.c.h.b16 %v2039
    %v2105 = vunpack.c.l.b16 %v2040
    %v2106 = vunpack.c.h.b16 %v2040
    %v2107 = vunpack.c.l.b16 %v2041
    %v2108 = vunpack.c.h.b16 %v2041
    %v2109 = vunpack.c.l.b16 %v2042
    %v2110 = vunpack.c.h.b16 %v2042
    %v2111 = vunpack.c.l.b16 %v2043
    %v2112 = vunpack.c.h.b16 %v2043
    %v2113 = vunpack.c.l.b16 %v2044
    %v2114 = vunpack.c.h.b16 %v2044
    %v2115 = vunpack.c.l.b16 %v2045
    %v2116 = vunpack.c.h.b16 %v2045
    %v2117 = vunpack.c.l.b16 %v2046
    %v2118 = vunpack.c.h.b16 %v2046
    %v2119 = vunpack.c.l.b16 %v2047
    %v2120 = vunpack.c.h.b16 %v2047
    %v2121 = vunpack.c.l.b16 %v2048
    %v2122 = vunpack.c.h.b16 %v2048
    %v2123 = vunpack.c.l.b16 %v2049
    %v2124 = vunpack.c.h.b16 %v2049
    %v2125 = vunpack.c.l.b16 %v2050
    %v2126 = vunpack.c.h.b16 %v2050
    %v2127 = vunpack.c.l.b16 %v2051
    %v2128 = vunpack.c.h.b16 %v2051
    %v2129 = vunpack.c.l.b16 %v2052
    %v2130 = vunpack.c.h.b16 %v2052
    %v2131 = vunpack.c.l.b16 %v2053
    %v2132 = vunpack.c.h.b16 %v2053
    %v2133 = vunpack.c.l.b16 %v2054
    %v2134 = vunpack.c.h.b16 %v2054
    %v2135 = vunpack.c.l.b16 %v2055
    %v2136 = vunpack.c.h.b16 %v2055
    %v2137 = vunpack.c.l.b16 %v2056
    %v2138 = vunpack.c.h.b16 %v2056
    %v2139 = vunpack.c.l.b16 %v2057
    %v2140 = vunpack.c.h.b16 %v2057
    %v2141 = vunpack.c.l.b16 %v2058
    %v2142 = vunpack.c.h.b16 %v2058
    %v2143 = vunpack.c.l.b16 %v2059
    %v2144 = vunpack.c.h.b16 %v2059
    %v2145 = vunpack.c.l.b16 %v2060
    %v2146 = vunpack.c.h.b16 %v2060
    %v2147 = vunpack.c.l.b16 %v2061
    %v2148 = vunpack.c.h.b16 %v2061
    %v2149 = vunpack.c.l.b16 %v2062
    %v2150 = vunpack.c.h.b16 %v2062
    %v2151 = vunpack.c.l.b16 %v2063
    %v2152 = vunpack.c.h.b16 %v2063
    %v2153 = vunpack.c.l.b16 %v2064
    %v2154 = vunpack.c.h.b16 %v2064
    %v2155 = vunpack.c.l.b16 %v2065
    %v2156 = vunpack.c.h.b16 %v2065
    %v2157 = vunpack.c.l.b16 %v2066
    %v2158 = vunpack.c.h.b16 %v2066
    %v2159 = vunpack.c.l.b16 %v2067
    %v2160 = vunpack.c.h.b16 %v2067
    %v2161 = vunpack.c.l.b16 %v2068
    %v2162 = vunpack.c.h.b16 %v2068
    %v2163 = vunpack.c.l.b16 %v2069
    %v2164 = vunpack.c.h.b16 %v2069
    %v2165 = vunpack.c.l.b16 %v2070
    %v2166 = vunpack.c.h.b16 %v2070
    %v2167 = vpack.c.b16 %v2107, %v2103
    %v2168 = vpack.c.b16 %v2108, %v2104
    %v2169 = vpack.c.b16 %v2109, %v2105
    %v2170 = vpack.c.b16 %v2110, %v2106
    %v2171 = vpack.c.b16 %v2115, %v2111
    %v2172 = vpack.c.b16 %v2116, %v2112
    %v2173 = vpack.c.b16 %v2117, %v2113
    %v2174 = vpack.c.b16 %v2118, %v2114
    %v2175 = vpack.c.b16 %v2123, %v2119
    %v2176 = vpack.c.b16 %v2124, %v2120
    %v2177 = vpack.c.b16 %v2125, %v2121
    %v2178 = vpack.c.b16 %v2126, %v2122
    %v2179 = vpack.c.b16 %v2131, %v2127
    %v2180 = vpack.c.b16 %v2132, %v2128
    %v2181 = vpack.c.b16 %v2133, %v2129
    %v2182 = vpack.c.b16 %v2134, %v2130
    %v2183 = vpack.c.b16 %v2139, %v2135
    %v2184 = vpack.c.b16 %v2140, %v2136
    %v2185 = vpack.c.b16 %v2141, %v2137
    %v2186 = vpack.c.b16 %v2142, %v2138
    %v2187 = vpack.c.b16 %v2147, %v2143
    %v2188 = vpack.c.b16 %v2148, %v2144
    %v2189 = vpack.c.b16 %v2149, %v2145
    %v2190 = vpack.c.b16 %v2150, %v2146
    %v2191 = vpack.c.b16 %v2155, %v2151
    %v2192 = vpack.c.b16 %v2156, %v2152
    %v2193 = vpack.c.b16 %v2157, %v2153
    %v2194 = vpack.c.b16 %v2158, %v2154
    %v2195 = vpack.c.b16 %v2163, %v2159
    %v2196 = vpack.c.b16 %v2164, %v2160
    %v2197 = vpack.c.b16 %v2165, %v2161
    %v2198 = vpack.c.b16 %v2166, %v2162
    %2231 = vmatprep.subr.bf16.mxu0 %v2168
    %2232 = vmatpush1.bf16.msra.mxu0 %v2167
    %2233 = vmatprep.subr.bf16.mxu0 %v2172
    %2234 = vmatpush1.bf16.msra.mxu0 %v2171
    %2235 = vmatprep.subr.bf16.mxu0 %v2176
    %2236 = vmatpush1.bf16.msra.mxu0 %v2175
    %2237 = vmatprep.subr.bf16.mxu0 %v2180
    %2238 = vmatpush1.bf16.msra.mxu0 %v2179
    %2239 = vmatprep.subr.bf16.mxu0 %v2184
    %2240 = vmatpush1.bf16.msra.mxu0 %v2183
    %2241 = vmatprep.subr.bf16.mxu0 %v2188
    %2242 = vmatpush1.bf16.msra.mxu0 %v2187
    %2243 = vmatprep.subr.bf16.mxu0 %v2192
    %2244 = vmatpush1.bf16.msra.mxu0 %v2191
    %2245 = vmatprep.subr.bf16.mxu0 %v2196
    %2246 = vmatpush1.bf16.msra.mxu0 %v2195
    %2247 = vmatprep.subr.bf16.mxu0 0
    %2248 = vmatpush1.bf16.msra.mxu0 0
    %2249 = vmatprep.subr.bf16.mxu0 0
    %2250 = vmatpush1.bf16.msra.mxu0 0
    %2251 = vmatprep.subr.bf16.mxu0 0
    %2252 = vmatpush1.bf16.msra.mxu0 0
    %2253 = vmatprep.subr.bf16.mxu0 0
    %2254 = vmatpush1.bf16.msra.mxu0 0
    %2255 = vmatprep.subr.bf16.mxu0 0
    %2256 = vmatpush1.bf16.msra.mxu0 0
    %2257 = vmatprep.subr.bf16.mxu0 0
    %2258 = vmatpush1.bf16.msra.mxu0 0
    %2259 = vmatprep.subr.bf16.mxu0 0
    %2260 = vmatpush1.bf16.msra.mxu0 0
    %2261 = vmatprep.subr.bf16.mxu0 0
    %2262 = vmatpush1.bf16.msra.mxu0 0
    %2263 = vmatprep.mubr.bf16.mxu0 0
    %2264 = vmatmul.mubr.bf16.gmra.mrb[0].mxu0 %v2038
    %v2265 = vpop.f32.mrb[0].mxu0
    %v2266 = vadd.f32 0.0, %v2265
    %v2267 = vpop.f32.mrb[0].mxu0
    %v2268 = vadd.f32 0.0, %v2267
    %v2269 = vpop.f32.mrb[0].mxu0
    %v2270 = vpop.f32.mrb[0].mxu0
    %2271 = vdwg.mxu0
    %2272 = vmatprep.subr.bf16.mxu0 %v2170
    %2273 = vmatpush1.bf16.msra.mxu0 %v2169
    %2274 = vmatprep.subr.bf16.mxu0 %v2174
    %2275 = vmatpush1.bf16.msra.mxu0 %v2173
    %2276 = vmatprep.subr.bf16.mxu0 %v2178
    %2277 = vmatpush1.bf16.msra.mxu0 %v2177
    %2278 = vmatprep.subr.bf16.mxu0 %v2182
    %2279 = vmatpush1.bf16.msra.mxu0 %v2181
    %2280 = vmatprep.subr.bf16.mxu0 %v2186
    %2281 = vmatpush1.bf16.msra.mxu0 %v2185
    %2282 = vmatprep.subr.bf16.mxu0 %v2190
    %2283 = vmatpush1.bf16.msra.mxu0 %v2189
    %2284 = vmatprep.subr.bf16.mxu0 %v2194
    %2285 = vmatpush1.bf16.msra.mxu0 %v2193
    %2286 = vmatprep.subr.bf16.mxu0 %v2198
    %2287 = vmatpush1.bf16.msra.mxu0 %v2197
    %2288 = vmatprep.subr.bf16.mxu0 0
    %2289 = vmatpush1.bf16.msra.mxu0 0
    %2290 = vmatprep.subr.bf16.mxu0 0
    %2291 = vmatpush1.bf16.msra.mxu0 0
    %2292 = vmatprep.subr.bf16.mxu0 0
    %2293 = vmatpush1.bf16.msra.mxu0 0
    %2294 = vmatprep.subr.bf16.mxu0 0
    %2295 = vmatpush1.bf16.msra.mxu0 0
    %2296 = vmatprep.subr.bf16.mxu0 0
    %2297 = vmatpush1.bf16.msra.mxu0 0
    %2298 = vmatprep.subr.bf16.mxu0 0
    %2299 = vmatpush1.bf16.msra.mxu0 0
    %2300 = vmatprep.subr.bf16.mxu0 0
    %2301 = vmatpush1.bf16.msra.mxu0 0
    %2302 = vmatprep.subr.bf16.mxu0 0
    %2303 = vmatpush1.bf16.msra.mxu0 0
    %2304 = vmatprep.mubr.bf16.mxu0 0
    %2305 = vmatmul.mubr.bf16.gmra.mrb[0].mxu0 %v2038
    %v2306 = vpop.f32.mrb[0].mxu0
    %v2307 = vadd.f32 0.0, %v2306
    %v2308 = vpop.f32.mrb[0].mxu0
    %v2309 = vadd.f32 0.0, %v2308
    %v2310 = vpop.f32.mrb[0].mxu0
    %v2311 = vpop.f32.mrb[0].mxu0
    %2312 = vdwg.mxu0
    %v2313 = vadd.f32 %v2033, %v2266
    %v2314 = vadd.f32 %v2034, %v2268
    %v2315 = vadd.f32 %v2035, %v2307
    %v2316 = vadd.f32 %v2036, %v2309
    %v2317 = vmul.f32 %v2313, 0.5
    %v2318 = vtanh.pop %v2317
    %v2319 = vmul.f32 %v2318, 0.5
    %v2320 = vadd.f32 %v2319, 0.5
    %v2321 = vmul.f32 %v2314, 0.5
    %v2322 = vtanh.pop %v2321
    %v2323 = vmul.f32 %v2322, 0.5
    %v2324 = vadd.f32 %v2323, 0.5
    %v2325 = vtanh.pop %v2315
    %v2326 = vmul.f32 %v2316, 0.5
    %v2327 = vtanh.pop %v2326
    %v2328 = vmul.f32 %v2327, 0.5
    %v2329 = vadd.f32 %v2328, 0.5
    %v2330 = vld [vmem:[#allocation3] sm:$0xff]
    %v2331 = vmul.f32 %v2324, %v2330
    %v2332 = vmul.f32 %v2320, %v2325
    %v2333 = vadd.f32 %v2331, %v2332
    %2334 = vst [vmem:[#allocation3] sm:$0xff] %v2333
    %v2335 = vtanh.pop %v2333
    %v2336 = vmul.f32 %v2329, %v2335
    %2337 = vst [vmem:[#allocation2] sm:$0xff] %v2336
    %s2338 = smul.u32 6, 4
    %s2339 = smul.addr %s2338, 8
    %s2340 = scalar_lea.vmem [#allocation4], %s2339
    %v2341 = vld [vmem:[%s2340] sm:$0xff]
    %v2342 = vld [vmem:[%s2340 + $0x8] sm:$0xff]
    %v2343 = vld [vmem:[%s2340 + $0x10] sm:$0xff]
    %v2344 = vld [vmem:[%s2340 + $0x18] sm:$0xff]
    %v2345 = vld [vmem:[#allocation2] sm:$0xff]
    %v2346 = vpack.c.bf16 %v2345, %v2345
    %v2347 = vld [vmem:[#allocation7] sm:$0xff]
    %v2348 = vld [vmem:[#allocation7 + $0x8] sm:$0xff]
    %v2349 = vld [vmem:[#allocation7 + $0x10] sm:$0xff]
    %v2350 = vld [vmem:[#allocation7 + $0x18] sm:$0xff]
    %v2351 = vld [vmem:[#allocation7 + $0x20] sm:$0xff]
    %v2352 = vld [vmem:[#allocation7 + $0x28] sm:$0xff]
    %v2353 = vld [vmem:[#allocation7 + $0x30] sm:$0xff]
    %v2354 = vld [vmem:[#allocation7 + $0x38] sm:$0xff]
    %v2355 = vld [vmem:[#allocation7 + $0x40] sm:$0xff]
    %v2356 = vld [vmem:[#allocation7 + $0x48] sm:$0xff]
    %v2357 = vld [vmem:[#allocation7 + $0x50] sm:$0xff]
    %v2358 = vld [vmem:[#allocation7 + $0x58] sm:$0xff]
    %v2359 = vld [vmem:[#allocation7 + $0x60] sm:$0xff]
    %v2360 = vld [vmem:[#allocation7 + $0x68] sm:$0xff]
    %v2361 = vld [vmem:[#allocation7 + $0x70] sm:$0xff]
    %v2362 = vld [vmem:[#allocation7 + $0x78] sm:$0xff]
    %v2363 = vld [vmem:[#allocation7 + $0x80] sm:$0xff]
    %v2364 = vld [vmem:[#allocation7 + $0x88] sm:$0xff]
    %v2365 = vld [vmem:[#allocation7 + $0x90] sm:$0xff]
    %v2366 = vld [vmem:[#allocation7 + $0x98] sm:$0xff]
    %v2367 = vld [vmem:[#allocation7 + $0xa0] sm:$0xff]
    %v2368 = vld [vmem:[#allocation7 + $0xa8] sm:$0xff]
    %v2369 = vld [vmem:[#allocation7 + $0xb0] sm:$0xff]
    %v2370 = vld [vmem:[#allocation7 + $0xb8] sm:$0xff]
    %v2371 = vld [vmem:[#allocation7 + $0xc0] sm:$0xff]
    %v2372 = vld [vmem:[#allocation7 + $0xc8] sm:$0xff]
    %v2373 = vld [vmem:[#allocation7 + $0xd0] sm:$0xff]
    %v2374 = vld [vmem:[#allocation7 + $0xd8] sm:$0xff]
    %v2375 = vld [vmem:[#allocation7 + $0xe0] sm:$0xff]
    %v2376 = vld [vmem:[#allocation7 + $0xe8] sm:$0xff]
    %v2377 = vld [vmem:[#allocation7 + $0xf0] sm:$0xff]
    %v2378 = vld [vmem:[#allocation7 + $0xf8] sm:$0xff]
    %v2411 = vunpack.c.l.b16 %v2347
    %v2412 = vunpack.c.h.b16 %v2347
    %v2413 = vunpack.c.l.b16 %v2348
    %v2414 = vunpack.c.h.b16 %v2348
    %v2415 = vunpack.c.l.b16 %v2349
    %v2416 = vunpack.c.h.b16 %v2349
    %v2417 = vunpack.c.l.b16 %v2350
    %v2418 = vunpack.c.h.b16 %v2350
    %v2419 = vunpack.c.l.b16 %v2351
    %v2420 = vunpack.c.h.b16 %v2351
    %v2421 = vunpack.c.l.b16 %v2352
    %v2422 = vunpack.c.h.b16 %v2352
    %v2423 = vunpack.c.l.b16 %v2353
    %v2424 = vunpack.c.h.b16 %v2353
    %v2425 = vunpack.c.l.b16 %v2354
    %v2426 = vunpack.c.h.b16 %v2354
    %v2427 = vunpack.c.l.b16 %v2355
    %v2428 = vunpack.c.h.b16 %v2355
    %v2429 = vunpack.c.l.b16 %v2356
    %v2430 = vunpack.c.h.b16 %v2356
    %v2431 = vunpack.c.l.b16 %v2357
    %v2432 = vunpack.c.h.b16 %v2357
    %v2433 = vunpack.c.l.b16 %v2358
    %v2434 = vunpack.c.h.b16 %v2358
    %v2435 = vunpack.c.l.b16 %v2359
    %v2436 = vunpack.c.h.b16 %v2359
    %v2437 = vunpack.c.l.b16 %v2360
    %v2438 = vunpack.c.h.b16 %v2360
    %v2439 = vunpack.c.l.b16 %v2361
    %v2440 = vunpack.c.h.b16 %v2361
    %v2441 = vunpack.c.l.b16 %v2362
    %v2442 = vunpack.c.h.b16 %v2362
    %v2443 = vunpack.c.l.b16 %v2363
    %v2444 = vunpack.c.h.b16 %v2363
    %v2445 = vunpack.c.l.b16 %v2364
    %v2446 = vunpack.c.h.b16 %v2364
    %v2447 = vunpack.c.l.b16 %v2365
    %v2448 = vunpack.c.h.b16 %v2365
    %v2449 = vunpack.c.l.b16 %v2366
    %v2450 = vunpack.c.h.b16 %v2366
    %v2451 = vunpack.c.l.b16 %v2367
    %v2452 = vunpack.c.h.b16 %v2367
    %v2453 = vunpack.c.l.b16 %v2368
    %v2454 = vunpack.c.h.b16 %v2368
    %v2455 = vunpack.c.l.b16 %v2369
    %v2456 = vunpack.c.h.b16 %v2369
    %v2457 = vunpack.c.l.b16 %v2370
    %v2458 = vunpack.c.h.b16 %v2370
    %v2459 = vunpack.c.l.b16 %v2371
    %v2460 = vunpack.c.h.b16 %v2371
    %v2461 = vunpack.c.l.b16 %v2372
    %v2462 = vunpack.c.h.b16 %v2372
    %v2463 = vunpack.c.l.b16 %v2373
    %v2464 = vunpack.c.h.b16 %v2373
    %v2465 = vunpack.c.l.b16 %v2374
    %v2466 = vunpack.c.h.b16 %v2374
    %v2467 = vunpack.c.l.b16 %v2375
    %v2468 = vunpack.c.h.b16 %v2375
    %v2469 = vunpack.c.l.b16 %v2376
    %v2470 = vunpack.c.h.b16 %v2376
    %v2471 = vunpack.c.l.b16 %v2377
    %v2472 = vunpack.c.h.b16 %v2377
    %v2473 = vunpack.c.l.b16 %v2378
    %v2474 = vunpack.c.h.b16 %v2378
    %v2475 = vpack.c.b16 %v2415, %v2411
    %v2476 = vpack.c.b16 %v2416, %v2412
    %v2477 = vpack.c.b16 %v2417, %v2413
    %v2478 = vpack.c.b16 %v2418, %v2414
    %v2479 = vpack.c.b16 %v2423, %v2419
    %v2480 = vpack.c.b16 %v2424, %v2420
    %v2481 = vpack.c.b16 %v2425, %v2421
    %v2482 = vpack.c.b16 %v2426, %v2422
    %v2483 = vpack.c.b16 %v2431, %v2427
    %v2484 = vpack.c.b16 %v2432, %v2428
    %v2485 = vpack.c.b16 %v2433, %v2429
    %v2486 = vpack.c.b16 %v2434, %v2430
    %v2487 = vpack.c.b16 %v2439, %v2435
    %v2488 = vpack.c.b16 %v2440, %v2436
    %v2489 = vpack.c.b16 %v2441, %v2437
    %v2490 = vpack.c.b16 %v2442, %v2438
    %v2491 = vpack.c.b16 %v2447, %v2443
    %v2492 = vpack.c.b16 %v2448, %v2444
    %v2493 = vpack.c.b16 %v2449, %v2445
    %v2494 = vpack.c.b16 %v2450, %v2446
    %v2495 = vpack.c.b16 %v2455, %v2451
    %v2496 = vpack.c.b16 %v2456, %v2452
    %v2497 = vpack.c.b16 %v2457, %v2453
    %v2498 = vpack.c.b16 %v2458, %v2454
    %v2499 = vpack.c.b16 %v2463, %v2459
    %v2500 = vpack.c.b16 %v2464, %v2460
    %v2501 = vpack.c.b16 %v2465, %v2461
    %v2502 = vpack.c.b16 %v2466, %v2462
    %v2503 = vpack.c.b16 %v2471, %v2467
    %v2504 = vpack.c.b16 %v2472, %v2468
    %v2505 = vpack.c.b16 %v2473, %v2469
    %v2506 = vpack.c.b16 %v2474, %v2470
    %2539 = vmatprep.subr.bf16.mxu0 %v2476
    %2540 = vmatpush1.bf16.msra.mxu0 %v2475
    %2541 = vmatprep.subr.bf16.mxu0 %v2480
    %2542 = vmatpush1.bf16.msra.mxu0 %v2479
    %2543 = vmatprep.subr.bf16.mxu0 %v2484
    %2544 = vmatpush1.bf16.msra.mxu0 %v2483
    %2545 = vmatprep.subr.bf16.mxu0 %v2488
    %2546 = vmatpush1.bf16.msra.mxu0 %v2487
    %2547 = vmatprep.subr.bf16.mxu0 %v2492
    %2548 = vmatpush1.bf16.msra.mxu0 %v2491
    %2549 = vmatprep.subr.bf16.mxu0 %v2496
    %2550 = vmatpush1.bf16.msra.mxu0 %v2495
    %2551 = vmatprep.subr.bf16.mxu0 %v2500
    %2552 = vmatpush1.bf16.msra.mxu0 %v2499
    %2553 = vmatprep.subr.bf16.mxu0 %v2504
    %2554 = vmatpush1.bf16.msra.mxu0 %v2503
    %2555 = vmatprep.subr.bf16.mxu0 0
    %2556 = vmatpush1.bf16.msra.mxu0 0
    %2557 = vmatprep.subr.bf16.mxu0 0
    %2558 = vmatpush1.bf16.msra.mxu0 0
    %2559 = vmatprep.subr.bf16.mxu0 0
    %2560 = vmatpush1.bf16.msra.mxu0 0
    %2561 = vmatprep.subr.bf16.mxu0 0
    %2562 = vmatpush1.bf16.msra.mxu0 0
    %2563 = vmatprep.subr.bf16.mxu0 0
    %2564 = vmatpush1.bf16.msra.mxu0 0
    %2565 = vmatprep.subr.bf16.mxu0 0
    %2566 = vmatpush1.bf16.msra.mxu0 0
    %2567 = vmatprep.subr.bf16.mxu0 0
    %2568 = vmatpush1.bf16.msra.mxu0 0
    %2569 = vmatprep.subr.bf16.mxu0 0
    %2570 = vmatpush1.bf16.msra.mxu0 0
    %2571 = vmatprep.mubr.bf16.mxu0 0
    %2572 = vmatmul.mubr.bf16.gmra.mrb[0].mxu0 %v2346
    %v2573 = vpop.f32.mrb[0].mxu0
    %v2574 = vadd.f32 0.0, %v2573
    %v2575 = vpop.f32.mrb[0].mxu0
    %v2576 = vadd.f32 0.0, %v2575
    %v2577 = vpop.f32.mrb[0].mxu0
    %v2578 = vpop.f32.mrb[0].mxu0
    %2579 = vdwg.mxu0
    %2580 = vmatprep.subr.bf16.mxu0 %v2478
    %2581 = vmatpush1.bf16.msra.mxu0 %v2477
    %2582 = vmatprep.subr.bf16.mxu0 %v2482
    %2583 = vmatpush1.bf16.msra.mxu0 %v2481
    %2584 = vmatprep.subr.bf16.mxu0 %v2486
    %2585 = vmatpush1.bf16.msra.mxu0 %v2485
    %2586 = vmatprep.subr.bf16.mxu0 %v2490
    %2587 = vmatpush1.bf16.msra.mxu0 %v2489
    %2588 = vmatprep.subr.bf16.mxu0 %v2494
    %2589 = vmatpush1.bf16.msra.mxu0 %v2493
    %2590 = vmatprep.subr.bf16.mxu0 %v2498
    %2591 = vmatpush1.bf16.msra.mxu0 %v2497
    %2592 = vmatprep.subr.bf16.mxu0 %v2502
    %2593 = vmatpush1.bf16.msra.mxu0 %v2501
    %2594 = vmatprep.subr.bf16.mxu0 %v2506
    %2595 = vmatpush1.bf16.msra.mxu0 %v2505
    %2596 = vmatprep.subr.bf16.mxu0 0
    %2597 = vmatpush1.bf16.msra.mxu0 0
    %2598 = vmatprep.subr.bf16.mxu0 0
    %2599 = vmatpush1.bf16.msra.mxu0 0
    %2600 = vmatprep.subr.bf16.mxu0 0
    %2601 = vmatpush1.bf16.msra.mxu0 0
    %2602 = vmatprep.subr.bf16.mxu0 0
    %2603 = vmatpush1.bf16.msra.mxu0 0
    %2604 = vmatprep.subr.bf16.mxu0 0
    %2605 = vmatpush1.bf16.msra.mxu0 0
    %2606 = vmatprep.subr.bf16.mxu0 0
    %2607 = vmatpush1.bf16.msra.mxu0 0
    %2608 = vmatprep.subr.bf16.mxu0 0
    %2609 = vmatpush1.bf16.msra.mxu0 0
    %2610 = vmatprep.subr.bf16.mxu0 0
    %2611 = vmatpush1.bf16.msra.mxu0 0
    %2612 = vmatprep.mubr.bf16.mxu0 0
    %2613 = vmatmul.mubr.bf16.gmra.mrb[0].mxu0 %v2346
    %v2614 = vpop.f32.mrb[0].mxu0
    %v2615 = vadd.f32 0.0, %v2614
    %v2616 = vpop.f32.mrb[0].mxu0
    %v2617 = vadd.f32 0.0, %v2616
    %v2618 = vpop.f32.mrb[0].mxu0
    %v2619 = vpop.f32.mrb[0].mxu0
    %2620 = vdwg.mxu0
    %v2621 = vadd.f32 %v2341, %v2574
    %v2622 = vadd.f32 %v2342, %v2576
    %v2623 = vadd.f32 %v2343, %v2615
    %v2624 = vadd.f32 %v2344, %v2617
    %v2625 = vmul.f32 %v2621, 0.5
    %v2626 = vtanh.pop %v2625
    %v2627 = vmul.f32 %v2626, 0.5
    %v2628 = vadd.f32 %v2627, 0.5
    %v2629 = vmul.f32 %v2622, 0.5
    %v2630 = vtanh.pop %v2629
    %v2631 = vmul.f32 %v2630, 0.5
    %v2632 = vadd.f32 %v2631, 0.5
    %v2633 = vtanh.pop %v2623
    %v2634 = vmul.f32 %v2624, 0.5
    %v2635 = vtanh.pop %v2634
    %v2636 = vmul.f32 %v2635, 0.5
    %v2637 = vadd.f32 %v2636, 0.5
    %v2638 = vld [vmem:[#allocation3] sm:$0xff]
    %v2639 = vmul.f32 %v2632, %v2638
    %v2640 = vmul.f32 %v2628, %v2633
    %v2641 = vadd.f32 %v2639, %v2640
    %2642 = vst [vmem:[#allocation3] sm:$0xff] %v2641
    %v2643 = vtanh.pop %v2641
    %v2644 = vmul.f32 %v2637, %v2643
    %2645 = vst [vmem:[#allocation2] sm:$0xff] %v2644
    %s2646 = smul.u32 7, 4
    %s2647 = smul.addr %s2646, 8
    %s2648 = scalar_lea.vmem [#allocation4], %s2647
    %v2649 = vld [vmem:[%s2648] sm:$0xff]
    %v2650 = vld [vmem:[%s2648 + $0x8] sm:$0xff]
    %v2651 = vld [vmem:[%s2648 + $0x10] sm:$0xff]
    %v2652 = vld [vmem:[%s2648 + $0x18] sm:$0xff]
    %v2653 = vld [vmem:[#allocation2] sm:$0xff]
    %v2654 = vpack.c.bf16 %v2653, %v2653
    %v2655 = vld [vmem:[#allocation7] sm:$0xff]
    %v2656 = vld [vmem:[#allocation7 + $0x8] sm:$0xff]
    %v2657 = vld [vmem:[#allocation7 + $0x10] sm:$0xff]
    %v2658 = vld [vmem:[#allocation7 + $0x18] sm:$0xff]
    %v2659 = vld [vmem:[#allocation7 + $0x20] sm:$0xff]
    %v2660 = vld [vmem:[#allocation7 + $0x28] sm:$0xff]
    %v2661 = vld [vmem:[#allocation7 + $0x30] sm:$0xff]
    %v2662 = vld [vmem:[#allocation7 + $0x38] sm:$0xff]
    %v2663 = vld [vmem:[#allocation7 + $0x40] sm:$0xff]
    %v2664 = vld [vmem:[#allocation7 + $0x48] sm:$0xff]
    %v2665 = vld [vmem:[#allocation7 + $0x50] sm:$0xff]
    %v2666 = vld [vmem:[#allocation7 + $0x58] sm:$0xff]
    %v2667 = vld [vmem:[#allocation7 + $0x60] sm:$0xff]
    %v2668 = vld [vmem:[#allocation7 + $0x68] sm:$0xff]
    %v2669 = vld [vmem:[#allocation7 + $0x70] sm:$0xff]
    %v2670 = vld [vmem:[#allocation7 + $0x78] sm:$0xff]
    %v2671 = vld [vmem:[#allocation7 + $0x80] sm:$0xff]
    %v2672 = vld [vmem:[#allocation7 + $0x88] sm:$0xff]
    %v2673 = vld [vmem:[#allocation7 + $0x90] sm:$0xff]
    %v2674 = vld [vmem:[#allocation7 + $0x98] sm:$0xff]
    %v2675 = vld [vmem:[#allocation7 + $0xa0] sm:$0xff]
    %v2676 = vld [vmem:[#allocation7 + $0xa8] sm:$0xff]
    %v2677 = vld [vmem:[#allocation7 + $0xb0] sm:$0xff]
    %v2678 = vld [vmem:[#allocation7 + $0xb8] sm:$0xff]
    %v2679 = vld [vmem:[#allocation7 + $0xc0] sm:$0xff]
    %v2680 = vld [vmem:[#allocation7 + $0xc8] sm:$0xff]
    %v2681 = vld [vmem:[#allocation7 + $0xd0] sm:$0xff]
    %v2682 = vld [vmem:[#allocation7 + $0xd8] sm:$0xff]
    %v2683 = vld [vmem:[#allocation7 + $0xe0] sm:$0xff]
    %v2684 = vld [vmem:[#allocation7 + $0xe8] sm:$0xff]
    %v2685 = vld [vmem:[#allocation7 + $0xf0] sm:$0xff]
    %v2686 = vld [vmem:[#allocation7 + $0xf8] sm:$0xff]
    %v2719 = vunpack.c.l.b16 %v2655
    %v2720 = vunpack.c.h.b16 %v2655
    %v2721 = vunpack.c.l.b16 %v2656
    %v2722 = vunpack.c.h.b16 %v2656
    %v2723 = vunpack.c.l.b16 %v2657
    %v2724 = vunpack.c.h.b16 %v2657
    %v2725 = vunpack.c.l.b16 %v2658
    %v2726 = vunpack.c.h.b16 %v2658
    %v2727 = vunpack.c.l.b16 %v2659
    %v2728 = vunpack.c.h.b16 %v2659
    %v2729 = vunpack.c.l.b16 %v2660
    %v2730 = vunpack.c.h.b16 %v2660
    %v2731 = vunpack.c.l.b16 %v2661
    %v2732 = vunpack.c.h.b16 %v2661
    %v2733 = vunpack.c.l.b16 %v2662
    %v2734 = vunpack.c.h.b16 %v2662
    %v2735 = vunpack.c.l.b16 %v2663
    %v2736 = vunpack.c.h.b16 %v2663
    %v2737 = vunpack.c.l.b16 %v2664
    %v2738 = vunpack.c.h.b16 %v2664
    %v2739 = vunpack.c.l.b16 %v2665
    %v2740 = vunpack.c.h.b16 %v2665
    %v2741 = vunpack.c.l.b16 %v2666
    %v2742 = vunpack.c.h.b16 %v2666
    %v2743 = vunpack.c.l.b16 %v2667
    %v2744 = vunpack.c.h.b16 %v2667
    %v2745 = vunpack.c.l.b16 %v2668
    %v2746 = vunpack.c.h.b16 %v2668
    %v2747 = vunpack.c.l.b16 %v2669
    %v2748 = vunpack.c.h.b16 %v2669
    %v2749 = vunpack.c.l.b16 %v2670
    %v2750 = vunpack.c.h.b16 %v2670
    %v2751 = vunpack.c.l.b16 %v2671
    %v2752 = vunpack.c.h.b16 %v2671
    %v2753 = vunpack.c.l.b16 %v2672
    %v2754 = vunpack.c.h.b16 %v2672
    %v2755 = vunpack.c.l.b16 %v2673
    %v2756 = vunpack.c.h.b16 %v2673
    %v2757 = vunpack.c.l.b16 %v2674
    %v2758 = vunpack.c.h.b16 %v2674
    %v2759 = vunpack.c.l.b16 %v2675
    %v2760 = vunpack.c.h.b16 %v2675
    %v2761 = vunpack.c.l.b16 %v2676
    %v2762 = vunpack.c.h.b16 %v2676
    %v2763 = vunpack.c.l.b16 %v2677
    %v2764 = vunpack.c.h.b16 %v2677
    %v2765 = vunpack.c.l.b16 %v2678
    %v2766 = vunpack.c.h.b16 %v2678
    %v2767 = vunpack.c.l.b16 %v2679
    %v2768 = vunpack.c.h.b16 %v2679
    %v2769 = vunpack.c.l.b16 %v2680
    %v2770 = vunpack.c.h.b16 %v2680
    %v2771 = vunpack.c.l.b16 %v2681
    %v2772 = vunpack.c.h.b16 %v2681
    %v2773 = vunpack.c.l.b16 %v2682
    %v2774 = vunpack.c.h.b16 %v2682
    %v2775 = vunpack.c.l.b16 %v2683
    %v2776 = vunpack.c.h.b16 %v2683
    %v2777 = vunpack.c.l.b16 %v2684
    %v2778 = vunpack.c.h.b16 %v2684
    %v2779 = vunpack.c.l.b16 %v2685
    %v2780 = vunpack.c.h.b16 %v2685
    %v2781 = vunpack.c.l.b16 %v2686
    %v2782 = vunpack.c.h.b16 %v2686
    %v2783 = vpack.c.b16 %v2723, %v2719
    %v2784 = vpack.c.b16 %v2724, %v2720
    %v2785 = vpack.c.b16 %v2725, %v2721
    %v2786 = vpack.c.b16 %v2726, %v2722
    %v2787 = vpack.c.b16 %v2731, %v2727
    %v2788 = vpack.c.b16 %v2732, %v2728
    %v2789 = vpack.c.b16 %v2733, %v2729
    %v2790 = vpack.c.b16 %v2734, %v2730
    %v2791 = vpack.c.b16 %v2739, %v2735
    %v2792 = vpack.c.b16 %v2740, %v2736
    %v2793 = vpack.c.b16 %v2741, %v2737
    %v2794 = vpack.c.b16 %v2742, %v2738
    %v2795 = vpack.c.b16 %v2747, %v2743
    %v2796 = vpack.c.b16 %v2748, %v2744
    %v2797 = vpack.c.b16 %v2749, %v2745
    %v2798 = vpack.c.b16 %v2750, %v2746
    %v2799 = vpack.c.b16 %v2755, %v2751
    %v2800 = vpack.c.b16 %v2756, %v2752
    %v2801 = vpack.c.b16 %v2757, %v2753
    %v2802 = vpack.c.b16 %v2758, %v2754
    %v2803 = vpack.c.b16 %v2763, %v2759
    %v2804 = vpack.c.b16 %v2764, %v2760
    %v2805 = vpack.c.b16 %v2765, %v2761
    %v2806 = vpack.c.b16 %v2766, %v2762
    %v2807 = vpack.c.b16 %v2771, %v2767
    %v2808 = vpack.c.b16 %v2772, %v2768
    %v2809 = vpack.c.b16 %v2773, %v2769
    %v2810 = vpack.c.b16 %v2774, %v2770
    %v2811 = vpack.c.b16 %v2779, %v2775
    %v2812 = vpack.c.b16 %v2780, %v2776
    %v2813 = vpack.c.b16 %v2781, %v2777
    %v2814 = vpack.c.b16 %v2782, %v2778
    %2847 = vmatprep.subr.bf16.mxu0 %v2784
    %2848 = vmatpush1.bf16.msra.mxu0 %v2783
    %2849 = vmatprep.subr.bf16.mxu0 %v2788
    %2850 = vmatpush1.bf16.msra.mxu0 %v2787
    %2851 = vmatprep.subr.bf16.mxu0 %v2792
    %2852 = vmatpush1.bf16.msra.mxu0 %v2791
    %2853 = vmatprep.subr.bf16.mxu0 %v2796
    %2854 = vmatpush1.bf16.msra.mxu0 %v2795
    %2855 = vmatprep.subr.bf16.mxu0 %v2800
    %2856 = vmatpush1.bf16.msra.mxu0 %v2799
    %2857 = vmatprep.subr.bf16.mxu0 %v2804
    %2858 = vmatpush1.bf16.msra.mxu0 %v2803
    %2859 = vmatprep.subr.bf16.mxu0 %v2808
    %2860 = vmatpush1.bf16.msra.mxu0 %v2807
    %2861 = vmatprep.subr.bf16.mxu0 %v2812
    %2862 = vmatpush1.bf16.msra.mxu0 %v2811
    %2863 = vmatprep.subr.bf16.mxu0 0
    %2864 = vmatpush1.bf16.msra.mxu0 0
    %2865 = vmatprep.subr.bf16.mxu0 0
    %2866 = vmatpush1.bf16.msra.mxu0 0
    %2867 = vmatprep.subr.bf16.mxu0 0
    %2868 = vmatpush1.bf16.msra.mxu0 0
    %2869 = vmatprep.subr.bf16.mxu0 0
    %2870 = vmatpush1.bf16.msra.mxu0 0
    %2871 = vmatprep.subr.bf16.mxu0 0
    %2872 = vmatpush1.bf16.msra.mxu0 0
    %2873 = vmatprep.subr.bf16.mxu0 0
    %2874 = vmatpush1.bf16.msra.mxu0 0
    %2875 = vmatprep.subr.bf16.mxu0 0
    %2876 = vmatpush1.bf16.msra.mxu0 0
    %2877 = vmatprep.subr.bf16.mxu0 0
    %2878 = vmatpush1.bf16.msra.mxu0 0
    %2879 = vmatprep.mubr.bf16.mxu0 0
    %2880 = vmatmul.mubr.bf16.gmra.mrb[0].mxu0 %v2654
    %v2881 = vpop.f32.mrb[0].mxu0
    %v2882 = vadd.f32 0.0, %v2881
    %v2883 = vpop.f32.mrb[0].mxu0
    %v2884 = vadd.f32 0.0, %v2883
    %v2885 = vpop.f32.mrb[0].mxu0
    %v2886 = vpop.f32.mrb[0].mxu0
    %2887 = vdwg.mxu0
    %2888 = vmatprep.subr.bf16.mxu0 %v2786
    %2889 = vmatpush1.bf16.msra.mxu0 %v2785
    %2890 = vmatprep.subr.bf16.mxu0 %v2790
    %2891 = vmatpush1.bf16.msra.mxu0 %v2789
    %2892 = vmatprep.subr.bf16.mxu0 %v2794
    %2893 = vmatpush1.bf16.msra.mxu0 %v2793
    %2894 = vmatprep.subr.bf16.mxu0 %v2798
    %2895 = vmatpush1.bf16.msra.mxu0 %v2797
    %2896 = vmatprep.subr.bf16.mxu0 %v2802
    %2897 = vmatpush1.bf16.msra.mxu0 %v2801
    %2898 = vmatprep.subr.bf16.mxu0 %v2806
    %2899 = vmatpush1.bf16.msra.mxu0 %v2805
    %2900 = vmatprep.subr.bf16.mxu0 %v2810
    %2901 = vmatpush1.bf16.msra.mxu0 %v2809
    %2902 = vmatprep.subr.bf16.mxu0 %v2814
    %2903 = vmatpush1.bf16.msra.mxu0 %v2813
    %2904 = vmatprep.subr.bf16.mxu0 0
    %2905 = vmatpush1.bf16.msra.mxu0 0
    %2906 = vmatprep.subr.bf16.mxu0 0
    %2907 = vmatpush1.bf16.msra.mxu0 0
    %2908 = vmatprep.subr.bf16.mxu0 0
    %2909 = vmatpush1.bf16.msra.mxu0 0
    %2910 = vmatprep.subr.bf16.mxu0 0
    %2911 = vmatpush1.bf16.msra.mxu0 0
    %2912 = vmatprep.subr.bf16.mxu0 0
    %2913 = vmatpush1.bf16.msra.mxu0 0
    %2914 = vmatprep.subr.bf16.mxu0 0
    %2915 = vmatpush1.bf16.msra.mxu0 0
    %2916 = vmatprep.subr.bf16.mxu0 0
    %2917 = vmatpush1.bf16.msra.mxu0 0
    %2918 = vmatprep.subr.bf16.mxu0 0
    %2919 = vmatpush1.bf16.msra.mxu0 0
    %2920 = vmatprep.mubr.bf16.mxu0 0
    %2921 = vmatmul.mubr.bf16.gmra.mrb[0].mxu0 %v2654
    %v2922 = vpop.f32.mrb[0].mxu0
    %v2923 = vadd.f32 0.0, %v2922
    %v2924 = vpop.f32.mrb[0].mxu0
    %v2925 = vadd.f32 0.0, %v2924
    %v2926 = vpop.f32.mrb[0].mxu0
    %v2927 = vpop.f32.mrb[0].mxu0
    %2928 = vdwg.mxu0
    %v2929 = vadd.f32 %v2649, %v2882
    %v2930 = vadd.f32 %v2650, %v2884
    %v2931 = vadd.f32 %v2651, %v2923
    %v2932 = vadd.f32 %v2652, %v2925
    %v2933 = vmul.f32 %v2929, 0.5
    %v2934 = vtanh.pop %v2933
    %v2935 = vmul.f32 %v2934, 0.5
    %v2936 = vadd.f32 %v2935, 0.5
    %v2937 = vmul.f32 %v2930, 0.5
    %v2938 = vtanh.pop %v2937
    %v2939 = vmul.f32 %v2938, 0.5
    %v2940 = vadd.f32 %v2939, 0.5
    %v2941 = vtanh.pop %v2931
    %v2942 = vmul.f32 %v2932, 0.5
    %v2943 = vtanh.pop %v2942
    %v2944 = vmul.f32 %v2943, 0.5
    %v2945 = vadd.f32 %v2944, 0.5
    %v2946 = vld [vmem:[#allocation3] sm:$0xff]
    %v2947 = vmul.f32 %v2940, %v2946
    %v2948 = vmul.f32 %v2936, %v2941
    %v2949 = vadd.f32 %v2947, %v2948
    %2950 = vst [vmem:[#allocation3] sm:$0xff] %v2949
    %v2951 = vtanh.pop %v2949
    %v2952 = vmul.f32 %v2945, %v2951
    %2953 = vst [vmem:[#allocation2] sm:$0xff] %v2952
    // Predicated region
    $region46: #{lstm_forward.1} parent=1 // pred_check
      %p2954 = pneg %p58
    $region47: #{lstm_forward.1} parent=1 // pred_check_branch
      %2956 = sbr.rel (%p2954) target = $region49
    $region48: #{lstm_forward.1} parent=1 // pred_region
      %v2957 = vld [vmem:[#allocation2] sm:$0xff]
      %v2958 = vpack.c.bf16 %v2957, %v2957
      %v2959 = vld [vmem:[%s6] sm:$0xf]
      %v2960 = vld [vmem:[%s6 + $0x4] sm:$0xf]
      %v2961 = vld [vmem:[%s6 + $0x8] sm:$0xf]
      %v2962 = vld [vmem:[%s6 + $0xc] sm:$0xf]
      %v2963 = vld [vmem:[%s6 + $0x10] sm:$0xf]
      %v2964 = vld [vmem:[%s6 + $0x14] sm:$0xf]
      %v2965 = vld [vmem:[%s6 + $0x18] sm:$0xf]
      %v2966 = vld [vmem:[%s6 + $0x1c] sm:$0xf]
      %v2967 = vld [vmem:[%s6 + $0x20] sm:$0xf]
      %v2968 = vld [vmem:[%s6 + $0x24] sm:$0xf]
      %v2969 = vld [vmem:[%s6 + $0x28] sm:$0xf]
      %v2970 = vld [vmem:[%s6 + $0x2c] sm:$0xf]
      %v2971 = vld [vmem:[%s6 + $0x30] sm:$0xf]
      %v2972 = vld [vmem:[%s6 + $0x34] sm:$0xf]
      %v2973 = vld [vmem:[%s6 + $0x38] sm:$0xf]
      %v2974 = vld [vmem:[%s6 + $0x3c] sm:$0xf]
      %v2975 = vld [vmem:[%s7] sm:$0x1]
      %v2977 = vlaneseq
      %v2978 = vshrl.u32 %v2977, 7
      %v2979 = vsub.s32 0, %v2978
      %v2980 = vrot.slane %v2975, %v2979
      %v2998 = vunpack.c.l.b16 %v2959
      %v2999 = vunpack.c.l.b16 %v2960
      %v3000 = vunpack.c.l.b16 %v2961
      %v3001 = vunpack.c.l.b16 %v2962
      %v3002 = vunpack.c.l.b16 %v2963
      %v3003 = vunpack.c.l.b16 %v2964
      %v3004 = vunpack.c.l.b16 %v2965
      %v3005 = vunpack.c.l.b16 %v2966
      %v3006 = vunpack.c.l.b16 %v2967
      %v3007 = vunpack.c.l.b16 %v2968
      %v3008 = vunpack.c.l.b16 %v2969
      %v3009 = vunpack.c.l.b16 %v2970
      %v3010 = vunpack.c.l.b16 %v2971
      %v3011 = vunpack.c.l.b16 %v2972
      %v3012 = vunpack.c.l.b16 %v2973
      %v3013 = vunpack.c.l.b16 %v2974
      %v3014 = vpack.c.b16 %v2999, %v2998
      %v3015 = vpack.c.b16 %v3001, %v3000
      %v3016 = vpack.c.b16 %v3003, %v3002
      %v3017 = vpack.c.b16 %v3005, %v3004
      %v3018 = vpack.c.b16 %v3007, %v3006
      %v3019 = vpack.c.b16 %v3009, %v3008
      %v3020 = vpack.c.b16 %v3011, %v3010
      %v3021 = vpack.c.b16 %v3013, %v3012
      %3030 = vmatprep.subr.bf16.mxu0 0
      %3031 = vmatpush1.bf16.msra.mxu0 %v3014
      %3032 = vmatprep.subr.bf16.mxu0 0
      %3033 = vmatpush1.bf16.msra.mxu0 %v3015
      %3034 = vmatprep.subr.bf16.mxu0 0
      %3035 = vmatpush1.bf16.msra.mxu0 %v3016
      %3036 = vmatprep.subr.bf16.mxu0 0
      %3037 = vmatpush1.bf16.msra.mxu0 %v3017
      %3038 = vmatprep.subr.bf16.mxu0 0
      %3039 = vmatpush1.bf16.msra.mxu0 %v3018
      %3040 = vmatprep.subr.bf16.mxu0 0
      %3041 = vmatpush1.bf16.msra.mxu0 %v3019
      %3042 = vmatprep.subr.bf16.mxu0 0
      %3043 = vmatpush1.bf16.msra.mxu0 %v3020
      %3044 = vmatprep.subr.bf16.mxu0 0
      %3045 = vmatpush1.bf16.msra.mxu0 %v3021
      %3046 = vmatprep.subr.bf16.mxu0 0
      %3047 = vmatpush1.bf16.msra.mxu0 0
      %3048 = vmatprep.subr.bf16.mxu0 0
      %3049 = vmatpush1.bf16.msra.mxu0 0
      %3050 = vmatprep.subr.bf16.mxu0 0
      %3051 = vmatpush1.bf16.msra.mxu0 0
      %3052 = vmatprep.subr.bf16.mxu0 0
      %3053 = vmatpush1.bf16.msra.mxu0 0
      %3054 = vmatprep.subr.bf16.mxu0 0
      %3055 = vmatpush1.bf16.msra.mxu0 0
      %3056 = vmatprep.subr.bf16.mxu0 0
      %3057 = vmatpush1.bf16.msra.mxu0 0
      %3058 = vmatprep.subr.bf16.mxu0 0
      %3059 = vmatpush1.bf16.msra.mxu0 0
      %3060 = vmatprep.subr.bf16.mxu0 0
      %3061 = vmatpush1.bf16.msra.mxu0 0
      %3062 = vmatprep.mubr.bf16.mxu0 0
      %3063 = vmatmul.mubr.bf16.gmra.mrb[0].mxu0 %v2958
      %v3064 = vpop.f32.mrb[0].mxu0
      %v3065 = vadd.f32 %v2980, %v3064
      %v3066 = vpop.f32.mrb[0].mxu0
      %v3067 = vpop.f32.mrb[0].mxu0
      %v3068 = vpop.f32.mrb[0].mxu0
      %3069 = vdwg.mxu0
      %3070 = vst [vmem:[%s8] sm:$0xff] %v3065
    $region49: #{lstm_forward.1} parent=1 // pred_fallthru
      _
    // Predicated region
    $region50: #{lstm_forward.1} parent=1 // pred_check
      _
    $region51: #{lstm_forward.1} parent=1 // pred_check_branch
      %3072 = sbr.rel (0) target = $region53
    $region52: #{lstm_forward.1} parent=1 // pred_region
      _
    $region53: #{lstm_forward.1} parent=1 // pred_fallthru
      _
    // Predicated region
    $region54: #{lstm_forward.1} parent=1 // pred_check
      _
    $region55: #{lstm_forward.1} parent=1 // pred_check_branch
      %3074 = sbr.rel (0) target = $region57
    $region56: #{lstm_forward.1} parent=1 // pred_region
      _
    $region57: #{lstm_forward.1} parent=1 // pred_fallthru
      _
    %3075 = vsyncpa [#allocation6], 1
    %3076 = vsyncpa [#allocation8], 1

</llo_original>
